<compile_context>
chip_gen: v7x
topology: tpu7x:2x2x1
jax: 0.10.0
libtpu: 0.0.40
codegen_flags: <defaults>
</compile_context>

<pallas_src>
import math
from functools import partial

import jax
import jax.numpy as jnp
from jax import lax
from jax.experimental import pallas as pl
from jax.experimental.pallas import tpu as pltpu

_APPROX_RECIPROCAL = True   # debug switch: set False for exact softmax denom


def _round_up(x, m):
    return ((x + m - 1) // m) * m


def _pick_tile(L, cap):
    """Largest divisor of L that is a multiple of 16 and <= cap (fallback: L)."""
    best = None
    for t in range(16, min(L, cap) + 1, 16):
        if L % t == 0:
            best = t
    return best if best is not None else L


# ----------------------------------------------------------------------------
# Fused forward kernel.  grid = (N, nq):
#   qi == 0 : conv_in of the 'r' pass tokens -> hs scratch; self K/V -> scratch;
#             forward_cond ('w' pass) conv_in tokens -> ref K/V -> scratch.
#   per qi  : q tile -> online-softmax attn1 over K/V chunks -> residual ->
#             cross-attn with pre-projected text K/V -> residual -> conv_out.
# ----------------------------------------------------------------------------
def _make_fused_kernel(*, has_ref, D, TQ, TK, nq, nk_self, nk_total):
    def kernel(*refs):
        it = iter(refs)
        patches_ref = next(it)                        # (1, L, Krp)  bf16
        cond_ref = next(it) if has_ref else None      # (1, L, Kwp)  bf16
        tk_ref = next(it)                             # (1, S, D)    bf16
        tv_ref = next(it)                             # (1, S, D)    bf16
        wconv_ref = next(it)                          # (Krp, D)     bf16
        wconvh_ref = next(it) if has_ref else None    # (Kwp, D)     bf16
        bconv_ref = next(it)                          # (1, D)       f32
        wq1_ref = next(it)                            # (D, D)  bf16 (scale folded)
        wkv1_ref = next(it)                           # (D, 2D)      bf16
        wo1_ref = next(it)                            # (D, D)       bf16
        wq2_ref = next(it)                            # (D, D)  bf16 (scale folded)
        wo2_ref = next(it)                            # (D, D)       bf16
        wout_ref = next(it)                           # (D, Cp)      bf16
        bout_ref = next(it)                           # (1, Cp)      f32
        o_ref = next(it)                              # (1, TQ, Cp)  bf16
        hs_scr = next(it)                             # (nq, TQ, D)  f32
        k_scr = next(it)                              # (nk_total, TK, D) bf16
        v_scr = next(it)                              # (nk_total, TK, D) bf16

        qi = pl.program_id(1)

        # ---- stage conv_in tokens and K/V once per batch element ----
        @pl.when(qi == 0)
        def _stage():
            # conv_in ('r' pass, ElasticConv2d as im2col matmul)
            hs = (jnp.dot(patches_ref[0], wconv_ref[...],
                          preferred_element_type=jnp.float32) + bconv_ref[...])
            hs_scr[...] = hs.reshape(nq, TQ, D)
            kv = jnp.dot(hs.astype(jnp.bfloat16), wkv1_ref[...],
                         preferred_element_type=jnp.float32)
            k_scr[0:nk_self] = kv[:, :D].astype(jnp.bfloat16).reshape(nk_self, TK, D)
            v_scr[0:nk_self] = kv[:, D:].astype(jnp.bfloat16).reshape(nk_self, TK, D)
            if has_ref:
                # forward_cond ('w' pass): ref_dict['attn1'] = conv_in(noisy_cond_lat)
                # tokens; only their K/V are needed downstream (no Q -> no dead work).
                ref_tok = (jnp.dot(cond_ref[0], wconvh_ref[...],
                                   preferred_element_type=jnp.float32)
                           + bconv_ref[...])
                kv_r = jnp.dot(ref_tok.astype(jnp.bfloat16), wkv1_ref[...],
                               preferred_element_type=jnp.float32)
                nk_ref = nk_total - nk_self
                k_scr[nk_self:nk_total] = (
                    kv_r[:, :D].astype(jnp.bfloat16).reshape(nk_ref, TK, D))
                v_scr[nk_self:nk_total] = (
                    kv_r[:, D:].astype(jnp.bfloat16).reshape(nk_ref, TK, D))

        # ---- per-q-tile work ----
        tokens = hs_scr[qi]                                        # (TQ, D) f32
        q1 = jnp.dot(tokens.astype(jnp.bfloat16), wq1_ref[...],
                     preferred_element_type=jnp.float32).astype(jnp.bfloat16)

        # attn1: online softmax over K/V chunks (self chunks then ref chunks)
        def attn1_body(t, carry):
            m, l, acc = carry
            k = k_scr[t]                                           # (TK, D) bf16
            v = v_scr[t]
            s = lax.dot_general(q1, k, (((1,), (1,)), ((), ())),
                                preferred_element_type=jnp.float32)
            m_new = jnp.maximum(m, jnp.max(s, axis=-1, keepdims=True))
            alpha = jnp.exp(m - m_new)
            p = jnp.exp(s - m_new)
            l = alpha * l + jnp.sum(p, axis=-1, keepdims=True)
            acc = alpha * acc + jnp.dot(p.astype(jnp.bfloat16), v,
                                        preferred_element_type=jnp.float32)
            return m_new, l, acc

        carry0 = (jnp.full((TQ, 1), -jnp.inf, jnp.float32),
                  jnp.zeros((TQ, 1), jnp.float32),
                  jnp.zeros((TQ, D), jnp.float32))
        _, l1, acc1 = lax.fori_loop(0, nk_total, attn1_body, carry0,
                                    unroll=(nk_total <= 4))
        a1 = acc1 * pl.reciprocal(l1, approx=_APPROX_RECIPROCAL)
        tokens = tokens + jnp.dot(a1.astype(jnp.bfloat16), wo1_ref[...],
                                  preferred_element_type=jnp.float32)

        # attn2: cross-attention with pre-projected text K/V (tiny S)
        q2 = jnp.dot(tokens.astype(jnp.bfloat16), wq2_ref[...],
                     preferred_element_type=jnp.float32).astype(jnp.bfloat16)
        s2 = lax.dot_general(q2, tk_ref[0], (((1,), (1,)), ((), ())),
                             preferred_element_type=jnp.float32)
        p2 = jnp.exp(s2 - jnp.max(s2, axis=-1, keepdims=True))
        a2 = jnp.dot(p2.astype(jnp.bfloat16), tv_ref[0],
                     preferred_element_type=jnp.float32)
        a2 = a2 * pl.reciprocal(jnp.sum(p2, axis=-1, keepdims=True),
                                approx=_APPROX_RECIPROCAL)
        tokens = tokens + jnp.dot(a2.astype(jnp.bfloat16), wo2_ref[...],
                                  preferred_element_type=jnp.float32)

        # conv_out (1x1), lane-padded output, bf16 store
        out = (jnp.dot(tokens.astype(jnp.bfloat16), wout_ref[...],
                       preferred_element_type=jnp.float32) + bout_ref[...])
        o_ref[0] = out.astype(o_ref.dtype)

    return kernel


def _fused_forward_call(patches, cond_patches, text_k, text_v,
                        w_conv, w_conv_half, b_conv,
                        wq1, wkv1, wo1, wq2, wo2, w_out, b_out):
    N, L, Krp = patches.shape
    S = text_k.shape[1]
    D = wq1.shape[0]
    Cp = w_out.shape[1]
    has_ref = cond_patches is not None

    TQ = _pick_tile(L, cap=min(256, max(16, L // 2)))   # Lq block
    TK = _pick_tile(L, cap=512)                          # Lk block
    nq = L // TQ
    nk_self = L // TK
    nk_total = nk_self * (2 if has_ref else 1)

    per_batch = lambda n, qi: (n, 0, 0)
    const = lambda n, qi: (0, 0)

    in_specs = [pl.BlockSpec((1, L, Krp), per_batch)]
    args = [patches]
    if has_ref:
        Kwp = cond_patches.shape[2]
        in_specs.append(pl.BlockSpec((1, L, Kwp), per_batch))
        args.append(cond_patches)
    in_specs += [pl.BlockSpec((1, S, D), per_batch),
                 pl.BlockSpec((1, S, D), per_batch),
                 pl.BlockSpec((Krp, D), const)]
    args += [text_k, text_v, w_conv]
    if has_ref:
        in_specs.append(pl.BlockSpec((w_conv_half.shape[0], D), const))
        args.append(w_conv_half)
    in_specs += [pl.BlockSpec((1, D), const),       # b_conv
                 pl.BlockSpec((D, D), const),       # wq1 (scale folded)
                 pl.BlockSpec((D, 2 * D), const),   # wkv1
                 pl.BlockSpec((D, D), const),       # wo1
                 pl.BlockSpec((D, D), const),       # wq2 (scale folded)
                 pl.BlockSpec((D, D), const),       # wo2
                 pl.BlockSpec((D, Cp), const),      # w_out (lane padded)
                 pl.BlockSpec((1, Cp), const)]      # b_out (lane padded)
    args += [b_conv, wq1, wkv1, wo1, wq2, wo2, w_out, b_out]

    kernel = _make_fused_kernel(has_ref=has_ref, D=D, TQ=TQ, TK=TK,
                                nq=nq, nk_self=nk_self, nk_total=nk_total)

    return pl.pallas_call(
        kernel,
        out_shape=jax.ShapeDtypeStruct((N, L, Cp), jnp.bfloat16),
        grid=(N, nq),
        in_specs=in_specs,
        out_specs=pl.BlockSpec((1, TQ, Cp), lambda n, qi: (n, qi, 0)),
        scratch_shapes=[pltpu.VMEM((nq, TQ, D), jnp.float32),        # hs tokens
                        pltpu.VMEM((nk_total, TK, D), jnp.bfloat16),  # K chunks
                        pltpu.VMEM((nk_total, TK, D), jnp.bfloat16)], # V chunks
        compiler_params=pltpu.CompilerParams(
            dimension_semantics=("parallel", "arbitrary"),
            vmem_limit_bytes=48 * 1024 * 1024),
    )(*args)


# ----------------------------------------------------------------------------
# Wrapper-side glue (plain JAX, fused by XLA): im2col, Euler-ancestral
# add_noise + scale_model_input, text K/V projection, weight pre-packing.
# ----------------------------------------------------------------------------
def _im2col_3x3(x_nchw):
    N, C, H, W = x_nchw.shape
    x = jnp.transpose(x_nchw, (0, 2, 3, 1))                         # NHWC
    xp = jnp.pad(x, ((0, 0), (1, 1), (1, 1), (0, 0)))
    patches = jnp.concatenate(
        [xp[:, dy:dy + H, dx:dx + W, :] for dy in range(3) for dx in range(3)],
        axis=-1)
    return patches.reshape(N, H * W, 9 * C)


def _im2col_3x3_padded_bf16(x_nchw, k_pad):
    p = _im2col_3x3(x_nchw)
    p = jnp.pad(p, ((0, 0), (0, 0), (0, k_pad - p.shape[-1])))
    return p.astype(jnp.bfloat16)


def _conv_weight_matrix(w_oihw, cin):
    # ElasticConv2d.forward: use weight[:, :cin]; (ky, kx, cin) row ordering
    w = w_oihw[:, :cin]
    return jnp.transpose(w, (2, 3, 1, 0)).reshape(9 * cin, w_oihw.shape[0])


def pack_params(raw, c_lat, d_model):
    """One-time weight packing (scale fold, concats, im2col matrices, padding)."""
    D = d_model
    scale = 1.0 / math.sqrt(D)
    kr_full = _round_up(9 * 2 * c_lat, 128)
    kr_half = _round_up(9 * c_lat, 128)
    cout = raw["conv_out_b"].shape[0]
    cpad = _round_up(cout, 128)

    def pad_rows(m, rows):
        return jnp.pad(m, ((0, rows - m.shape[0]), (0, 0))).astype(jnp.bfloat16)

    return {
        "w_conv_full": pad_rows(_conv_weight_matrix(raw["conv_in_w"], 2 * c_lat), kr_full),
        "w_conv_half": pad_rows(_conv_weight_matrix(raw["conv_in_w"], c_lat), kr_half),
        "b_conv": raw["conv_in_b"].reshape(1, D).astype(jnp.float32),
        "wq1": (raw["attn1_wq"] * scale).astype(jnp.bfloat16),
        "wkv1": jnp.concatenate([raw["attn1_wk"], raw["attn1_wv"]], axis=1).astype(jnp.bfloat16),
        "wo1": raw["attn1_wo"].astype(jnp.bfloat16),
        "wq2": (raw["attn2_wq"] * scale).astype(jnp.bfloat16),
        "wkv2": jnp.concatenate([raw["attn2_wk"], raw["attn2_wv"]], axis=1).astype(jnp.float32),
        "wo2": raw["attn2_wo"].astype(jnp.bfloat16),
        "w_out": jnp.pad(raw["conv_out_w"], ((0, 0), (0, cpad - cout))).astype(jnp.bfloat16),
        "b_out": jnp.pad(raw["conv_out_b"], ((0, cpad - cout),)).reshape(1, cpad).astype(jnp.float32),
    }


@partial(jax.jit, static_argnames=("enable_concats", "disable_rca"))
def _ref_only_noised_unet_impl(packed, sample, timestep, encoder_hidden_states,
                               cond_lat, noise, registered_concat_latents,
                               alphas_cumprod, *, enable_concats, disable_rca):
    N, _, H, W = sample.shape
    c_lat = cond_lat.shape[1]                # UNet conv_out channels == latent channels
    D = packed["wq1"].shape[0]
    assert (H * W) % 16 == 0, "H*W must be a multiple of 16 (bf16 sublane packing)"

    # EulerAncestral add_noise + scale_model_input (eval path). Plain JAX — XLA
    # fuses this tiny elementwise op. NOTE: sigma = sqrt((1-ac)/ac) only matches
    # the scheduler when timestep is an exact scheduler timestep.
    t = timestep.reshape(-1)
    ac = alphas_cumprod[t]
    sigma = jnp.sqrt((1.0 - ac) / ac).reshape(-1, 1, 1, 1)
    noisy_cond_lat = (cond_lat + sigma * noise) / jnp.sqrt(sigma * sigma + 1.0)

    # forward_cond ('w' pass): only ref_dict['attn1'] tokens are consumed;
    # their conv_in + K/V projection happen inside the fused kernel.
    has_ref = not disable_rca
    cond_patches = None
    w_conv_half = None
    if has_ref:
        cond_patches = _im2col_3x3_padded_bf16(noisy_cond_lat,
                                               packed["w_conv_half"].shape[0])
        w_conv_half = packed["w_conv_half"]

    # enable_concats: tile registered latents (3,3), zero the CFG-negative
    # batch entry, concat on channels -> ElasticConv2d full-weight path.
    if enable_concats and registered_concat_latents is not None:
        assert sample.shape[0] in (1, 2)
        rh, rw = registered_concat_latents.shape[2:]
        assert (3 * rh, 3 * rw) == (H, W), "registered concat latents spatial mismatch"
        concats = jnp.tile(registered_concat_latents, (1, 1, 3, 3))
        if sample.shape[0] == 2:
            concats = jnp.concatenate([jnp.zeros_like(concats), concats], axis=0)
        sample = jnp.concatenate([sample, concats], axis=1)

    if sample.shape[1] == 2 * c_lat:
        w_conv = packed["w_conv_full"]
    elif sample.shape[1] == c_lat:
        w_conv = packed["w_conv_half"]
    else:
        raise ValueError(f"Input channels {sample.shape[1]} do not match "
                         f"{2 * c_lat} or {c_lat}")
    patches = _im2col_3x3_padded_bf16(sample, w_conv.shape[0])

    # text cross-attn K/V hoisted out of the kernel (constant per prompt)
    text_kv = jnp.einsum("nsd,de->nse", encoder_hidden_states, packed["wkv2"])
    text_k = text_kv[..., :D].astype(jnp.bfloat16)
    text_v = text_kv[..., D:].astype(jnp.bfloat16)

    out_tok = _fused_forward_call(
        patches, cond_patches, text_k, text_v,
        w_conv, w_conv_half, packed["b_conv"],
        packed["wq1"], packed["wkv1"], packed["wo1"],
        packed["wq2"], packed["wo2"], packed["w_out"], packed["b_out"])

    out = out_tok[:, :, :c_lat].astype(jnp.float32).reshape(N, H, W, c_lat)
    return jnp.transpose(out, (0, 3, 1, 2))


def ref_only_noised_unet_forward(packed_params, sample, timestep,
                                 encoder_hidden_states, cross_attention_kwargs,
                                 noise, registered_concat_latents, alphas_cumprod,
                                 enable_concats=True, disable_rca=False):
    """RefOnlyNoisedUNet.forward (eval path). Not jitted: flags stay Python bools."""
    cond_lat = cross_attention_kwargs["cond_lat"]
    is_cfg_guidance = bool(cross_attention_kwargs.get("is_cfg_guidance", False))
    # TODO(synk): CFG-guidance batch split not implemented.
    assert not is_cfg_guidance
    return _ref_only_noised_unet_impl(
        packed_params, sample, timestep, encoder_hidden_states, cond_lat, noise,
        registered_concat_latents, alphas_cumprod,
        enable_concats=bool(enable_concats), disable_rca=bool(disable_rca))


# ----------------------------------------------------------------------------
# Pure-JAX f32 reference (for correctness check), deterministic init, example.
# ----------------------------------------------------------------------------
def _reference_forward(raw, sample, timestep, encoder_hidden_states, cond_lat,
                       noise, registered, alphas_cumprod, enable_concats,
                       disable_rca):
    N, _, H, W = sample.shape
    D = raw["attn1_wq"].shape[0]
    t = timestep.reshape(-1)
    ac = alphas_cumprod[t]
    sigma = jnp.sqrt((1.0 - ac) / ac).reshape(-1, 1, 1, 1)
    noisy_cond_lat = (cond_lat + sigma * noise) / jnp.sqrt(sigma * sigma + 1.0)

    if enable_concats and registered is not None:
        concats = jnp.tile(registered, (1, 1, 3, 3))
        if N == 2:
            concats = jnp.concatenate([jnp.zeros_like(concats), concats], axis=0)
        sample = jnp.concatenate([sample, concats], axis=1)

    def conv_in(x):
        cin = x.shape[1]
        pat = _im2col_3x3(x)
        return pat @ _conv_weight_matrix(raw["conv_in_w"], cin) + raw["conv_in_b"]

    def attend(q, k, v):
        s = jnp.einsum("nqd,nkd->nqk", q, k) / math.sqrt(D)
        return jnp.einsum("nqk,nkd->nqd", jax.nn.softmax(s, axis=-1), v)

    hs = conv_in(sample)
    ehs = hs if disable_rca else jnp.concatenate([hs, conv_in(noisy_cond_lat)], axis=1)
    hs = hs + attend(hs @ raw["attn1_wq"], ehs @ raw["attn1_wk"],
                     ehs @ raw["attn1_wv"]) @ raw["attn1_wo"]
    hs = hs + attend(hs @ raw["attn2_wq"],
                     encoder_hidden_states @ raw["attn2_wk"],
                     encoder_hidden_states @ raw["attn2_wv"]) @ raw["attn2_wo"]
    out = hs @ raw["conv_out_w"] + raw["conv_out_b"]
    return jnp.transpose(out.reshape(N, H, W, -1), (0, 3, 1, 2))


def init_params(key, c_lat=4, d_model=128):
    ks = jax.random.split(key, 12)
    s = 0.02
    w = lambda k, shape: s * jax.random.normal(k, shape, jnp.float32)
    return {
        "conv_in_w": w(ks[0], (d_model, 2 * c_lat, 3, 3)),   # ElasticConv2d OIHW
        "conv_in_b": w(ks[1], (d_model,)),
        "attn1_wq": w(ks[2], (d_model, d_model)),
        "attn1_wk": w(ks[3], (d_model, d_model)),
        "attn1_wv": w(ks[4], (d_model, d_model)),
        "attn1_wo": w(ks[5], (d_model, d_model)),
        "attn2_wq": w(ks[6], (d_model, d_model)),
        "attn2_wk": w(ks[7], (d_model, d_model)),
        "attn2_wv": w(ks[8], (d_model, d_model)),
        "attn2_wo": w(ks[9], (d_model, d_model)),
        "conv_out_w": w(ks[10], (d_model, c_lat)),
        "conv_out_b": w(ks[11], (c_lat,)),
    }


def make_scheduler_tables(num_train_timesteps=1000):
    betas = jnp.linspace(0.00085 ** 0.5, 0.012 ** 0.5, num_train_timesteps,
                         dtype=jnp.float32) ** 2
    return jnp.cumprod(1.0 - betas)


if __name__ == "__main__":
    key = jax.random.PRNGKey(0)
    k_param, k_sample, k_cond, k_text, k_noise, k_reg = jax.random.split(key, 6)

    N, C_LAT, H, W = 2, 4, 12, 12        # H*W = 144 (multiple of 16), /3 tileable
    D_MODEL, S_TXT = 128, 8              # lane-dense model width

    raw = init_params(k_param, c_lat=C_LAT, d_model=D_MODEL)
    packed = pack_params(raw, c_lat=C_LAT, d_model=D_MODEL)
    alphas_cumprod = make_scheduler_tables()

    sample = jax.random.normal(k_sample, (N, C_LAT, H, W), jnp.float32)
    cond_lat = jax.random.normal(k_cond, (N, C_LAT, H, W), jnp.float32)
    encoder_hidden_states = jax.random.normal(k_text, (N, S_TXT, D_MODEL), jnp.float32)
    noise = jax.random.normal(k_noise, cond_lat.shape, jnp.float32)   # randn_like(cond_lat)
    registered = jax.random.normal(k_reg, (1, C_LAT, H // 3, W // 3), jnp.float32)
    timestep = jnp.array([499, 499], dtype=jnp.int32)
    cak = {"cond_lat": cond_lat, "is_cfg_guidance": False}

    # main path: reference attention + concat register
    out = ref_only_noised_unet_forward(
        packed, sample, timestep, encoder_hidden_states, cak,
        noise, registered, alphas_cumprod, enable_concats=True, disable_rca=False)
    out = jax.block_until_ready(out)
    assert out.shape == (N, C_LAT, H, W), out.shape
    assert bool(jnp.all(jnp.isfinite(out)))
    ref = _reference_forward(raw, sample, timestep, encoder_hidden_states, cond_lat,
                             noise, registered, alphas_cumprod, True, False)
    err = float(jnp.max(jnp.abs(out - ref)))
    assert err < 5e-2, f"mismatch vs f32 reference (main path): {err}"

    # fallback path: disable_rca=True / no registered concat latents
    out2 = ref_only_noised_unet_forward(
        packed, sample, timestep, encoder_hidden_states, cak,
        noise, None, alphas_cumprod, enable_concats=True, disable_rca=True)
    out2 = jax.block_until_ready(out2)
    assert out2.shape == (N, C_LAT, H, W), out2.shape
    assert bool(jnp.all(jnp.isfinite(out2)))
    ref2 = _reference_forward(raw, sample, timestep, encoder_hidden_states, cond_lat,
                              noise, None, alphas_cumprod, True, True)
    err2 = float(jnp.max(jnp.abs(out2 - ref2)))
    assert err2 < 5e-2, f"mismatch vs f32 reference (fallback path): {err2}"

    print("KERNEL_OK")
</pallas_src>

<mosaic_0001>
module attributes {stable_mosaic.version = 11 : i64} {
  func.func @kernel(%arg0: i32, %arg1: i32, %arg2: memref<1x144x128xbf16, #tpu.memory_space<vmem>>, %arg3: memref<1x144x128xbf16, #tpu.memory_space<vmem>>, %arg4: memref<1x8x128xbf16, #tpu.memory_space<vmem>>, %arg5: memref<1x8x128xbf16, #tpu.memory_space<vmem>>, %arg6: memref<128x128xbf16, #tpu.memory_space<vmem>>, %arg7: memref<128x128xbf16, #tpu.memory_space<vmem>>, %arg8: memref<1x128xf32, #tpu.memory_space<vmem>>, %arg9: memref<128x128xbf16, #tpu.memory_space<vmem>>, %arg10: memref<128x256xbf16, #tpu.memory_space<vmem>>, %arg11: memref<128x128xbf16, #tpu.memory_space<vmem>>, %arg12: memref<128x128xbf16, #tpu.memory_space<vmem>>, %arg13: memref<128x128xbf16, #tpu.memory_space<vmem>>, %arg14: memref<128x128xbf16, #tpu.memory_space<vmem>>, %arg15: memref<1x128xf32, #tpu.memory_space<vmem>>, %arg16: memref<1x48x128xbf16, #tpu.memory_space<vmem>>, %arg17: memref<3x48x128xf32, #tpu.memory_space<vmem>>, %arg18: memref<2x144x128xbf16, #tpu.memory_space<vmem>>, %arg19: memref<2x144x128xbf16, #tpu.memory_space<vmem>>) attributes {dimension_semantics = [#tpu.dimension_semantics<parallel>, #tpu.dimension_semantics<arbitrary>], iteration_bounds = array<i64: 2, 3>, scalar_prefetch = 0 : i64, scratch_operands = 3 : i64, tpu.core_type = #tpu.core_type<tc>, window_params = [{transform_indices = @transform_0, window_bounds = array<i64: 1, 144, 128>}, {transform_indices = @transform_1, window_bounds = array<i64: 1, 144, 128>}, {transform_indices = @transform_2, window_bounds = array<i64: 1, 8, 128>}, {transform_indices = @transform_3, window_bounds = array<i64: 1, 8, 128>}, {pipeline_mode = #tpu.pipeline_mode<synchronous>, transform_indices = @transform_4, window_bounds = array<i64: 128, 128>}, {pipeline_mode = #tpu.pipeline_mode<synchronous>, transform_indices = @transform_5, window_bounds = array<i64: 128, 128>}, {pipeline_mode = #tpu.pipeline_mode<synchronous>, transform_indices = @transform_6, window_bounds = array<i64: 1, 128>}, {pipeline_mode = #tpu.pipeline_mode<synchronous>, transform_indices = @transform_7, window_bounds = array<i64: 128, 128>}, {pipeline_mode = #tpu.pipeline_mode<synchronous>, transform_indices = @transform_8, window_bounds = array<i64: 128, 256>}, {pipeline_mode = #tpu.pipeline_mode<synchronous>, transform_indices = @transform_9, window_bounds = array<i64: 128, 128>}, {pipeline_mode = #tpu.pipeline_mode<synchronous>, transform_indices = @transform_10, window_bounds = array<i64: 128, 128>}, {pipeline_mode = #tpu.pipeline_mode<synchronous>, transform_indices = @transform_11, window_bounds = array<i64: 128, 128>}, {pipeline_mode = #tpu.pipeline_mode<synchronous>, transform_indices = @transform_12, window_bounds = array<i64: 128, 128>}, {pipeline_mode = #tpu.pipeline_mode<synchronous>, transform_indices = @transform_13, window_bounds = array<i64: 1, 128>}, {transform_indices = @transform_14, window_bounds = array<i64: 1, 48, 128>}]} {
    %c0_i32 = arith.constant 0 : i32
    %0 = arith.cmpi eq, %arg1, %c0_i32 : i32
    %1 = arith.extui %0 : i1 to i32
    %c0_i32_0 = arith.constant 0 : i32
    %2 = arith.cmpi ne, %1, %c0_i32_0 : i32
    scf.if %2 {
      %c0_51 = arith.constant 0 : index
      %c0_52 = arith.constant 0 : index
      %c0_53 = arith.constant 0 : index
      %103 = vector.load %arg2[%c0_51, %c0_52, %c0_53] : memref<1x144x128xbf16, #tpu.memory_space<vmem>>, vector<1x144x128xbf16>
      %104 = vector.shape_cast %103 : vector<1x144x128xbf16> to vector<144x128xbf16>
      %c0_54 = arith.constant 0 : index
      %c0_55 = arith.constant 0 : index
      %105 = vector.load %arg6[%c0_54, %c0_55] : memref<128x128xbf16, #tpu.memory_space<vmem>>, vector<128x128xbf16>
      %cst_56 = arith.constant dense<0.000000e+00> : vector<144x128xf32>
      %106 = tpu.matmul %104, %105, %cst_56 {dimension_numbers = #tpu.dot_dimension_numbers<[1], [0], [0], [1], [0, 0, 1, 1], [], []>} : vector<144x128xbf16>, vector<128x128xbf16>, vector<144x128xf32> -> vector<144x128xf32>
      %c0_57 = arith.constant 0 : index
      %c0_58 = arith.constant 0 : index
      %107 = vector.load %arg8[%c0_57, %c0_58] : memref<1x128xf32, #tpu.memory_space<vmem>>, vector<1x128xf32>
      %108 = vector.broadcast %107 : vector<1x128xf32> to vector<144x128xf32>
      %109 = arith.addf %106, %108 : vector<144x128xf32>
      %110 = vector.shape_cast %109 : vector<144x128xf32> to vector<3x48x128xf32>
      %c0_59 = arith.constant 0 : index
      %c0_60 = arith.constant 0 : index
      %c0_61 = arith.constant 0 : index
      %111 = vector.load %arg17[%c0_59, %c0_60, %c0_61] : memref<3x48x128xf32, #tpu.memory_space<vmem>>, vector<3x48x128xf32>
      tpu.vector_store %arg17[%c0_59, %c0_60, %c0_61], %110 {strides = array<i32>} : memref<3x48x128xf32, #tpu.memory_space<vmem>>, vector<3x48x128xf32>,
      %112 = arith.truncf %109 : vector<144x128xf32> to vector<144x128xbf16>
      %c0_62 = arith.constant 0 : index
      %c0_63 = arith.constant 0 : index
      %113 = vector.load %arg10[%c0_62, %c0_63] : memref<128x256xbf16, #tpu.memory_space<vmem>>, vector<128x256xbf16>
      %cst_64 = arith.constant dense<0.000000e+00> : vector<144x256xf32>
      %114 = tpu.matmul %112, %113, %cst_64 {dimension_numbers = #tpu.dot_dimension_numbers<[1], [0], [0], [1], [0, 0, 1, 1], [], []>} : vector<144x128xbf16>, vector<128x256xbf16>, vector<144x256xf32> -> vector<144x256xf32>
      %115 = vector.extract_strided_slice %114 {offsets = [0, 0], sizes = [144, 128], strides = [1, 1]} : vector<144x256xf32> to vector<144x128xf32>
      %116 = arith.truncf %115 : vector<144x128xf32> to vector<144x128xbf16>
      %117 = vector.shape_cast %116 : vector<144x128xbf16> to vector<1x144x128xbf16>
      %c0_65 = arith.constant 0 : index
      %c0_66 = arith.constant 0 : index
      %c0_67 = arith.constant 0 : index
      %118 = vector.load %arg18[%c0_65, %c0_66, %c0_67] : memref<2x144x128xbf16, #tpu.memory_space<vmem>>, vector<1x144x128xbf16>
      tpu.vector_store %arg18[%c0_65, %c0_66, %c0_67], %117 {strides = array<i32>} : memref<2x144x128xbf16, #tpu.memory_space<vmem>>, vector<1x144x128xbf16>,
      %119 = vector.extract_strided_slice %114 {offsets = [0, 128], sizes = [144, 128], strides = [1, 1]} : vector<144x256xf32> to vector<144x128xf32>
      %120 = arith.truncf %119 : vector<144x128xf32> to vector<144x128xbf16>
      %121 = vector.shape_cast %120 : vector<144x128xbf16> to vector<1x144x128xbf16>
      %c0_68 = arith.constant 0 : index
      %c0_69 = arith.constant 0 : index
      %c0_70 = arith.constant 0 : index
      %122 = vector.load %arg19[%c0_68, %c0_69, %c0_70] : memref<2x144x128xbf16, #tpu.memory_space<vmem>>, vector<1x144x128xbf16>
      tpu.vector_store %arg19[%c0_68, %c0_69, %c0_70], %121 {strides = array<i32>} : memref<2x144x128xbf16, #tpu.memory_space<vmem>>, vector<1x144x128xbf16>,
      %c0_71 = arith.constant 0 : index
      %c0_72 = arith.constant 0 : index
      %c0_73 = arith.constant 0 : index
      %123 = vector.load %arg3[%c0_71, %c0_72, %c0_73] : memref<1x144x128xbf16, #tpu.memory_space<vmem>>, vector<1x144x128xbf16>
      %124 = vector.shape_cast %123 : vector<1x144x128xbf16> to vector<144x128xbf16>
      %c0_74 = arith.constant 0 : index
      %c0_75 = arith.constant 0 : index
      %125 = vector.load %arg7[%c0_74, %c0_75] : memref<128x128xbf16, #tpu.memory_space<vmem>>, vector<128x128xbf16>
      %cst_76 = arith.constant dense<0.000000e+00> : vector<144x128xf32>
      %126 = tpu.matmul %124, %125, %cst_76 {dimension_numbers = #tpu.dot_dimension_numbers<[1], [0], [0], [1], [0, 0, 1, 1], [], []>} : vector<144x128xbf16>, vector<128x128xbf16>, vector<144x128xf32> -> vector<144x128xf32>
      %c0_77 = arith.constant 0 : index
      %c0_78 = arith.constant 0 : index
      %127 = vector.load %arg8[%c0_77, %c0_78] : memref<1x128xf32, #tpu.memory_space<vmem>>, vector<1x128xf32>
      %128 = vector.broadcast %127 : vector<1x128xf32> to vector<144x128xf32>
      %129 = arith.addf %126, %128 : vector<144x128xf32>
      %130 = arith.truncf %129 : vector<144x128xf32> to vector<144x128xbf16>
      %c0_79 = arith.constant 0 : index
      %c0_80 = arith.constant 0 : index
      %131 = vector.load %arg10[%c0_79, %c0_80] : memref<128x256xbf16, #tpu.memory_space<vmem>>, vector<128x256xbf16>
      %cst_81 = arith.constant dense<0.000000e+00> : vector<144x256xf32>
      %132 = tpu.matmul %130, %131, %cst_81 {dimension_numbers = #tpu.dot_dimension_numbers<[1], [0], [0], [1], [0, 0, 1, 1], [], []>} : vector<144x128xbf16>, vector<128x256xbf16>, vector<144x256xf32> -> vector<144x256xf32>
      %133 = vector.extract_strided_slice %132 {offsets = [0, 0], sizes = [144, 128], strides = [1, 1]} : vector<144x256xf32> to vector<144x128xf32>
      %134 = arith.truncf %133 : vector<144x128xf32> to vector<144x128xbf16>
      %135 = vector.shape_cast %134 : vector<144x128xbf16> to vector<1x144x128xbf16>
      %c1 = arith.constant 1 : index
      %c0_82 = arith.constant 0 : index
      %c0_83 = arith.constant 0 : index
      %136 = vector.load %arg18[%c1, %c0_82, %c0_83] : memref<2x144x128xbf16, #tpu.memory_space<vmem>>, vector<1x144x128xbf16>
      tpu.vector_store %arg18[%c1, %c0_82, %c0_83], %135 {strides = array<i32>} : memref<2x144x128xbf16, #tpu.memory_space<vmem>>, vector<1x144x128xbf16>,
      %137 = vector.extract_strided_slice %132 {offsets = [0, 128], sizes = [144, 128], strides = [1, 1]} : vector<144x256xf32> to vector<144x128xf32>
      %138 = arith.truncf %137 : vector<144x128xf32> to vector<144x128xbf16>
      %139 = vector.shape_cast %138 : vector<144x128xbf16> to vector<1x144x128xbf16>
      %c1_84 = arith.constant 1 : index
      %c0_85 = arith.constant 0 : index
      %c0_86 = arith.constant 0 : index
      %140 = vector.load %arg19[%c1_84, %c0_85, %c0_86] : memref<2x144x128xbf16, #tpu.memory_space<vmem>>, vector<1x144x128xbf16>
      tpu.vector_store %arg19[%c1_84, %c0_85, %c0_86], %139 {strides = array<i32>} : memref<2x144x128xbf16, #tpu.memory_space<vmem>>, vector<1x144x128xbf16>,
    } else {
    }
    %3 = arith.index_cast %arg1 : i32 to index
    %c0 = arith.constant 0 : index
    %c0_1 = arith.constant 0 : index
    %4 = vector.load %arg17[%3, %c0, %c0_1] : memref<3x48x128xf32, #tpu.memory_space<vmem>>, vector<1x48x128xf32>
    %5 = vector.shape_cast %4 : vector<1x48x128xf32> to vector<48x128xf32>
    %6 = arith.truncf %5 : vector<48x128xf32> to vector<48x128xbf16>
    %c0_2 = arith.constant 0 : index
    %c0_3 = arith.constant 0 : index
    %7 = vector.load %arg9[%c0_2, %c0_3] : memref<128x128xbf16, #tpu.memory_space<vmem>>, vector<128x128xbf16>
    %cst = arith.constant dense<0.000000e+00> : vector<48x128xf32>
    %8 = tpu.matmul %6, %7, %cst {dimension_numbers = #tpu.dot_dimension_numbers<[1], [0], [0], [1], [0, 0, 1, 1], [], []>} : vector<48x128xbf16>, vector<128x128xbf16>, vector<48x128xf32> -> vector<48x128xf32>
    %9 = arith.truncf %8 : vector<48x128xf32> to vector<48x128xbf16>
    %cst_4 = arith.constant 0xFF800000 : f32
    %10 = vector.broadcast %cst_4 : f32 to vector<48x1xf32>
    %cst_5 = arith.constant 0.000000e+00 : f32
    %11 = vector.broadcast %cst_5 : f32 to vector<48x1xf32>
    %cst_6 = arith.constant 0.000000e+00 : f32
    %12 = vector.broadcast %cst_6 : f32 to vector<48x128xf32>
    %c0_i32_7 = arith.constant 0 : i32
    %13 = arith.index_cast %c0_i32_7 : i32 to index
    %c0_8 = arith.constant 0 : index
    %c0_9 = arith.constant 0 : index
    %14 = vector.load %arg18[%13, %c0_8, %c0_9] : memref<2x144x128xbf16, #tpu.memory_space<vmem>>, vector<1x144x128xbf16>
    %15 = vector.shape_cast %14 : vector<1x144x128xbf16> to vector<144x128xbf16>
    %16 = arith.index_cast %c0_i32_7 : i32 to index
    %c0_10 = arith.constant 0 : index
    %c0_11 = arith.constant 0 : index
    %17 = vector.load %arg19[%16, %c0_10, %c0_11] : memref<2x144x128xbf16, #tpu.memory_space<vmem>>, vector<1x144x128xbf16>
    %18 = vector.shape_cast %17 : vector<1x144x128xbf16> to vector<144x128xbf16>
    %cst_12 = arith.constant dense<0.000000e+00> : vector<48x144xf32>
    %19 = tpu.matmul %9, %15, %cst_12 {dimension_numbers = #tpu.dot_dimension_numbers<[1], [1], [0], [0], [0, 0, 1, 0], [], []>} : vector<48x128xbf16>, vector<144x128xbf16>, vector<48x144xf32> -> vector<48x144xf32>
    %cst_13 = arith.constant dense<0xFF800000> : vector<48xf32>
    %20 = vector.multi_reduction <maximumf>, %19, %cst_13 [1] : vector<48x144xf32> to vector<48xf32>
    %21 = vector.shape_cast %20 : vector<48xf32> to vector<48x1xf32>
    %22 = arith.maximumf %10, %21 : vector<48x1xf32>
    %23 = arith.subf %10, %22 : vector<48x1xf32>
    %24 = math.exp %23 : vector<48x1xf32>
    %25 = vector.broadcast %22 : vector<48x1xf32> to vector<48x144xf32>
    %26 = arith.subf %19, %25 : vector<48x144xf32>
    %27 = math.exp %26 : vector<48x144xf32>
    %28 = arith.mulf %24, %11 : vector<48x1xf32>
    %cst_14 = arith.constant dense<0.000000e+00> : vector<48xf32>
    %29 = vector.multi_reduction <add>, %27, %cst_14 [1] : vector<48x144xf32> to vector<48xf32>
    %30 = vector.shape_cast %29 : vector<48xf32> to vector<48x1xf32>
    %31 = arith.addf %28, %30 : vector<48x1xf32>
    %32 = vector.broadcast %24 : vector<48x1xf32> to vector<48x128xf32>
    %33 = arith.mulf %32, %12 : vector<48x128xf32>
    %34 = arith.truncf %27 : vector<48x144xf32> to vector<48x144xbf16>
    %cst_15 = arith.constant dense<0.000000e+00> : vector<48x128xf32>
    %35 = tpu.matmul %34, %18, %cst_15 {dimension_numbers = #tpu.dot_dimension_numbers<[1], [0], [0], [1], [0, 0, 1, 1], [], []>} : vector<48x144xbf16>, vector<144x128xbf16>, vector<48x128xf32> -> vector<48x128xf32>
    %36 = arith.addf %33, %35 : vector<48x128xf32>
    %c1_i32 = arith.constant 1 : i32
    %37 = arith.index_cast %c1_i32 : i32 to index
    %c0_16 = arith.constant 0 : index
    %c0_17 = arith.constant 0 : index
    %38 = vector.load %arg18[%37, %c0_16, %c0_17] : memref<2x144x128xbf16, #tpu.memory_space<vmem>>, vector<1x144x128xbf16>
    %39 = vector.shape_cast %38 : vector<1x144x128xbf16> to vector<144x128xbf16>
    %40 = arith.index_cast %c1_i32 : i32 to index
    %c0_18 = arith.constant 0 : index
    %c0_19 = arith.constant 0 : index
    %41 = vector.load %arg19[%40, %c0_18, %c0_19] : memref<2x144x128xbf16, #tpu.memory_space<vmem>>, vector<1x144x128xbf16>
    %42 = vector.shape_cast %41 : vector<1x144x128xbf16> to vector<144x128xbf16>
    %cst_20 = arith.constant dense<0.000000e+00> : vector<48x144xf32>
    %43 = tpu.matmul %9, %39, %cst_20 {dimension_numbers = #tpu.dot_dimension_numbers<[1], [1], [0], [0], [0, 0, 1, 0], [], []>} : vector<48x128xbf16>, vector<144x128xbf16>, vector<48x144xf32> -> vector<48x144xf32>
    %cst_21 = arith.constant dense<0xFF800000> : vector<48xf32>
    %44 = vector.multi_reduction <maximumf>, %43, %cst_21 [1] : vector<48x144xf32> to vector<48xf32>
    %45 = vector.shape_cast %44 : vector<48xf32> to vector<48x1xf32>
    %46 = arith.maximumf %22, %45 : vector<48x1xf32>
    %47 = arith.subf %22, %46 : vector<48x1xf32>
    %48 = math.exp %47 : vector<48x1xf32>
    %49 = vector.broadcast %46 : vector<48x1xf32> to vector<48x144xf32>
    %50 = arith.subf %43, %49 : vector<48x144xf32>
    %51 = math.exp %50 : vector<48x144xf32>
    %52 = arith.mulf %48, %31 : vector<48x1xf32>
    %cst_22 = arith.constant dense<0.000000e+00> : vector<48xf32>
    %53 = vector.multi_reduction <add>, %51, %cst_22 [1] : vector<48x144xf32> to vector<48xf32>
    %54 = vector.shape_cast %53 : vector<48xf32> to vector<48x1xf32>
    %55 = arith.addf %52, %54 : vector<48x1xf32>
    %56 = vector.broadcast %48 : vector<48x1xf32> to vector<48x128xf32>
    %57 = arith.mulf %56, %36 : vector<48x128xf32>
    %58 = arith.truncf %51 : vector<48x144xf32> to vector<48x144xbf16>
    %cst_23 = arith.constant dense<0.000000e+00> : vector<48x128xf32>
    %59 = tpu.matmul %58, %42, %cst_23 {dimension_numbers = #tpu.dot_dimension_numbers<[1], [0], [0], [1], [0, 0, 1, 1], [], []>} : vector<48x144xbf16>, vector<144x128xbf16>, vector<48x128xf32> -> vector<48x128xf32>
    %60 = arith.addf %57, %59 : vector<48x128xf32>
    %c2_i32 = arith.constant 2 : i32
    %61 = tpu.reciprocal %55 {approx = true} : vector<48x1xf32> -> vector<48x1xf32>
    %62 = vector.broadcast %61 : vector<48x1xf32> to vector<48x128xf32>
    %63 = arith.mulf %60, %62 : vector<48x128xf32>
    %64 = arith.truncf %63 : vector<48x128xf32> to vector<48x128xbf16>
    %c0_24 = arith.constant 0 : index
    %c0_25 = arith.constant 0 : index
    %65 = vector.load %arg11[%c0_24, %c0_25] : memref<128x128xbf16, #tpu.memory_space<vmem>>, vector<128x128xbf16>
    %cst_26 = arith.constant dense<0.000000e+00> : vector<48x128xf32>
    %66 = tpu.matmul %64, %65, %cst_26 {dimension_numbers = #tpu.dot_dimension_numbers<[1], [0], [0], [1], [0, 0, 1, 1], [], []>} : vector<48x128xbf16>, vector<128x128xbf16>, vector<48x128xf32> -> vector<48x128xf32>
    %67 = arith.addf %5, %66 : vector<48x128xf32>
    %68 = arith.truncf %67 : vector<48x128xf32> to vector<48x128xbf16>
    %c0_27 = arith.constant 0 : index
    %c0_28 = arith.constant 0 : index
    %69 = vector.load %arg12[%c0_27, %c0_28] : memref<128x128xbf16, #tpu.memory_space<vmem>>, vector<128x128xbf16>
    %cst_29 = arith.constant dense<0.000000e+00> : vector<48x128xf32>
    %70 = tpu.matmul %68, %69, %cst_29 {dimension_numbers = #tpu.dot_dimension_numbers<[1], [0], [0], [1], [0, 0, 1, 1], [], []>} : vector<48x128xbf16>, vector<128x128xbf16>, vector<48x128xf32> -> vector<48x128xf32>
    %71 = arith.truncf %70 : vector<48x128xf32> to vector<48x128xbf16>
    %c0_30 = arith.constant 0 : index
    %c0_31 = arith.constant 0 : index
    %c0_32 = arith.constant 0 : index
    %72 = vector.load %arg4[%c0_30, %c0_31, %c0_32] : memref<1x8x128xbf16, #tpu.memory_space<vmem>>, vector<1x8x128xbf16>
    %73 = vector.shape_cast %72 : vector<1x8x128xbf16> to vector<8x128xbf16>
    %cst_33 = arith.constant dense<0.000000e+00> : vector<48x8xf32>
    %74 = tpu.matmul %71, %73, %cst_33 {dimension_numbers = #tpu.dot_dimension_numbers<[1], [1], [0], [0], [0, 0, 1, 0], [], []>} : vector<48x128xbf16>, vector<8x128xbf16>, vector<48x8xf32> -> vector<48x8xf32>
    %cst_34 = arith.constant dense<0xFF800000> : vector<48xf32>
    %75 = vector.multi_reduction <maximumf>, %74, %cst_34 [1] : vector<48x8xf32> to vector<48xf32>
    %76 = vector.shape_cast %75 : vector<48xf32> to vector<48x1xf32>
    %77 = vector.broadcast %76 : vector<48x1xf32> to vector<48x8xf32>
    %78 = arith.subf %74, %77 : vector<48x8xf32>
    %79 = math.exp %78 : vector<48x8xf32>
    %80 = arith.truncf %79 : vector<48x8xf32> to vector<48x8xbf16>
    %c0_35 = arith.constant 0 : index
    %c0_36 = arith.constant 0 : index
    %c0_37 = arith.constant 0 : index
    %81 = vector.load %arg5[%c0_35, %c0_36, %c0_37] : memref<1x8x128xbf16, #tpu.memory_space<vmem>>, vector<1x8x128xbf16>
    %82 = vector.shape_cast %81 : vector<1x8x128xbf16> to vector<8x128xbf16>
    %cst_38 = arith.constant dense<0.000000e+00> : vector<48x128xf32>
    %83 = tpu.matmul %80, %82, %cst_38 {dimension_numbers = #tpu.dot_dimension_numbers<[1], [0], [0], [1], [0, 0, 1, 1], [], []>} : vector<48x8xbf16>, vector<8x128xbf16>, vector<48x128xf32> -> vector<48x128xf32>
    %cst_39 = arith.constant dense<0.000000e+00> : vector<48xf32>
    %84 = vector.multi_reduction <add>, %79, %cst_39 [1] : vector<48x8xf32> to vector<48xf32>
    %85 = vector.shape_cast %84 : vector<48xf32> to vector<48x1xf32>
    %86 = tpu.reciprocal %85 {approx = true} : vector<48x1xf32> -> vector<48x1xf32>
    %87 = vector.broadcast %86 : vector<48x1xf32> to vector<48x128xf32>
    %88 = arith.mulf %83, %87 : vector<48x128xf32>
    %89 = arith.truncf %88 : vector<48x128xf32> to vector<48x128xbf16>
    %c0_40 = arith.constant 0 : index
    %c0_41 = arith.constant 0 : index
    %90 = vector.load %arg13[%c0_40, %c0_41] : memref<128x128xbf16, #tpu.memory_space<vmem>>, vector<128x128xbf16>
    %cst_42 = arith.constant dense<0.000000e+00> : vector<48x128xf32>
    %91 = tpu.matmul %89, %90, %cst_42 {dimension_numbers = #tpu.dot_dimension_numbers<[1], [0], [0], [1], [0, 0, 1, 1], [], []>} : vector<48x128xbf16>, vector<128x128xbf16>, vector<48x128xf32> -> vector<48x128xf32>
    %92 = arith.addf %67, %91 : vector<48x128xf32>
    %93 = arith.truncf %92 : vector<48x128xf32> to vector<48x128xbf16>
    %c0_43 = arith.constant 0 : index
    %c0_44 = arith.constant 0 : index
    %94 = vector.load %arg14[%c0_43, %c0_44] : memref<128x128xbf16, #tpu.memory_space<vmem>>, vector<128x128xbf16>
    %cst_45 = arith.constant dense<0.000000e+00> : vector<48x128xf32>
    %95 = tpu.matmul %93, %94, %cst_45 {dimension_numbers = #tpu.dot_dimension_numbers<[1], [0], [0], [1], [0, 0, 1, 1], [], []>} : vector<48x128xbf16>, vector<128x128xbf16>, vector<48x128xf32> -> vector<48x128xf32>
    %c0_46 = arith.constant 0 : index
    %c0_47 = arith.constant 0 : index
    %96 = vector.load %arg15[%c0_46, %c0_47] : memref<1x128xf32, #tpu.memory_space<vmem>>, vector<1x128xf32>
    %97 = vector.broadcast %96 : vector<1x128xf32> to vector<48x128xf32>
    %98 = arith.addf %95, %97 : vector<48x128xf32>
    %99 = arith.truncf %98 : vector<48x128xf32> to vector<48x128xbf16>
    %c0_48 = arith.constant 0 : index
    %c0_49 = arith.constant 0 : index
    %c0_50 = arith.constant 0 : index
    %100 = vector.load %arg16[%c0_48, %c0_49, %c0_50] : memref<1x48x128xbf16, #tpu.memory_space<vmem>>, vector<1x48x128xbf16>
    %101 = vector.shape_cast %100 : vector<1x48x128xbf16> to vector<48x128xbf16>
    %102 = vector.shape_cast %99 : vector<48x128xbf16> to vector<1x48x128xbf16>
    tpu.vector_store %arg16[%c0_48, %c0_49, %c0_50], %102 {strides = array<i32>} : memref<1x48x128xbf16, #tpu.memory_space<vmem>>, vector<1x48x128xbf16>,
    return
  }
  func.func @transform_0(%arg0: i32, %arg1: i32) -> (i32, i32, i32) {
    %c0_i32 = arith.constant 0 : i32
    %c0_i32_0 = arith.constant 0 : i32
    %c0_i32_1 = arith.constant 0 : i32
    return %arg0, %c0_i32, %c0_i32_0 : i32, i32, i32
  }
  func.func @transform_1(%arg0: i32, %arg1: i32) -> (i32, i32, i32) {
    %c0_i32 = arith.constant 0 : i32
    %c0_i32_0 = arith.constant 0 : i32
    %c0_i32_1 = arith.constant 0 : i32
    return %arg0, %c0_i32, %c0_i32_0 : i32, i32, i32
  }
  func.func @transform_2(%arg0: i32, %arg1: i32) -> (i32, i32, i32) {
    %c0_i32 = arith.constant 0 : i32
    %c0_i32_0 = arith.constant 0 : i32
    %c0_i32_1 = arith.constant 0 : i32
    return %arg0, %c0_i32, %c0_i32_0 : i32, i32, i32
  }
  func.func @transform_3(%arg0: i32, %arg1: i32) -> (i32, i32, i32) {
    %c0_i32 = arith.constant 0 : i32
    %c0_i32_0 = arith.constant 0 : i32
    %c0_i32_1 = arith.constant 0 : i32
    return %arg0, %c0_i32, %c0_i32_0 : i32, i32, i32
  }
  func.func @transform_4(%arg0: i32, %arg1: i32) -> (i32, i32) {
    %c0_i32 = arith.constant 0 : i32
    %c0_i32_0 = arith.constant 0 : i32
    %c0_i32_1 = arith.constant 0 : i32
    return %c0_i32, %c0_i32_0 : i32, i32
  }
  func.func @transform_5(%arg0: i32, %arg1: i32) -> (i32, i32) {
    %c0_i32 = arith.constant 0 : i32
    %c0_i32_0 = arith.constant 0 : i32
    %c0_i32_1 = arith.constant 0 : i32
    return %c0_i32, %c0_i32_0 : i32, i32
  }
  func.func @transform_6(%arg0: i32, %arg1: i32) -> (i32, i32) {
    %c0_i32 = arith.constant 0 : i32
    %c0_i32_0 = arith.constant 0 : i32
    %c0_i32_1 = arith.constant 0 : i32
    return %c0_i32, %c0_i32_0 : i32, i32
  }
  func.func @transform_7(%arg0: i32, %arg1: i32) -> (i32, i32) {
    %c0_i32 = arith.constant 0 : i32
    %c0_i32_0 = arith.constant 0 : i32
    %c0_i32_1 = arith.constant 0 : i32
    return %c0_i32, %c0_i32_0 : i32, i32
  }
  func.func @transform_8(%arg0: i32, %arg1: i32) -> (i32, i32) {
    %c0_i32 = arith.constant 0 : i32
    %c0_i32_0 = arith.constant 0 : i32
    %c0_i32_1 = arith.constant 0 : i32
    return %c0_i32, %c0_i32_0 : i32, i32
  }
  func.func @transform_9(%arg0: i32, %arg1: i32) -> (i32, i32) {
    %c0_i32 = arith.constant 0 : i32
    %c0_i32_0 = arith.constant 0 : i32
    %c0_i32_1 = arith.constant 0 : i32
    return %c0_i32, %c0_i32_0 : i32, i32
  }
  func.func @transform_10(%arg0: i32, %arg1: i32) -> (i32, i32) {
    %c0_i32 = arith.constant 0 : i32
    %c0_i32_0 = arith.constant 0 : i32
    %c0_i32_1 = arith.constant 0 : i32
    return %c0_i32, %c0_i32_0 : i32, i32
  }
  func.func @transform_11(%arg0: i32, %arg1: i32) -> (i32, i32) {
    %c0_i32 = arith.constant 0 : i32
    %c0_i32_0 = arith.constant 0 : i32
    %c0_i32_1 = arith.constant 0 : i32
    return %c0_i32, %c0_i32_0 : i32, i32
  }
  func.func @transform_12(%arg0: i32, %arg1: i32) -> (i32, i32) {
    %c0_i32 = arith.constant 0 : i32
    %c0_i32_0 = arith.constant 0 : i32
    %c0_i32_1 = arith.constant 0 : i32
    return %c0_i32, %c0_i32_0 : i32, i32
  }
  func.func @transform_13(%arg0: i32, %arg1: i32) -> (i32, i32) {
    %c0_i32 = arith.constant 0 : i32
    %c0_i32_0 = arith.constant 0 : i32
    %c0_i32_1 = arith.constant 0 : i32
    return %c0_i32, %c0_i32_0 : i32, i32
  }
  func.func @transform_14(%arg0: i32, %arg1: i32) -> (i32, i32, i32) {
    %c0_i32 = arith.constant 0 : i32
    %c0_i32_0 = arith.constant 0 : i32
    return %arg0, %arg1, %c0_i32 : i32, i32, i32
  }
}

</mosaic_0001>

<llo_original>
// kernel: _ref_only_noised_unet_impl.1
$region0: #{_ref_only_noised_unet_impl.1}
  #allocation0 [shape = 'u32[]', space=smem, size = 0x4, offset = 0x4, fixed_abs, tag = 'smem constant byte address 0x4 - core index']
  #allocation1 [shape = 'u32[144,128]{1,0:T(1,128)}', space=vmem, size = 0x12000, scoped, tag = 'internal scratch']
  #allocation2 [shape = 'f32[3,48,128]{2,1,0:T(8,128)}', space=vmem, size = 0x12000, scoped, tag = 'scratch operand']
  #allocation3 [shape = 'bf16[2,144,128]{2,1,0:T(16,128)(2,1)}', space=vmem, size = 0x12000, scoped, tag = 'scratch operand']
  #allocation4 [shape = 'bf16[2,144,128]{2,1,0:T(16,128)(2,1)}', space=vmem, size = 0x12000, scoped, tag = 'scratch operand']
  %s0 = inlined_call_operand.vmem [shape: bf16[2,144,128], index: 0, kind: input, shape index: {}]
  %s1 = inlined_call_operand.vmem [shape: bf16[2,144,128], index: 1, kind: input, shape index: {}]
  %s2 = inlined_call_operand.vmem [shape: bf16[2,8,128], index: 2, kind: input, shape index: {}]
  %s3 = inlined_call_operand.vmem [shape: bf16[2,8,128], index: 3, kind: input, shape index: {}]
  %s4 = inlined_call_operand.vmem [shape: bf16[128,128], index: 4, kind: input, shape index: {}]
  %s5 = inlined_call_operand.vmem [shape: bf16[128,128], index: 5, kind: input, shape index: {}]
  %s6 = inlined_call_operand.vmem [shape: f32[1,128], index: 6, kind: input, shape index: {}]
  %s7 = inlined_call_operand.vmem [shape: bf16[128,128], index: 7, kind: input, shape index: {}]
  %s8 = inlined_call_operand.vmem [shape: bf16[128,256], index: 8, kind: input, shape index: {}]
  %s9 = inlined_call_operand.vmem [shape: bf16[128,128], index: 9, kind: input, shape index: {}]
  %s10 = inlined_call_operand.vmem [shape: bf16[128,128], index: 10, kind: input, shape index: {}]
  %s11 = inlined_call_operand.vmem [shape: bf16[128,128], index: 11, kind: input, shape index: {}]
  %s12 = inlined_call_operand.vmem [shape: bf16[128,128], index: 12, kind: input, shape index: {}]
  %s13 = inlined_call_operand.vmem [shape: f32[1,128], index: 13, kind: input, shape index: {}]
  %s14 = inlined_call_operand.vmem [shape: bf16[2,144,128], index: 14, kind: output, shape index: {}]
  %s15 = sld [smem:[#allocation0]]
  $region93: #{_ref_only_noised_unet_impl.1} parent=0
    _
  %s17 = ssub.s32 1, %s15
  %s18 = scalar_select 0, %s17, %s15
  loop: start=0, step=1, limit=8
  $region2: #{_ref_only_noised_unet_impl.1} parent=0 // loop_pre_header
    _
  $region3: #{_ref_only_noised_unet_impl.1} parent=0 // loop_header
    %s20 = sphi 0, %s24
    %p21 = scmp.ge.s32.totalorder %s20, 8
    %s27 = sphi 0, %s39
    %s28 = sphi 0, %s35
    %s29 = sphi 0, %s27
    %s30 = sphi 0, %s28
    %s31 = sphi 0, %s29
    %s32 = sphi 0, %s30
    %s42 = sphi 0, %s44
    %s45 = sphi 0, %s42
    %s46 = sphi 0, %s45
    %s62 = sphi 0, %s46
    %s68 = sphi 0, %s70
    %s71 = sphi 0, %s68
    %s72 = sphi 0, %s71
    %s88 = sphi 0, %s72
    %s94 = sphi 0, %s96
    %s97 = sphi 0, %s94
    %s98 = sphi 0, %s97
    %s114 = sphi 0, %s98
    %s120 = sphi 0, %s122
    %s123 = sphi 0, %s120
    %s124 = sphi 0, %s123
    %s140 = sphi 0, %s124
    %s144 = sphi 0, %s144
    %s146 = sphi 0, %s144
    %s147 = sphi 0, %s146
    %s161 = sphi 0, %s147
    %s165 = sphi 0, %s165
    %s167 = sphi 0, %s165
    %s168 = sphi 0, %s167
    %s182 = sphi 0, %s168
    %s186 = sphi 0, %s186
    %s188 = sphi 0, %s186
    %s189 = sphi 0, %s188
    %s203 = sphi 0, %s189
    %s207 = sphi 0, %s207
    %s209 = sphi 0, %s207
    %s210 = sphi 0, %s209
    %s224 = sphi 0, %s210
    %s228 = sphi 0, %s228
    %s230 = sphi 0, %s228
    %s231 = sphi 0, %s230
    %s245 = sphi 0, %s231
    %s249 = sphi 0, %s249
    %s251 = sphi 0, %s249
    %s252 = sphi 0, %s251
    %s266 = sphi 0, %s252
    %s270 = sphi 0, %s270
    %s272 = sphi 0, %s270
    %s273 = sphi 0, %s272
    %s287 = sphi 0, %s273
    %s291 = sphi 0, %s291
    %s293 = sphi 0, %s291
    %s294 = sphi 0, %s293
    %s308 = sphi 0, %s294
    %s312 = sphi 0, %s312
    %s314 = sphi 0, %s312
    %s315 = sphi 0, %s314
    %s329 = sphi 0, %s315
    %s333 = sphi 0, %s333
    %s335 = sphi 0, %s333
    %s336 = sphi 0, %s335
    %s350 = sphi 0, %s336
    %s358 = sphi 0, %s360
    %s361 = sphi 0, %s358
    %s362 = sphi 0, %s361
    %s378 = sphi 0, %s362
  $region4: #{_ref_only_noised_unet_impl.1} parent=0 // loop_header_branch
    %23 = sbr.rel (%p21) target = $region8
  $region5: #{_ref_only_noised_unet_impl.1} parent=0 // loop_body
    %s25 = ssub.s32 %s20, 1
    %s26 = ssub.s32 %s20, 2
    %s33 = sadd.s32 1, %s28
    %p34 = scmp.ge.s32.totalorder %s33, 3
    %s35 = scalar_select %p34, 0, %s33
    %s36 = sadd.s32 1, %s27
    %s37 = scalar_select %p34, %s36, %s27
    %p38 = scmp.ge.s32.totalorder %s37, 2
    %s39 = scalar_select %p38, 0, %s37
    %s40 = ssub.s32 %s27, %s39
    %p41 = scmp.eq.s32.totalorder %s40, 0
    %s43 = sadd.s32 %s42, 1
    %s44 = scalar_select %p41, %s42, %s43
    %p47 = pneg %p41
    %p48 = scmp.eq.s32.totalorder %s20, 5
    %p49 = por %p47, %p48
    %p50 = scmp.ne.s32.totalorder %s42, %s45
    %p51 = scmp.eq.s32.totalorder %s20, 0
    %p52 = por %p50, %p51
    %p53 = scmp.ne.s32.totalorder %s42, %s45
    %p54 = scmp.eq.s32.totalorder %s25, 5
    %p55 = por %p53, %p54
    %p56 = scmp.ne.s32.totalorder %s45, %s46
    %p57 = scmp.eq.s32.totalorder %s25, 0
    %p58 = por %p56, %p57
    %p59 = scmp.ne.s32.totalorder %s45, %s46
    %p60 = scmp.eq.s32.totalorder %s26, 5
    %p61 = por %p59, %p60
    %p63 = scmp.ne.s32.totalorder %s46, %s62
    %p64 = scmp.eq.s32.totalorder %s26, 0
    %p65 = por %p63, %p64
    %s66 = ssub.s32 %s27, %s39
    %p67 = scmp.eq.s32.totalorder %s66, 0
    %s69 = sadd.s32 %s68, 1
    %s70 = scalar_select %p67, %s68, %s69
    %p73 = pneg %p67
    %p74 = scmp.eq.s32.totalorder %s20, 5
    %p75 = por %p73, %p74
    %p76 = scmp.ne.s32.totalorder %s68, %s71
    %p77 = scmp.eq.s32.totalorder %s20, 0
    %p78 = por %p76, %p77
    %p79 = scmp.ne.s32.totalorder %s68, %s71
    %p80 = scmp.eq.s32.totalorder %s25, 5
    %p81 = por %p79, %p80
    %p82 = scmp.ne.s32.totalorder %s71, %s72
    %p83 = scmp.eq.s32.totalorder %s25, 0
    %p84 = por %p82, %p83
    %p85 = scmp.ne.s32.totalorder %s71, %s72
    %p86 = scmp.eq.s32.totalorder %s26, 5
    %p87 = por %p85, %p86
    %p89 = scmp.ne.s32.totalorder %s72, %s88
    %p90 = scmp.eq.s32.totalorder %s26, 0
    %p91 = por %p89, %p90
    %s92 = ssub.s32 %s27, %s39
    %p93 = scmp.eq.s32.totalorder %s92, 0
    %s95 = sadd.s32 %s94, 1
    %s96 = scalar_select %p93, %s94, %s95
    %p99 = pneg %p93
    %p100 = scmp.eq.s32.totalorder %s20, 5
    %p101 = por %p99, %p100
    %p102 = scmp.ne.s32.totalorder %s94, %s97
    %p103 = scmp.eq.s32.totalorder %s20, 0
    %p104 = por %p102, %p103
    %p105 = scmp.ne.s32.totalorder %s94, %s97
    %p106 = scmp.eq.s32.totalorder %s25, 5
    %p107 = por %p105, %p106
    %p108 = scmp.ne.s32.totalorder %s97, %s98
    %p109 = scmp.eq.s32.totalorder %s25, 0
    %p110 = por %p108, %p109
    %p111 = scmp.ne.s32.totalorder %s97, %s98
    %p112 = scmp.eq.s32.totalorder %s26, 5
    %p113 = por %p111, %p112
    %p115 = scmp.ne.s32.totalorder %s98, %s114
    %p116 = scmp.eq.s32.totalorder %s26, 0
    %p117 = por %p115, %p116
    %s118 = ssub.s32 %s27, %s39
    %p119 = scmp.eq.s32.totalorder %s118, 0
    %s121 = sadd.s32 %s120, 1
    %s122 = scalar_select %p119, %s120, %s121
    %p125 = pneg %p119
    %p126 = scmp.eq.s32.totalorder %s20, 5
    %p127 = por %p125, %p126
    %p128 = scmp.ne.s32.totalorder %s120, %s123
    %p129 = scmp.eq.s32.totalorder %s20, 0
    %p130 = por %p128, %p129
    %p131 = scmp.ne.s32.totalorder %s120, %s123
    %p132 = scmp.eq.s32.totalorder %s25, 5
    %p133 = por %p131, %p132
    %p134 = scmp.ne.s32.totalorder %s123, %s124
    %p135 = scmp.eq.s32.totalorder %s25, 0
    %p136 = por %p134, %p135
    %p137 = scmp.ne.s32.totalorder %s123, %s124
    %p138 = scmp.eq.s32.totalorder %s26, 5
    %p139 = por %p137, %p138
    %p141 = scmp.ne.s32.totalorder %s124, %s140
    %p142 = scmp.eq.s32.totalorder %s26, 0
    %p143 = por %p141, %p142
    %s145 = sadd.s32 %s144, 1
    %p148 = scmp.eq.s32.totalorder %s20, 5
    %p149 = scmp.ne.s32.totalorder %s144, %s146
    %p150 = scmp.eq.s32.totalorder %s20, 0
    %p151 = por %p149, %p150
    %p152 = scmp.ne.s32.totalorder %s144, %s146
    %p153 = scmp.eq.s32.totalorder %s25, 5
    %p154 = por %p152, %p153
    %p155 = scmp.ne.s32.totalorder %s146, %s147
    %p156 = scmp.eq.s32.totalorder %s25, 0
    %p157 = por %p155, %p156
    %p158 = scmp.ne.s32.totalorder %s146, %s147
    %p159 = scmp.eq.s32.totalorder %s26, 5
    %p160 = por %p158, %p159
    %p162 = scmp.ne.s32.totalorder %s147, %s161
    %p163 = scmp.eq.s32.totalorder %s26, 0
    %p164 = por %p162, %p163
    %s166 = sadd.s32 %s165, 1
    %p169 = scmp.eq.s32.totalorder %s20, 5
    %p170 = scmp.ne.s32.totalorder %s165, %s167
    %p171 = scmp.eq.s32.totalorder %s20, 0
    %p172 = por %p170, %p171
    %p173 = scmp.ne.s32.totalorder %s165, %s167
    %p174 = scmp.eq.s32.totalorder %s25, 5
    %p175 = por %p173, %p174
    %p176 = scmp.ne.s32.totalorder %s167, %s168
    %p177 = scmp.eq.s32.totalorder %s25, 0
    %p178 = por %p176, %p177
    %p179 = scmp.ne.s32.totalorder %s167, %s168
    %p180 = scmp.eq.s32.totalorder %s26, 5
    %p181 = por %p179, %p180
    %p183 = scmp.ne.s32.totalorder %s168, %s182
    %p184 = scmp.eq.s32.totalorder %s26, 0
    %p185 = por %p183, %p184
    %s187 = sadd.s32 %s186, 1
    %p190 = scmp.eq.s32.totalorder %s20, 5
    %p191 = scmp.ne.s32.totalorder %s186, %s188
    %p192 = scmp.eq.s32.totalorder %s20, 0
    %p193 = por %p191, %p192
    %p194 = scmp.ne.s32.totalorder %s186, %s188
    %p195 = scmp.eq.s32.totalorder %s25, 5
    %p196 = por %p194, %p195
    %p197 = scmp.ne.s32.totalorder %s188, %s189
    %p198 = scmp.eq.s32.totalorder %s25, 0
    %p199 = por %p197, %p198
    %p200 = scmp.ne.s32.totalorder %s188, %s189
    %p201 = scmp.eq.s32.totalorder %s26, 5
    %p202 = por %p200, %p201
    %p204 = scmp.ne.s32.totalorder %s189, %s203
    %p205 = scmp.eq.s32.totalorder %s26, 0
    %p206 = por %p204, %p205
    %s208 = sadd.s32 %s207, 1
    %p211 = scmp.eq.s32.totalorder %s20, 5
    %p212 = scmp.ne.s32.totalorder %s207, %s209
    %p213 = scmp.eq.s32.totalorder %s20, 0
    %p214 = por %p212, %p213
    %p215 = scmp.ne.s32.totalorder %s207, %s209
    %p216 = scmp.eq.s32.totalorder %s25, 5
    %p217 = por %p215, %p216
    %p218 = scmp.ne.s32.totalorder %s209, %s210
    %p219 = scmp.eq.s32.totalorder %s25, 0
    %p220 = por %p218, %p219
    %p221 = scmp.ne.s32.totalorder %s209, %s210
    %p222 = scmp.eq.s32.totalorder %s26, 5
    %p223 = por %p221, %p222
    %p225 = scmp.ne.s32.totalorder %s210, %s224
    %p226 = scmp.eq.s32.totalorder %s26, 0
    %p227 = por %p225, %p226
    %s229 = sadd.s32 %s228, 1
    %p232 = scmp.eq.s32.totalorder %s20, 5
    %p233 = scmp.ne.s32.totalorder %s228, %s230
    %p234 = scmp.eq.s32.totalorder %s20, 0
    %p235 = por %p233, %p234
    %p236 = scmp.ne.s32.totalorder %s228, %s230
    %p237 = scmp.eq.s32.totalorder %s25, 5
    %p238 = por %p236, %p237
    %p239 = scmp.ne.s32.totalorder %s230, %s231
    %p240 = scmp.eq.s32.totalorder %s25, 0
    %p241 = por %p239, %p240
    %p242 = scmp.ne.s32.totalorder %s230, %s231
    %p243 = scmp.eq.s32.totalorder %s26, 5
    %p244 = por %p242, %p243
    %p246 = scmp.ne.s32.totalorder %s231, %s245
    %p247 = scmp.eq.s32.totalorder %s26, 0
    %p248 = por %p246, %p247
    %s250 = sadd.s32 %s249, 1
    %p253 = scmp.eq.s32.totalorder %s20, 5
    %p254 = scmp.ne.s32.totalorder %s249, %s251
    %p255 = scmp.eq.s32.totalorder %s20, 0
    %p256 = por %p254, %p255
    %p257 = scmp.ne.s32.totalorder %s249, %s251
    %p258 = scmp.eq.s32.totalorder %s25, 5
    %p259 = por %p257, %p258
    %p260 = scmp.ne.s32.totalorder %s251, %s252
    %p261 = scmp.eq.s32.totalorder %s25, 0
    %p262 = por %p260, %p261
    %p263 = scmp.ne.s32.totalorder %s251, %s252
    %p264 = scmp.eq.s32.totalorder %s26, 5
    %p265 = por %p263, %p264
    %p267 = scmp.ne.s32.totalorder %s252, %s266
    %p268 = scmp.eq.s32.totalorder %s26, 0
    %p269 = por %p267, %p268
    %s271 = sadd.s32 %s270, 1
    %p274 = scmp.eq.s32.totalorder %s20, 5
    %p275 = scmp.ne.s32.totalorder %s270, %s272
    %p276 = scmp.eq.s32.totalorder %s20, 0
    %p277 = por %p275, %p276
    %p278 = scmp.ne.s32.totalorder %s270, %s272
    %p279 = scmp.eq.s32.totalorder %s25, 5
    %p280 = por %p278, %p279
    %p281 = scmp.ne.s32.totalorder %s272, %s273
    %p282 = scmp.eq.s32.totalorder %s25, 0
    %p283 = por %p281, %p282
    %p284 = scmp.ne.s32.totalorder %s272, %s273
    %p285 = scmp.eq.s32.totalorder %s26, 5
    %p286 = por %p284, %p285
    %p288 = scmp.ne.s32.totalorder %s273, %s287
    %p289 = scmp.eq.s32.totalorder %s26, 0
    %p290 = por %p288, %p289
    %s292 = sadd.s32 %s291, 1
    %p295 = scmp.eq.s32.totalorder %s20, 5
    %p296 = scmp.ne.s32.totalorder %s291, %s293
    %p297 = scmp.eq.s32.totalorder %s20, 0
    %p298 = por %p296, %p297
    %p299 = scmp.ne.s32.totalorder %s291, %s293
    %p300 = scmp.eq.s32.totalorder %s25, 5
    %p301 = por %p299, %p300
    %p302 = scmp.ne.s32.totalorder %s293, %s294
    %p303 = scmp.eq.s32.totalorder %s25, 0
    %p304 = por %p302, %p303
    %p305 = scmp.ne.s32.totalorder %s293, %s294
    %p306 = scmp.eq.s32.totalorder %s26, 5
    %p307 = por %p305, %p306
    %p309 = scmp.ne.s32.totalorder %s294, %s308
    %p310 = scmp.eq.s32.totalorder %s26, 0
    %p311 = por %p309, %p310
    %s313 = sadd.s32 %s312, 1
    %p316 = scmp.eq.s32.totalorder %s20, 5
    %p317 = scmp.ne.s32.totalorder %s312, %s314
    %p318 = scmp.eq.s32.totalorder %s20, 0
    %p319 = por %p317, %p318
    %p320 = scmp.ne.s32.totalorder %s312, %s314
    %p321 = scmp.eq.s32.totalorder %s25, 5
    %p322 = por %p320, %p321
    %p323 = scmp.ne.s32.totalorder %s314, %s315
    %p324 = scmp.eq.s32.totalorder %s25, 0
    %p325 = por %p323, %p324
    %p326 = scmp.ne.s32.totalorder %s314, %s315
    %p327 = scmp.eq.s32.totalorder %s26, 5
    %p328 = por %p326, %p327
    %p330 = scmp.ne.s32.totalorder %s315, %s329
    %p331 = scmp.eq.s32.totalorder %s26, 0
    %p332 = por %p330, %p331
    %s334 = sadd.s32 %s333, 1
    %p337 = scmp.eq.s32.totalorder %s20, 5
    %p338 = scmp.ne.s32.totalorder %s333, %s335
    %p339 = scmp.eq.s32.totalorder %s20, 0
    %p340 = por %p338, %p339
    %p341 = scmp.ne.s32.totalorder %s333, %s335
    %p342 = scmp.eq.s32.totalorder %s25, 5
    %p343 = por %p341, %p342
    %p344 = scmp.ne.s32.totalorder %s335, %s336
    %p345 = scmp.eq.s32.totalorder %s25, 0
    %p346 = por %p344, %p345
    %p347 = scmp.ne.s32.totalorder %s335, %s336
    %p348 = scmp.eq.s32.totalorder %s26, 5
    %p349 = por %p347, %p348
    %p351 = scmp.ne.s32.totalorder %s336, %s350
    %p352 = scmp.eq.s32.totalorder %s26, 0
    %p353 = por %p351, %p352
    %s354 = ssub.s32 %s27, %s39
    %s355 = ssub.s32 %s28, %s35
    %s356 = sor.u32 %s354, %s355
    %p357 = scmp.eq.s32.totalorder %s356, 0
    %s359 = sadd.s32 %s358, 1
    %s360 = scalar_select %p357, %s358, %s359
    %p363 = pneg %p357
    %p364 = scmp.eq.s32.totalorder %s20, 5
    %p365 = por %p363, %p364
    %p366 = scmp.ne.s32.totalorder %s358, %s361
    %p367 = scmp.eq.s32.totalorder %s20, 0
    %p368 = por %p366, %p367
    %p369 = scmp.ne.s32.totalorder %s358, %s361
    %p370 = scmp.eq.s32.totalorder %s25, 5
    %p371 = por %p369, %p370
    %p372 = scmp.ne.s32.totalorder %s361, %s362
    %p373 = scmp.eq.s32.totalorder %s25, 0
    %p374 = por %p372, %p373
    %p375 = scmp.ne.s32.totalorder %s361, %s362
    %p376 = scmp.eq.s32.totalorder %s26, 5
    %p377 = por %p375, %p376
    %p379 = scmp.ne.s32.totalorder %s362, %s378
    %p380 = scmp.eq.s32.totalorder %s26, 0
    %p381 = por %p379, %p380
    %p382 = scmp.le.s32.totalorder 1, %s20
    %p383 = scmp.lt.s32.totalorder %s20, 7
    %p384 = pnand %p382, %p383
    %p385 = pneg %p384
    // Predicated region
    $region9: #{_ref_only_noised_unet_impl.1} parent=5 // pred_check
      _
    $region10: #{_ref_only_noised_unet_impl.1} parent=5 // pred_check_branch
      %387 = sbr.rel (%p384) target = $region12
    $region11: #{_ref_only_noised_unet_impl.1} parent=5 // pred_region
      %s388 = ssub.s32 %s20, 1
      // Predicated region
      $region13: #{_ref_only_noised_unet_impl.1} parent=11 // pred_check
        %p389 = pneg %p157
      $region14: #{_ref_only_noised_unet_impl.1} parent=11 // pred_check_branch
        %391 = sbr.rel (%p389) target = $region16
      $region15: #{_ref_only_noised_unet_impl.1} parent=11 // pred_region
        _
      $region16: #{_ref_only_noised_unet_impl.1} parent=11 // pred_fallthru
        _
      // Predicated region
      $region17: #{_ref_only_noised_unet_impl.1} parent=11 // pred_check
        %p392 = pneg %p178
      $region18: #{_ref_only_noised_unet_impl.1} parent=11 // pred_check_branch
        %394 = sbr.rel (%p392) target = $region20
      $region19: #{_ref_only_noised_unet_impl.1} parent=11 // pred_region
        _
      $region20: #{_ref_only_noised_unet_impl.1} parent=11 // pred_fallthru
        _
      // Predicated region
      $region21: #{_ref_only_noised_unet_impl.1} parent=11 // pred_check
        %p395 = pneg %p199
      $region22: #{_ref_only_noised_unet_impl.1} parent=11 // pred_check_branch
        %397 = sbr.rel (%p395) target = $region24
      $region23: #{_ref_only_noised_unet_impl.1} parent=11 // pred_region
        _
      $region24: #{_ref_only_noised_unet_impl.1} parent=11 // pred_fallthru
        _
      // Predicated region
      $region25: #{_ref_only_noised_unet_impl.1} parent=11 // pred_check
        %p398 = pneg %p220
      $region26: #{_ref_only_noised_unet_impl.1} parent=11 // pred_check_branch
        %400 = sbr.rel (%p398) target = $region28
      $region27: #{_ref_only_noised_unet_impl.1} parent=11 // pred_region
        _
      $region28: #{_ref_only_noised_unet_impl.1} parent=11 // pred_fallthru
        _
      // Predicated region
      $region29: #{_ref_only_noised_unet_impl.1} parent=11 // pred_check
        %p401 = pneg %p241
      $region30: #{_ref_only_noised_unet_impl.1} parent=11 // pred_check_branch
        %403 = sbr.rel (%p401) target = $region32
      $region31: #{_ref_only_noised_unet_impl.1} parent=11 // pred_region
        _
      $region32: #{_ref_only_noised_unet_impl.1} parent=11 // pred_fallthru
        _
      // Predicated region
      $region33: #{_ref_only_noised_unet_impl.1} parent=11 // pred_check
        %p404 = pneg %p262
      $region34: #{_ref_only_noised_unet_impl.1} parent=11 // pred_check_branch
        %406 = sbr.rel (%p404) target = $region36
      $region35: #{_ref_only_noised_unet_impl.1} parent=11 // pred_region
        _
      $region36: #{_ref_only_noised_unet_impl.1} parent=11 // pred_fallthru
        _
      // Predicated region
      $region37: #{_ref_only_noised_unet_impl.1} parent=11 // pred_check
        %p407 = pneg %p283
      $region38: #{_ref_only_noised_unet_impl.1} parent=11 // pred_check_branch
        %409 = sbr.rel (%p407) target = $region40
      $region39: #{_ref_only_noised_unet_impl.1} parent=11 // pred_region
        _
      $region40: #{_ref_only_noised_unet_impl.1} parent=11 // pred_fallthru
        _
      // Predicated region
      $region41: #{_ref_only_noised_unet_impl.1} parent=11 // pred_check
        %p410 = pneg %p304
      $region42: #{_ref_only_noised_unet_impl.1} parent=11 // pred_check_branch
        %412 = sbr.rel (%p410) target = $region44
      $region43: #{_ref_only_noised_unet_impl.1} parent=11 // pred_region
        _
      $region44: #{_ref_only_noised_unet_impl.1} parent=11 // pred_fallthru
        _
      // Predicated region
      $region45: #{_ref_only_noised_unet_impl.1} parent=11 // pred_check
        %p413 = pneg %p325
      $region46: #{_ref_only_noised_unet_impl.1} parent=11 // pred_check_branch
        %415 = sbr.rel (%p413) target = $region48
      $region47: #{_ref_only_noised_unet_impl.1} parent=11 // pred_region
        _
      $region48: #{_ref_only_noised_unet_impl.1} parent=11 // pred_fallthru
        _
      // Predicated region
      $region49: #{_ref_only_noised_unet_impl.1} parent=11 // pred_check
        %p416 = pneg %p346
      $region50: #{_ref_only_noised_unet_impl.1} parent=11 // pred_check_branch
        %418 = sbr.rel (%p416) target = $region52
      $region51: #{_ref_only_noised_unet_impl.1} parent=11 // pred_region
        _
      $region52: #{_ref_only_noised_unet_impl.1} parent=11 // pred_fallthru
        _
    $region12: #{_ref_only_noised_unet_impl.1} parent=5 // pred_fallthru
      _
    %p419 = scmp.lt.s32.totalorder %s20, 6
    // Predicated region
    $region53: #{_ref_only_noised_unet_impl.1} parent=5 // pred_check
      %p420 = pneg %p419
    $region54: #{_ref_only_noised_unet_impl.1} parent=5 // pred_check_branch
      %422 = sbr.rel (%p420) target = $region56
    $region55: #{_ref_only_noised_unet_impl.1} parent=5 // pred_region
      // Predicated region
      $region57: #{_ref_only_noised_unet_impl.1} parent=55 // pred_check
        %p423 = pneg %p52
      $region58: #{_ref_only_noised_unet_impl.1} parent=55 // pred_check_branch
        %425 = sbr.rel (%p423) target = $region60
      $region59: #{_ref_only_noised_unet_impl.1} parent=55 // pred_region
        %p426 = scmp.lt.s32.totalorder %s27, 1
        %s427 = scalar_select %p426, %s27, 1
        %s428 = smul.addr %s427, 18
        %s429 = smul.addr %s428, 4
        %s430 = scalar_lea.vmem %s0, %s429
      $region60: #{_ref_only_noised_unet_impl.1} parent=55 // pred_fallthru
        _
      // Predicated region
      $region61: #{_ref_only_noised_unet_impl.1} parent=55 // pred_check
        %p431 = pneg %p78
      $region62: #{_ref_only_noised_unet_impl.1} parent=55 // pred_check_branch
        %433 = sbr.rel (%p431) target = $region64
      $region63: #{_ref_only_noised_unet_impl.1} parent=55 // pred_region
        %p434 = scmp.lt.s32.totalorder %s27, 1
        %s435 = scalar_select %p434, %s27, 1
        %s436 = smul.addr %s435, 18
        %s437 = smul.addr %s436, 4
        %s438 = scalar_lea.vmem %s1, %s437
      $region64: #{_ref_only_noised_unet_impl.1} parent=55 // pred_fallthru
        _
      // Predicated region
      $region65: #{_ref_only_noised_unet_impl.1} parent=55 // pred_check
        %p439 = pneg %p104
      $region66: #{_ref_only_noised_unet_impl.1} parent=55 // pred_check_branch
        %441 = sbr.rel (%p439) target = $region68
      $region67: #{_ref_only_noised_unet_impl.1} parent=55 // pred_region
        %p442 = scmp.lt.s32.totalorder %s27, 1
        %s443 = scalar_select %p442, %s27, 1
        %s444 = smul.addr %s443, 4
        %s445 = scalar_lea.vmem %s2, %s444
      $region68: #{_ref_only_noised_unet_impl.1} parent=55 // pred_fallthru
        _
      // Predicated region
      $region69: #{_ref_only_noised_unet_impl.1} parent=55 // pred_check
        %p446 = pneg %p130
      $region70: #{_ref_only_noised_unet_impl.1} parent=55 // pred_check_branch
        %448 = sbr.rel (%p446) target = $region72
      $region71: #{_ref_only_noised_unet_impl.1} parent=55 // pred_region
        %p449 = scmp.lt.s32.totalorder %s27, 1
        %s450 = scalar_select %p449, %s27, 1
        %s451 = smul.addr %s450, 4
        %s452 = scalar_lea.vmem %s3, %s451
      $region72: #{_ref_only_noised_unet_impl.1} parent=55 // pred_fallthru
        _
    $region56: #{_ref_only_noised_unet_impl.1} parent=5 // pred_fallthru
      _
    %p453 = scmp.le.s32.totalorder 1, %s20
    %p454 = scmp.lt.s32.totalorder %s20, 7
    %p455 = pnand %p453, %p454
    %p456 = pneg %p455
    // Predicated region
    $region73: #{_ref_only_noised_unet_impl.1} parent=5 // pred_check
      _
    $region74: #{_ref_only_noised_unet_impl.1} parent=5 // pred_check_branch
      %458 = sbr.rel (%p455) target = $region76
    $region75: #{_ref_only_noised_unet_impl.1} parent=5 // pred_region
      %s459 = ssub.s32 %s20, 1
      %p460 = scmp.lt.s32.totalorder %s29, 1
      %s461 = scalar_select %p460, %s29, 1
      %s462 = smul.addr %s461, 18
      %s463 = smul.addr %s462, 4
      %s464 = scalar_lea.vmem %s0, %s463
      %p465 = pneg %p58
      %p466 = pneg %p55
      %p467 = scmp.lt.s32.totalorder %s29, 1
      %s468 = scalar_select %p467, %s29, 1
      %s469 = smul.addr %s468, 18
      %s470 = smul.addr %s469, 4
      %s471 = scalar_lea.vmem %s1, %s470
      %p472 = pneg %p84
      %p473 = pneg %p81
      %p474 = scmp.lt.s32.totalorder %s29, 1
      %s475 = scalar_select %p474, %s29, 1
      %s476 = smul.addr %s475, 4
      %s477 = scalar_lea.vmem %s2, %s476
      %p478 = pneg %p110
      %p479 = pneg %p107
      %p480 = scmp.lt.s32.totalorder %s29, 1
      %s481 = scalar_select %p480, %s29, 1
      %s482 = smul.addr %s481, 4
      %s483 = scalar_lea.vmem %s3, %s482
      %p484 = pneg %p136
      %p485 = pneg %p133
      %p486 = pneg %p157
      %p487 = pneg %p154
      %p488 = pneg %p178
      %p489 = pneg %p175
      %p490 = pneg %p199
      %p491 = pneg %p196
      %p492 = pneg %p220
      %p493 = pneg %p217
      %p494 = pneg %p241
      %p495 = pneg %p238
      %p496 = pneg %p262
      %p497 = pneg %p259
      %p498 = pneg %p283
      %p499 = pneg %p280
      %p500 = pneg %p304
      %p501 = pneg %p301
      %p502 = pneg %p325
      %p503 = pneg %p322
      %p504 = pneg %p346
      %p505 = pneg %p343
      %p506 = pneg %p374
      %p507 = pneg %p371
      %s508 = smul.u32 6, %s30
      %p509 = scmp.lt.s32.totalorder %s29, 1
      %s510 = scalar_select %p509, %s29, 1
      %p511 = scmp.lt.s32.totalorder %s508, 17
      %s512 = scalar_select %p511, %s508, 17
      %s513 = smul.addr %s510, 18
      %s514 = sadd.s32 %s512, %s513
      %s515 = smul.addr %s514, 4
      %s516 = scalar_lea.vmem %s14, %s515
      %p517 = scmp.lt.s32.totalorder %s29, 1
      %s518 = scalar_select %p517, %s29, 1
      %s519 = smul.addr %s518, 18
      %s520 = smul.addr %s519, 4
      %s521 = scalar_lea.vmem %s0, %s520
      %p522 = scmp.lt.s32.totalorder %s29, 1
      %s523 = scalar_select %p522, %s29, 1
      %s524 = smul.addr %s523, 18
      %s525 = smul.addr %s524, 4
      %s526 = scalar_lea.vmem %s1, %s525
      %p527 = scmp.lt.s32.totalorder %s29, 1
      %s528 = scalar_select %p527, %s29, 1
      %s529 = smul.addr %s528, 4
      %s530 = scalar_lea.vmem %s2, %s529
      %p531 = scmp.lt.s32.totalorder %s29, 1
      %s532 = scalar_select %p531, %s29, 1
      %s533 = smul.addr %s532, 4
      %s534 = scalar_lea.vmem %s3, %s533
      %s535 = smul.u32 6, %s30
      %p536 = scmp.lt.s32.totalorder %s29, 1
      %s537 = scalar_select %p536, %s29, 1
      %p538 = scmp.lt.s32.totalorder %s535, 17
      %s539 = scalar_select %p538, %s535, 17
      %s540 = smul.addr %s537, 18
      %s541 = sadd.s32 %s539, %s540
      %s542 = smul.addr %s541, 4
      %s543 = scalar_lea.vmem %s14, %s542
      %s544 = smul.u32 6, %s30
      %p546 = scmp.eq.s32.totalorder %s30, 0
      // Predicated region
      $region77: #{_ref_only_noised_unet_impl.1} parent=75 // pred_check
        %p547 = pneg %p546
      $region78: #{_ref_only_noised_unet_impl.1} parent=75 // pred_check_branch
        %549 = sbr.rel (%p547) target = $region80
      $region79: #{_ref_only_noised_unet_impl.1} parent=75 // pred_region
        %v550 = vld [vmem:[%s521] sm:$0xf]
        %v551 = vld [vmem:[%s521 + $0x4] sm:$0xf]
        %v552 = vld [vmem:[%s521 + $0x8] sm:$0xf]
        %v553 = vld [vmem:[%s521 + $0xc] sm:$0xf]
        %v554 = vld [vmem:[%s521 + $0x10] sm:$0xf]
        %v555 = vld [vmem:[%s521 + $0x14] sm:$0xf]
        %v556 = vld [vmem:[%s521 + $0x18] sm:$0xf]
        %v557 = vld [vmem:[%s521 + $0x1c] sm:$0xf]
        %v558 = vld [vmem:[%s521 + $0x20] sm:$0xf]
        %v559 = vld [vmem:[%s521 + $0x24] sm:$0xf]
        %v560 = vld [vmem:[%s521 + $0x28] sm:$0xf]
        %v561 = vld [vmem:[%s521 + $0x2c] sm:$0xf]
        %v562 = vld [vmem:[%s521 + $0x30] sm:$0xf]
        %v563 = vld [vmem:[%s521 + $0x34] sm:$0xf]
        %v564 = vld [vmem:[%s521 + $0x38] sm:$0xf]
        %v565 = vld [vmem:[%s521 + $0x3c] sm:$0xf]
        %v566 = vld [vmem:[%s521 + $0x40] sm:$0xf]
        %v567 = vld [vmem:[%s521 + $0x44] sm:$0xf]
        %v568 = vld [vmem:[%s4] sm:$0xf]
        %v569 = vld [vmem:[%s4 + $0x4] sm:$0xf]
        %v570 = vld [vmem:[%s4 + $0x8] sm:$0xf]
        %v571 = vld [vmem:[%s4 + $0xc] sm:$0xf]
        %v572 = vld [vmem:[%s4 + $0x10] sm:$0xf]
        %v573 = vld [vmem:[%s4 + $0x14] sm:$0xf]
        %v574 = vld [vmem:[%s4 + $0x18] sm:$0xf]
        %v575 = vld [vmem:[%s4 + $0x1c] sm:$0xf]
        %v576 = vld [vmem:[%s4 + $0x20] sm:$0xf]
        %v577 = vld [vmem:[%s4 + $0x24] sm:$0xf]
        %v578 = vld [vmem:[%s4 + $0x28] sm:$0xf]
        %v579 = vld [vmem:[%s4 + $0x2c] sm:$0xf]
        %v580 = vld [vmem:[%s4 + $0x30] sm:$0xf]
        %v581 = vld [vmem:[%s4 + $0x34] sm:$0xf]
        %v582 = vld [vmem:[%s4 + $0x38] sm:$0xf]
        %v583 = vld [vmem:[%s4 + $0x3c] sm:$0xf]
        %v584 = vld [vmem:[%s6] sm:$0x1]
        %v586 = vlaneseq
        %v587 = vshrl.u32 %v586, 7
        %v588 = vsub.s32 0, %v587
        %v589 = vrot.slane %v584, %v588
        %v609 = vunpack.c.l.b16 %v550
        %v610 = vunpack.c.l.b16 %v551
        %v611 = vunpack.c.l.b16 %v552
        %v612 = vunpack.c.l.b16 %v553
        %v613 = vunpack.c.l.b16 %v554
        %v614 = vunpack.c.l.b16 %v555
        %v615 = vunpack.c.l.b16 %v556
        %v616 = vunpack.c.l.b16 %v557
        %v617 = vunpack.c.l.b16 %v558
        %v618 = vunpack.c.l.b16 %v559
        %v619 = vunpack.c.l.b16 %v560
        %v620 = vunpack.c.l.b16 %v561
        %v621 = vunpack.c.l.b16 %v562
        %v622 = vunpack.c.l.b16 %v563
        %v623 = vunpack.c.l.b16 %v564
        %v624 = vunpack.c.l.b16 %v565
        %v625 = vunpack.c.l.b16 %v566
        %v626 = vunpack.c.l.b16 %v567
        %v627 = vpack.c.b16 %v610, %v609
        %v628 = vpack.c.b16 %v612, %v611
        %v629 = vpack.c.b16 %v614, %v613
        %v630 = vpack.c.b16 %v616, %v615
        %v631 = vpack.c.b16 %v618, %v617
        %v632 = vpack.c.b16 %v620, %v619
        %v633 = vpack.c.b16 %v622, %v621
        %v634 = vpack.c.b16 %v624, %v623
        %v635 = vpack.c.b16 %v626, %v625
        %v661 = vunpack.c.l.b16 %v568
        %v662 = vunpack.c.l.b16 %v569
        %v663 = vunpack.c.l.b16 %v570
        %v664 = vunpack.c.l.b16 %v571
        %v665 = vunpack.c.l.b16 %v572
        %v666 = vunpack.c.l.b16 %v573
        %v667 = vunpack.c.l.b16 %v574
        %v668 = vunpack.c.l.b16 %v575
        %v669 = vunpack.c.l.b16 %v576
        %v670 = vunpack.c.l.b16 %v577
        %v671 = vunpack.c.l.b16 %v578
        %v672 = vunpack.c.l.b16 %v579
        %v673 = vunpack.c.l.b16 %v580
        %v674 = vunpack.c.l.b16 %v581
        %v675 = vunpack.c.l.b16 %v582
        %v676 = vunpack.c.l.b16 %v583
        %v677 = vpack.c.b16 %v662, %v661
        %v678 = vpack.c.b16 %v664, %v663
        %v679 = vpack.c.b16 %v666, %v665
        %v680 = vpack.c.b16 %v668, %v667
        %v681 = vpack.c.b16 %v670, %v669
        %v682 = vpack.c.b16 %v672, %v671
        %v683 = vpack.c.b16 %v674, %v673
        %v684 = vpack.c.b16 %v676, %v675
        %693 = vmatprep.subr.bf16.mxu0 0
        %694 = vmatpush1.bf16.msra.mxu0 %v677
        %695 = vmatprep.subr.bf16.mxu0 0
        %696 = vmatpush1.bf16.msra.mxu0 %v678
        %697 = vmatprep.subr.bf16.mxu0 0
        %698 = vmatpush1.bf16.msra.mxu0 %v679
        %699 = vmatprep.subr.bf16.mxu0 0
        %700 = vmatpush1.bf16.msra.mxu0 %v680
        %701 = vmatprep.subr.bf16.mxu0 0
        %702 = vmatpush1.bf16.msra.mxu0 %v681
        %703 = vmatprep.subr.bf16.mxu0 0
        %704 = vmatpush1.bf16.msra.mxu0 %v682
        %705 = vmatprep.subr.bf16.mxu0 0
        %706 = vmatpush1.bf16.msra.mxu0 %v683
        %707 = vmatprep.subr.bf16.mxu0 0
        %708 = vmatpush1.bf16.msra.mxu0 %v684
        %709 = vmatprep.subr.bf16.mxu0 0
        %710 = vmatpush1.bf16.msra.mxu0 0
        %711 = vmatprep.subr.bf16.mxu0 0
        %712 = vmatpush1.bf16.msra.mxu0 0
        %713 = vmatprep.subr.bf16.mxu0 0
        %714 = vmatpush1.bf16.msra.mxu0 0
        %715 = vmatprep.subr.bf16.mxu0 0
        %716 = vmatpush1.bf16.msra.mxu0 0
        %717 = vmatprep.subr.bf16.mxu0 0
        %718 = vmatpush1.bf16.msra.mxu0 0
        %719 = vmatprep.subr.bf16.mxu0 0
        %720 = vmatpush1.bf16.msra.mxu0 0
        %721 = vmatprep.subr.bf16.mxu0 0
        %722 = vmatpush1.bf16.msra.mxu0 0
        %723 = vmatprep.subr.bf16.mxu0 0
        %724 = vmatpush1.bf16.msra.mxu0 0
        %725 = vmatprep.mubr.bf16.mxu0 0
        %726 = vmatmul.mubr.bf16.gmra.mrb[0].mxu0 %v627
        %v727 = vpop.f32.mrb[0].mxu0
        %v728 = vadd.f32 %v589, %v727
        %v729 = vpop.f32.mrb[0].mxu0
        %v730 = vpop.f32.mrb[0].mxu0
        %v731 = vadd.f32 %v589, %v730
        %v732 = vpop.f32.mrb[0].mxu0
        %733 = vmatprep.mubr.bf16.mxu0 0
        %734 = vmatmul.mubr.bf16.gmra.mrb[0].mxu0 %v628
        %v735 = vpop.f32.mrb[0].mxu0
        %v736 = vadd.f32 %v589, %v735
        %v737 = vpop.f32.mrb[0].mxu0
        %v738 = vpop.f32.mrb[0].mxu0
        %v739 = vadd.f32 %v589, %v738
        %v740 = vpop.f32.mrb[0].mxu0
        %741 = vmatprep.mubr.bf16.mxu0 0
        %742 = vmatmul.mubr.bf16.gmra.mrb[0].mxu0 %v629
        %v743 = vpop.f32.mrb[0].mxu0
        %v744 = vadd.f32 %v589, %v743
        %v745 = vpop.f32.mrb[0].mxu0
        %v746 = vpop.f32.mrb[0].mxu0
        %v747 = vadd.f32 %v589, %v746
        %v748 = vpop.f32.mrb[0].mxu0
        %749 = vmatprep.mubr.bf16.mxu0 0
        %750 = vmatmul.mubr.bf16.gmra.mrb[0].mxu0 %v630
        %v751 = vpop.f32.mrb[0].mxu0
        %v752 = vadd.f32 %v589, %v751
        %v753 = vpop.f32.mrb[0].mxu0
        %v754 = vpop.f32.mrb[0].mxu0
        %v755 = vadd.f32 %v589, %v754
        %v756 = vpop.f32.mrb[0].mxu0
        %757 = vmatprep.mubr.bf16.mxu0 0
        %758 = vmatmul.mubr.bf16.gmra.mrb[0].mxu0 %v631
        %v759 = vpop.f32.mrb[0].mxu0
        %v760 = vadd.f32 %v589, %v759
        %v761 = vpop.f32.mrb[0].mxu0
        %v762 = vpop.f32.mrb[0].mxu0
        %v763 = vadd.f32 %v589, %v762
        %v764 = vpop.f32.mrb[0].mxu0
        %765 = vmatprep.mubr.bf16.mxu0 0
        %766 = vmatmul.mubr.bf16.gmra.mrb[0].mxu0 %v632
        %v767 = vpop.f32.mrb[0].mxu0
        %v768 = vadd.f32 %v589, %v767
        %v769 = vpop.f32.mrb[0].mxu0
        %v770 = vpop.f32.mrb[0].mxu0
        %v771 = vadd.f32 %v589, %v770
        %v772 = vpop.f32.mrb[0].mxu0
        %773 = vmatprep.mubr.bf16.mxu0 0
        %774 = vmatmul.mubr.bf16.gmra.mrb[0].mxu0 %v633
        %v775 = vpop.f32.mrb[0].mxu0
        %v776 = vadd.f32 %v589, %v775
        %v777 = vpop.f32.mrb[0].mxu0
        %v778 = vpop.f32.mrb[0].mxu0
        %v779 = vadd.f32 %v589, %v778
        %v780 = vpop.f32.mrb[0].mxu0
        %781 = vmatprep.mubr.bf16.mxu0 0
        %782 = vmatmul.mubr.bf16.gmra.mrb[0].mxu0 %v634
        %v783 = vpop.f32.mrb[0].mxu0
        %v784 = vadd.f32 %v589, %v783
        %v785 = vpop.f32.mrb[0].mxu0
        %v786 = vpop.f32.mrb[0].mxu0
        %v787 = vadd.f32 %v589, %v786
        %v788 = vpop.f32.mrb[0].mxu0
        %789 = vmatprep.mubr.bf16.mxu0 0
        %790 = vmatmul.mubr.bf16.gmra.mrb[0].mxu0 %v635
        %v791 = vpop.f32.mrb[0].mxu0
        %v792 = vadd.f32 %v589, %v791
        %v793 = vpop.f32.mrb[0].mxu0
        %v794 = vpop.f32.mrb[0].mxu0
        %v795 = vadd.f32 %v589, %v794
        %v796 = vpop.f32.mrb[0].mxu0
        %797 = vdwg.mxu0
        %798 = vst [vmem:[#allocation2] sm:$0xff] %v728
        %799 = vst [vmem:[#allocation2 + $0x8] sm:$0xff] %v731
        %800 = vst [vmem:[#allocation2 + $0x10] sm:$0xff] %v736
        %801 = vst [vmem:[#allocation2 + $0x18] sm:$0xff] %v739
        %802 = vst [vmem:[#allocation2 + $0x20] sm:$0xff] %v744
        %803 = vst [vmem:[#allocation2 + $0x28] sm:$0xff] %v747
        %804 = vst [vmem:[#allocation2 + $0x30] sm:$0xff] %v752
        %805 = vst [vmem:[#allocation2 + $0x38] sm:$0xff] %v755
        %806 = vst [vmem:[#allocation2 + $0x40] sm:$0xff] %v760
        %807 = vst [vmem:[#allocation2 + $0x48] sm:$0xff] %v763
        %808 = vst [vmem:[#allocation2 + $0x50] sm:$0xff] %v768
        %809 = vst [vmem:[#allocation2 + $0x58] sm:$0xff] %v771
        %810 = vst [vmem:[#allocation2 + $0x60] sm:$0xff] %v776
        %811 = vst [vmem:[#allocation2 + $0x68] sm:$0xff] %v779
        %812 = vst [vmem:[#allocation2 + $0x70] sm:$0xff] %v784
        %813 = vst [vmem:[#allocation2 + $0x78] sm:$0xff] %v787
        %814 = vst [vmem:[#allocation2 + $0x80] sm:$0xff] %v792
        %815 = vst [vmem:[#allocation2 + $0x88] sm:$0xff] %v795
        %v816 = vpack.c.bf16 %v731, %v728
        %v817 = vpack.c.bf16 %v739, %v736
        %v818 = vpack.c.bf16 %v747, %v744
        %v819 = vpack.c.bf16 %v755, %v752
        %v820 = vpack.c.bf16 %v763, %v760
        %v821 = vpack.c.bf16 %v771, %v768
        %v822 = vpack.c.bf16 %v779, %v776
        %v823 = vpack.c.bf16 %v787, %v784
        %v824 = vpack.c.bf16 %v795, %v792
        %v825 = vld [vmem:[%s8] sm:$0xff]
        %v826 = vld [vmem:[%s8 + $0x8] sm:$0xff]
        %v827 = vld [vmem:[%s8 + $0x10] sm:$0xff]
        %v828 = vld [vmem:[%s8 + $0x18] sm:$0xff]
        %v829 = vld [vmem:[%s8 + $0x20] sm:$0xff]
        %v830 = vld [vmem:[%s8 + $0x28] sm:$0xff]
        %v831 = vld [vmem:[%s8 + $0x30] sm:$0xff]
        %v832 = vld [vmem:[%s8 + $0x38] sm:$0xff]
        %v833 = vld [vmem:[%s8 + $0x40] sm:$0xff]
        %v834 = vld [vmem:[%s8 + $0x48] sm:$0xff]
        %v835 = vld [vmem:[%s8 + $0x50] sm:$0xff]
        %v836 = vld [vmem:[%s8 + $0x58] sm:$0xff]
        %v837 = vld [vmem:[%s8 + $0x60] sm:$0xff]
        %v838 = vld [vmem:[%s8 + $0x68] sm:$0xff]
        %v839 = vld [vmem:[%s8 + $0x70] sm:$0xff]
        %v840 = vld [vmem:[%s8 + $0x78] sm:$0xff]
        %v857 = vunpack.c.l.b16 %v825
        %v858 = vunpack.c.h.b16 %v825
        %v859 = vunpack.c.l.b16 %v826
        %v860 = vunpack.c.h.b16 %v826
        %v861 = vunpack.c.l.b16 %v827
        %v862 = vunpack.c.h.b16 %v827
        %v863 = vunpack.c.l.b16 %v828
        %v864 = vunpack.c.h.b16 %v828
        %v865 = vunpack.c.l.b16 %v829
        %v866 = vunpack.c.h.b16 %v829
        %v867 = vunpack.c.l.b16 %v830
        %v868 = vunpack.c.h.b16 %v830
        %v869 = vunpack.c.l.b16 %v831
        %v870 = vunpack.c.h.b16 %v831
        %v871 = vunpack.c.l.b16 %v832
        %v872 = vunpack.c.h.b16 %v832
        %v873 = vunpack.c.l.b16 %v833
        %v874 = vunpack.c.h.b16 %v833
        %v875 = vunpack.c.l.b16 %v834
        %v876 = vunpack.c.h.b16 %v834
        %v877 = vunpack.c.l.b16 %v835
        %v878 = vunpack.c.h.b16 %v835
        %v879 = vunpack.c.l.b16 %v836
        %v880 = vunpack.c.h.b16 %v836
        %v881 = vunpack.c.l.b16 %v837
        %v882 = vunpack.c.h.b16 %v837
        %v883 = vunpack.c.l.b16 %v838
        %v884 = vunpack.c.h.b16 %v838
        %v885 = vunpack.c.l.b16 %v839
        %v886 = vunpack.c.h.b16 %v839
        %v887 = vunpack.c.l.b16 %v840
        %v888 = vunpack.c.h.b16 %v840
        %v889 = vpack.c.b16 %v859, %v857
        %v890 = vpack.c.b16 %v860, %v858
        %v891 = vpack.c.b16 %v863, %v861
        %v892 = vpack.c.b16 %v864, %v862
        %v893 = vpack.c.b16 %v867, %v865
        %v894 = vpack.c.b16 %v868, %v866
        %v895 = vpack.c.b16 %v871, %v869
        %v896 = vpack.c.b16 %v872, %v870
        %v897 = vpack.c.b16 %v875, %v873
        %v898 = vpack.c.b16 %v876, %v874
        %v899 = vpack.c.b16 %v879, %v877
        %v900 = vpack.c.b16 %v880, %v878
        %v901 = vpack.c.b16 %v883, %v881
        %v902 = vpack.c.b16 %v884, %v882
        %v903 = vpack.c.b16 %v887, %v885
        %v904 = vpack.c.b16 %v888, %v886
        %921 = vmatprep.subr.bf16.mxu0 %v890
        %922 = vmatpush1.bf16.msra.mxu0 %v889
        %923 = vmatprep.subr.bf16.mxu0 %v892
        %924 = vmatpush1.bf16.msra.mxu0 %v891
        %925 = vmatprep.subr.bf16.mxu0 %v894
        %926 = vmatpush1.bf16.msra.mxu0 %v893
        %927 = vmatprep.subr.bf16.mxu0 %v896
        %928 = vmatpush1.bf16.msra.mxu0 %v895
        %929 = vmatprep.subr.bf16.mxu0 %v898
        %930 = vmatpush1.bf16.msra.mxu0 %v897
        %931 = vmatprep.subr.bf16.mxu0 %v900
        %932 = vmatpush1.bf16.msra.mxu0 %v899
        %933 = vmatprep.subr.bf16.mxu0 %v902
        %934 = vmatpush1.bf16.msra.mxu0 %v901
        %935 = vmatprep.subr.bf16.mxu0 %v904
        %936 = vmatpush1.bf16.msra.mxu0 %v903
        %937 = vmatprep.subr.bf16.mxu0 0
        %938 = vmatpush1.bf16.msra.mxu0 0
        %939 = vmatprep.subr.bf16.mxu0 0
        %940 = vmatpush1.bf16.msra.mxu0 0
        %941 = vmatprep.subr.bf16.mxu0 0
        %942 = vmatpush1.bf16.msra.mxu0 0
        %943 = vmatprep.subr.bf16.mxu0 0
        %944 = vmatpush1.bf16.msra.mxu0 0
        %945 = vmatprep.subr.bf16.mxu0 0
        %946 = vmatpush1.bf16.msra.mxu0 0
        %947 = vmatprep.subr.bf16.mxu0 0
        %948 = vmatpush1.bf16.msra.mxu0 0
        %949 = vmatprep.subr.bf16.mxu0 0
        %950 = vmatpush1.bf16.msra.mxu0 0
        %951 = vmatprep.subr.bf16.mxu0 0
        %952 = vmatpush1.bf16.msra.mxu0 0
        %953 = vmatprep.mubr.bf16.mxu0 0
        %954 = vmatmul.mubr.bf16.gmra.mrb[0].mxu0 %v816
        %v955 = vpop.f32.mrb[0].mxu0
        %v956 = vadd.f32 0.0, %v955
        %v957 = vpop.f32.mrb[0].mxu0
        %v958 = vadd.f32 0.0, %v957
        %v959 = vpop.f32.mrb[0].mxu0
        %v960 = vadd.f32 0.0, %v959
        %v961 = vpop.f32.mrb[0].mxu0
        %v962 = vadd.f32 0.0, %v961
        %963 = vmatprep.mubr.bf16.mxu0 0
        %964 = vmatmul.mubr.bf16.gmra.mrb[0].mxu0 %v817
        %v965 = vpop.f32.mrb[0].mxu0
        %v966 = vadd.f32 0.0, %v965
        %v967 = vpop.f32.mrb[0].mxu0
        %v968 = vadd.f32 0.0, %v967
        %v969 = vpop.f32.mrb[0].mxu0
        %v970 = vadd.f32 0.0, %v969
        %v971 = vpop.f32.mrb[0].mxu0
        %v972 = vadd.f32 0.0, %v971
        %973 = vmatprep.mubr.bf16.mxu0 0
        %974 = vmatmul.mubr.bf16.gmra.mrb[0].mxu0 %v818
        %v975 = vpop.f32.mrb[0].mxu0
        %v976 = vadd.f32 0.0, %v975
        %v977 = vpop.f32.mrb[0].mxu0
        %v978 = vadd.f32 0.0, %v977
        %v979 = vpop.f32.mrb[0].mxu0
        %v980 = vadd.f32 0.0, %v979
        %v981 = vpop.f32.mrb[0].mxu0
        %v982 = vadd.f32 0.0, %v981
        %983 = vmatprep.mubr.bf16.mxu0 0
        %984 = vmatmul.mubr.bf16.gmra.mrb[0].mxu0 %v819
        %v985 = vpop.f32.mrb[0].mxu0
        %v986 = vadd.f32 0.0, %v985
        %v987 = vpop.f32.mrb[0].mxu0
        %v988 = vadd.f32 0.0, %v987
        %v989 = vpop.f32.mrb[0].mxu0
        %v990 = vadd.f32 0.0, %v989
        %v991 = vpop.f32.mrb[0].mxu0
        %v992 = vadd.f32 0.0, %v991
        %993 = vmatprep.mubr.bf16.mxu0 0
        %994 = vmatmul.mubr.bf16.gmra.mrb[0].mxu0 %v820
        %v995 = vpop.f32.mrb[0].mxu0
        %v996 = vadd.f32 0.0, %v995
        %v997 = vpop.f32.mrb[0].mxu0
        %v998 = vadd.f32 0.0, %v997
        %v999 = vpop.f32.mrb[0].mxu0
        %v1000 = vadd.f32 0.0, %v999
        %v1001 = vpop.f32.mrb[0].mxu0
        %v1002 = vadd.f32 0.0, %v1001
        %1003 = vmatprep.mubr.bf16.mxu0 0
        %1004 = vmatmul.mubr.bf16.gmra.mrb[0].mxu0 %v821
        %v1005 = vpop.f32.mrb[0].mxu0
        %v1006 = vadd.f32 0.0, %v1005
        %v1007 = vpop.f32.mrb[0].mxu0
        %v1008 = vadd.f32 0.0, %v1007
        %v1009 = vpop.f32.mrb[0].mxu0
        %v1010 = vadd.f32 0.0, %v1009
        %v1011 = vpop.f32.mrb[0].mxu0
        %v1012 = vadd.f32 0.0, %v1011
        %1013 = vmatprep.mubr.bf16.mxu0 0
        %1014 = vmatmul.mubr.bf16.gmra.mrb[0].mxu0 %v822
        %v1015 = vpop.f32.mrb[0].mxu0
        %v1016 = vadd.f32 0.0, %v1015
        %v1017 = vpop.f32.mrb[0].mxu0
        %v1018 = vadd.f32 0.0, %v1017
        %v1019 = vpop.f32.mrb[0].mxu0
        %v1020 = vadd.f32 0.0, %v1019
        %v1021 = vpop.f32.mrb[0].mxu0
        %v1022 = vadd.f32 0.0, %v1021
        %1023 = vmatprep.mubr.bf16.mxu0 0
        %1024 = vmatmul.mubr.bf16.gmra.mrb[0].mxu0 %v823
        %v1025 = vpop.f32.mrb[0].mxu0
        %v1026 = vadd.f32 0.0, %v1025
        %v1027 = vpop.f32.mrb[0].mxu0
        %v1028 = vadd.f32 0.0, %v1027
        %v1029 = vpop.f32.mrb[0].mxu0
        %v1030 = vadd.f32 0.0, %v1029
        %v1031 = vpop.f32.mrb[0].mxu0
        %v1032 = vadd.f32 0.0, %v1031
        %1033 = vmatprep.mubr.bf16.mxu0 0
        %1034 = vmatmul.mubr.bf16.gmra.mrb[0].mxu0 %v824
        %v1035 = vpop.f32.mrb[0].mxu0
        %v1036 = vadd.f32 0.0, %v1035
        %v1037 = vpop.f32.mrb[0].mxu0
        %v1038 = vadd.f32 0.0, %v1037
        %v1039 = vpop.f32.mrb[0].mxu0
        %v1040 = vadd.f32 0.0, %v1039
        %v1041 = vpop.f32.mrb[0].mxu0
        %v1042 = vadd.f32 0.0, %v1041
        %1043 = vdwg.mxu0
        %v1044 = vpack.c.bf16 %v960, %v956
        %v1045 = vpack.c.bf16 %v970, %v966
        %v1046 = vpack.c.bf16 %v980, %v976
        %v1047 = vpack.c.bf16 %v990, %v986
        %v1048 = vpack.c.bf16 %v1000, %v996
        %v1049 = vpack.c.bf16 %v1010, %v1006
        %v1050 = vpack.c.bf16 %v1020, %v1016
        %v1051 = vpack.c.bf16 %v1030, %v1026
        %v1052 = vpack.c.bf16 %v1040, %v1036
        %1053 = vst [vmem:[#allocation3] sm:$0xff] %v1044
        %1054 = vst [vmem:[#allocation3 + $0x8] sm:$0xff] %v1045
        %1055 = vst [vmem:[#allocation3 + $0x10] sm:$0xff] %v1046
        %1056 = vst [vmem:[#allocation3 + $0x18] sm:$0xff] %v1047
        %1057 = vst [vmem:[#allocation3 + $0x20] sm:$0xff] %v1048
        %1058 = vst [vmem:[#allocation3 + $0x28] sm:$0xff] %v1049
        %1059 = vst [vmem:[#allocation3 + $0x30] sm:$0xff] %v1050
        %1060 = vst [vmem:[#allocation3 + $0x38] sm:$0xff] %v1051
        %1061 = vst [vmem:[#allocation3 + $0x40] sm:$0xff] %v1052
        %v1062 = vpack.c.bf16 %v962, %v958
        %v1063 = vpack.c.bf16 %v972, %v968
        %v1064 = vpack.c.bf16 %v982, %v978
        %v1065 = vpack.c.bf16 %v992, %v988
        %v1066 = vpack.c.bf16 %v1002, %v998
        %v1067 = vpack.c.bf16 %v1012, %v1008
        %v1068 = vpack.c.bf16 %v1022, %v1018
        %v1069 = vpack.c.bf16 %v1032, %v1028
        %v1070 = vpack.c.bf16 %v1042, %v1038
        %1071 = vst [vmem:[#allocation4] sm:$0xff] %v1062
        %1072 = vst [vmem:[#allocation4 + $0x8] sm:$0xff] %v1063
        %1073 = vst [vmem:[#allocation4 + $0x10] sm:$0xff] %v1064
        %1074 = vst [vmem:[#allocation4 + $0x18] sm:$0xff] %v1065
        %1075 = vst [vmem:[#allocation4 + $0x20] sm:$0xff] %v1066
        %1076 = vst [vmem:[#allocation4 + $0x28] sm:$0xff] %v1067
        %1077 = vst [vmem:[#allocation4 + $0x30] sm:$0xff] %v1068
        %1078 = vst [vmem:[#allocation4 + $0x38] sm:$0xff] %v1069
        %1079 = vst [vmem:[#allocation4 + $0x40] sm:$0xff] %v1070
        %v1080 = vld [vmem:[%s526] sm:$0xf]
        %v1081 = vld [vmem:[%s526 + $0x4] sm:$0xf]
        %v1082 = vld [vmem:[%s526 + $0x8] sm:$0xf]
        %v1083 = vld [vmem:[%s526 + $0xc] sm:$0xf]
        %v1084 = vld [vmem:[%s526 + $0x10] sm:$0xf]
        %v1085 = vld [vmem:[%s526 + $0x14] sm:$0xf]
        %v1086 = vld [vmem:[%s526 + $0x18] sm:$0xf]
        %v1087 = vld [vmem:[%s526 + $0x1c] sm:$0xf]
        %v1088 = vld [vmem:[%s526 + $0x20] sm:$0xf]
        %v1089 = vld [vmem:[%s526 + $0x24] sm:$0xf]
        %v1090 = vld [vmem:[%s526 + $0x28] sm:$0xf]
        %v1091 = vld [vmem:[%s526 + $0x2c] sm:$0xf]
        %v1092 = vld [vmem:[%s526 + $0x30] sm:$0xf]
        %v1093 = vld [vmem:[%s526 + $0x34] sm:$0xf]
        %v1094 = vld [vmem:[%s526 + $0x38] sm:$0xf]
        %v1095 = vld [vmem:[%s526 + $0x3c] sm:$0xf]
        %v1096 = vld [vmem:[%s526 + $0x40] sm:$0xf]
        %v1097 = vld [vmem:[%s526 + $0x44] sm:$0xf]
        %v1098 = vld [vmem:[%s5] sm:$0xf]
        %v1099 = vld [vmem:[%s5 + $0x4] sm:$0xf]
        %v1100 = vld [vmem:[%s5 + $0x8] sm:$0xf]
        %v1101 = vld [vmem:[%s5 + $0xc] sm:$0xf]
        %v1102 = vld [vmem:[%s5 + $0x10] sm:$0xf]
        %v1103 = vld [vmem:[%s5 + $0x14] sm:$0xf]
        %v1104 = vld [vmem:[%s5 + $0x18] sm:$0xf]
        %v1105 = vld [vmem:[%s5 + $0x1c] sm:$0xf]
        %v1106 = vld [vmem:[%s5 + $0x20] sm:$0xf]
        %v1107 = vld [vmem:[%s5 + $0x24] sm:$0xf]
        %v1108 = vld [vmem:[%s5 + $0x28] sm:$0xf]
        %v1109 = vld [vmem:[%s5 + $0x2c] sm:$0xf]
        %v1110 = vld [vmem:[%s5 + $0x30] sm:$0xf]
        %v1111 = vld [vmem:[%s5 + $0x34] sm:$0xf]
        %v1112 = vld [vmem:[%s5 + $0x38] sm:$0xf]
        %v1113 = vld [vmem:[%s5 + $0x3c] sm:$0xf]
        %v1114 = vld [vmem:[%s6] sm:$0x1]
        %v1116 = vlaneseq
        %v1117 = vshrl.u32 %v1116, 7
        %v1118 = vsub.s32 0, %v1117
        %v1119 = vrot.slane %v1114, %v1118
        %v1139 = vunpack.c.l.b16 %v1080
        %v1140 = vunpack.c.l.b16 %v1081
        %v1141 = vunpack.c.l.b16 %v1082
        %v1142 = vunpack.c.l.b16 %v1083
        %v1143 = vunpack.c.l.b16 %v1084
        %v1144 = vunpack.c.l.b16 %v1085
        %v1145 = vunpack.c.l.b16 %v1086
        %v1146 = vunpack.c.l.b16 %v1087
        %v1147 = vunpack.c.l.b16 %v1088
        %v1148 = vunpack.c.l.b16 %v1089
        %v1149 = vunpack.c.l.b16 %v1090
        %v1150 = vunpack.c.l.b16 %v1091
        %v1151 = vunpack.c.l.b16 %v1092
        %v1152 = vunpack.c.l.b16 %v1093
        %v1153 = vunpack.c.l.b16 %v1094
        %v1154 = vunpack.c.l.b16 %v1095
        %v1155 = vunpack.c.l.b16 %v1096
        %v1156 = vunpack.c.l.b16 %v1097
        %v1157 = vpack.c.b16 %v1140, %v1139
        %v1158 = vpack.c.b16 %v1142, %v1141
        %v1159 = vpack.c.b16 %v1144, %v1143
        %v1160 = vpack.c.b16 %v1146, %v1145
        %v1161 = vpack.c.b16 %v1148, %v1147
        %v1162 = vpack.c.b16 %v1150, %v1149
        %v1163 = vpack.c.b16 %v1152, %v1151
        %v1164 = vpack.c.b16 %v1154, %v1153
        %v1165 = vpack.c.b16 %v1156, %v1155
        %v1191 = vunpack.c.l.b16 %v1098
        %v1192 = vunpack.c.l.b16 %v1099
        %v1193 = vunpack.c.l.b16 %v1100
        %v1194 = vunpack.c.l.b16 %v1101
        %v1195 = vunpack.c.l.b16 %v1102
        %v1196 = vunpack.c.l.b16 %v1103
        %v1197 = vunpack.c.l.b16 %v1104
        %v1198 = vunpack.c.l.b16 %v1105
        %v1199 = vunpack.c.l.b16 %v1106
        %v1200 = vunpack.c.l.b16 %v1107
        %v1201 = vunpack.c.l.b16 %v1108
        %v1202 = vunpack.c.l.b16 %v1109
        %v1203 = vunpack.c.l.b16 %v1110
        %v1204 = vunpack.c.l.b16 %v1111
        %v1205 = vunpack.c.l.b16 %v1112
        %v1206 = vunpack.c.l.b16 %v1113
        %v1207 = vpack.c.b16 %v1192, %v1191
        %v1208 = vpack.c.b16 %v1194, %v1193
        %v1209 = vpack.c.b16 %v1196, %v1195
        %v1210 = vpack.c.b16 %v1198, %v1197
        %v1211 = vpack.c.b16 %v1200, %v1199
        %v1212 = vpack.c.b16 %v1202, %v1201
        %v1213 = vpack.c.b16 %v1204, %v1203
        %v1214 = vpack.c.b16 %v1206, %v1205
        %1223 = vmatprep.subr.bf16.mxu0 0
        %1224 = vmatpush1.bf16.msra.mxu0 %v1207
        %1225 = vmatprep.subr.bf16.mxu0 0
        %1226 = vmatpush1.bf16.msra.mxu0 %v1208
        %1227 = vmatprep.subr.bf16.mxu0 0
        %1228 = vmatpush1.bf16.msra.mxu0 %v1209
        %1229 = vmatprep.subr.bf16.mxu0 0
        %1230 = vmatpush1.bf16.msra.mxu0 %v1210
        %1231 = vmatprep.subr.bf16.mxu0 0
        %1232 = vmatpush1.bf16.msra.mxu0 %v1211
        %1233 = vmatprep.subr.bf16.mxu0 0
        %1234 = vmatpush1.bf16.msra.mxu0 %v1212
        %1235 = vmatprep.subr.bf16.mxu0 0
        %1236 = vmatpush1.bf16.msra.mxu0 %v1213
        %1237 = vmatprep.subr.bf16.mxu0 0
        %1238 = vmatpush1.bf16.msra.mxu0 %v1214
        %1239 = vmatprep.subr.bf16.mxu0 0
        %1240 = vmatpush1.bf16.msra.mxu0 0
        %1241 = vmatprep.subr.bf16.mxu0 0
        %1242 = vmatpush1.bf16.msra.mxu0 0
        %1243 = vmatprep.subr.bf16.mxu0 0
        %1244 = vmatpush1.bf16.msra.mxu0 0
        %1245 = vmatprep.subr.bf16.mxu0 0
        %1246 = vmatpush1.bf16.msra.mxu0 0
        %1247 = vmatprep.subr.bf16.mxu0 0
        %1248 = vmatpush1.bf16.msra.mxu0 0
        %1249 = vmatprep.subr.bf16.mxu0 0
        %1250 = vmatpush1.bf16.msra.mxu0 0
        %1251 = vmatprep.subr.bf16.mxu0 0
        %1252 = vmatpush1.bf16.msra.mxu0 0
        %1253 = vmatprep.subr.bf16.mxu0 0
        %1254 = vmatpush1.bf16.msra.mxu0 0
        %1255 = vmatprep.mubr.bf16.mxu0 0
        %1256 = vmatmul.mubr.bf16.gmra.mrb[0].mxu0 %v1157
        %v1257 = vpop.f32.mrb[0].mxu0
        %v1258 = vadd.f32 %v1119, %v1257
        %v1259 = vpop.f32.mrb[0].mxu0
        %v1260 = vpop.f32.mrb[0].mxu0
        %v1261 = vadd.f32 %v1119, %v1260
        %v1262 = vpop.f32.mrb[0].mxu0
        %1263 = vmatprep.mubr.bf16.mxu0 0
        %1264 = vmatmul.mubr.bf16.gmra.mrb[0].mxu0 %v1158
        %v1265 = vpop.f32.mrb[0].mxu0
        %v1266 = vadd.f32 %v1119, %v1265
        %v1267 = vpop.f32.mrb[0].mxu0
        %v1268 = vpop.f32.mrb[0].mxu0
        %v1269 = vadd.f32 %v1119, %v1268
        %v1270 = vpop.f32.mrb[0].mxu0
        %1271 = vmatprep.mubr.bf16.mxu0 0
        %1272 = vmatmul.mubr.bf16.gmra.mrb[0].mxu0 %v1159
        %v1273 = vpop.f32.mrb[0].mxu0
        %v1274 = vadd.f32 %v1119, %v1273
        %v1275 = vpop.f32.mrb[0].mxu0
        %v1276 = vpop.f32.mrb[0].mxu0
        %v1277 = vadd.f32 %v1119, %v1276
        %v1278 = vpop.f32.mrb[0].mxu0
        %1279 = vmatprep.mubr.bf16.mxu0 0
        %1280 = vmatmul.mubr.bf16.gmra.mrb[0].mxu0 %v1160
        %v1281 = vpop.f32.mrb[0].mxu0
        %v1282 = vadd.f32 %v1119, %v1281
        %v1283 = vpop.f32.mrb[0].mxu0
        %v1284 = vpop.f32.mrb[0].mxu0
        %v1285 = vadd.f32 %v1119, %v1284
        %v1286 = vpop.f32.mrb[0].mxu0
        %1287 = vmatprep.mubr.bf16.mxu0 0
        %1288 = vmatmul.mubr.bf16.gmra.mrb[0].mxu0 %v1161
        %v1289 = vpop.f32.mrb[0].mxu0
        %v1290 = vadd.f32 %v1119, %v1289
        %v1291 = vpop.f32.mrb[0].mxu0
        %v1292 = vpop.f32.mrb[0].mxu0
        %v1293 = vadd.f32 %v1119, %v1292
        %v1294 = vpop.f32.mrb[0].mxu0
        %1295 = vmatprep.mubr.bf16.mxu0 0
        %1296 = vmatmul.mubr.bf16.gmra.mrb[0].mxu0 %v1162
        %v1297 = vpop.f32.mrb[0].mxu0
        %v1298 = vadd.f32 %v1119, %v1297
        %v1299 = vpop.f32.mrb[0].mxu0
        %v1300 = vpop.f32.mrb[0].mxu0
        %v1301 = vadd.f32 %v1119, %v1300
        %v1302 = vpop.f32.mrb[0].mxu0
        %1303 = vmatprep.mubr.bf16.mxu0 0
        %1304 = vmatmul.mubr.bf16.gmra.mrb[0].mxu0 %v1163
        %v1305 = vpop.f32.mrb[0].mxu0
        %v1306 = vadd.f32 %v1119, %v1305
        %v1307 = vpop.f32.mrb[0].mxu0
        %v1308 = vpop.f32.mrb[0].mxu0
        %v1309 = vadd.f32 %v1119, %v1308
        %v1310 = vpop.f32.mrb[0].mxu0
        %1311 = vmatprep.mubr.bf16.mxu0 0
        %1312 = vmatmul.mubr.bf16.gmra.mrb[0].mxu0 %v1164
        %v1313 = vpop.f32.mrb[0].mxu0
        %v1314 = vadd.f32 %v1119, %v1313
        %v1315 = vpop.f32.mrb[0].mxu0
        %v1316 = vpop.f32.mrb[0].mxu0
        %v1317 = vadd.f32 %v1119, %v1316
        %v1318 = vpop.f32.mrb[0].mxu0
        %1319 = vmatprep.mubr.bf16.mxu0 0
        %1320 = vmatmul.mubr.bf16.gmra.mrb[0].mxu0 %v1165
        %v1321 = vpop.f32.mrb[0].mxu0
        %v1322 = vadd.f32 %v1119, %v1321
        %v1323 = vpop.f32.mrb[0].mxu0
        %v1324 = vpop.f32.mrb[0].mxu0
        %v1325 = vadd.f32 %v1119, %v1324
        %v1326 = vpop.f32.mrb[0].mxu0
        %1327 = vdwg.mxu0
        %v1328 = vpack.c.bf16 %v1261, %v1258
        %v1329 = vpack.c.bf16 %v1269, %v1266
        %v1330 = vpack.c.bf16 %v1277, %v1274
        %v1331 = vpack.c.bf16 %v1285, %v1282
        %v1332 = vpack.c.bf16 %v1293, %v1290
        %v1333 = vpack.c.bf16 %v1301, %v1298
        %v1334 = vpack.c.bf16 %v1309, %v1306
        %v1335 = vpack.c.bf16 %v1317, %v1314
        %v1336 = vpack.c.bf16 %v1325, %v1322
        %v1337 = vld [vmem:[%s8] sm:$0xff]
        %v1338 = vld [vmem:[%s8 + $0x8] sm:$0xff]
        %v1339 = vld [vmem:[%s8 + $0x10] sm:$0xff]
        %v1340 = vld [vmem:[%s8 + $0x18] sm:$0xff]
        %v1341 = vld [vmem:[%s8 + $0x20] sm:$0xff]
        %v1342 = vld [vmem:[%s8 + $0x28] sm:$0xff]
        %v1343 = vld [vmem:[%s8 + $0x30] sm:$0xff]
        %v1344 = vld [vmem:[%s8 + $0x38] sm:$0xff]
        %v1345 = vld [vmem:[%s8 + $0x40] sm:$0xff]
        %v1346 = vld [vmem:[%s8 + $0x48] sm:$0xff]
        %v1347 = vld [vmem:[%s8 + $0x50] sm:$0xff]
        %v1348 = vld [vmem:[%s8 + $0x58] sm:$0xff]
        %v1349 = vld [vmem:[%s8 + $0x60] sm:$0xff]
        %v1350 = vld [vmem:[%s8 + $0x68] sm:$0xff]
        %v1351 = vld [vmem:[%s8 + $0x70] sm:$0xff]
        %v1352 = vld [vmem:[%s8 + $0x78] sm:$0xff]
        %v1369 = vunpack.c.l.b16 %v1337
        %v1370 = vunpack.c.h.b16 %v1337
        %v1371 = vunpack.c.l.b16 %v1338
        %v1372 = vunpack.c.h.b16 %v1338
        %v1373 = vunpack.c.l.b16 %v1339
        %v1374 = vunpack.c.h.b16 %v1339
        %v1375 = vunpack.c.l.b16 %v1340
        %v1376 = vunpack.c.h.b16 %v1340
        %v1377 = vunpack.c.l.b16 %v1341
        %v1378 = vunpack.c.h.b16 %v1341
        %v1379 = vunpack.c.l.b16 %v1342
        %v1380 = vunpack.c.h.b16 %v1342
        %v1381 = vunpack.c.l.b16 %v1343
        %v1382 = vunpack.c.h.b16 %v1343
        %v1383 = vunpack.c.l.b16 %v1344
        %v1384 = vunpack.c.h.b16 %v1344
        %v1385 = vunpack.c.l.b16 %v1345
        %v1386 = vunpack.c.h.b16 %v1345
        %v1387 = vunpack.c.l.b16 %v1346
        %v1388 = vunpack.c.h.b16 %v1346
        %v1389 = vunpack.c.l.b16 %v1347
        %v1390 = vunpack.c.h.b16 %v1347
        %v1391 = vunpack.c.l.b16 %v1348
        %v1392 = vunpack.c.h.b16 %v1348
        %v1393 = vunpack.c.l.b16 %v1349
        %v1394 = vunpack.c.h.b16 %v1349
        %v1395 = vunpack.c.l.b16 %v1350
        %v1396 = vunpack.c.h.b16 %v1350
        %v1397 = vunpack.c.l.b16 %v1351
        %v1398 = vunpack.c.h.b16 %v1351
        %v1399 = vunpack.c.l.b16 %v1352
        %v1400 = vunpack.c.h.b16 %v1352
        %v1401 = vpack.c.b16 %v1371, %v1369
        %v1402 = vpack.c.b16 %v1372, %v1370
        %v1403 = vpack.c.b16 %v1375, %v1373
        %v1404 = vpack.c.b16 %v1376, %v1374
        %v1405 = vpack.c.b16 %v1379, %v1377
        %v1406 = vpack.c.b16 %v1380, %v1378
        %v1407 = vpack.c.b16 %v1383, %v1381
        %v1408 = vpack.c.b16 %v1384, %v1382
        %v1409 = vpack.c.b16 %v1387, %v1385
        %v1410 = vpack.c.b16 %v1388, %v1386
        %v1411 = vpack.c.b16 %v1391, %v1389
        %v1412 = vpack.c.b16 %v1392, %v1390
        %v1413 = vpack.c.b16 %v1395, %v1393
        %v1414 = vpack.c.b16 %v1396, %v1394
        %v1415 = vpack.c.b16 %v1399, %v1397
        %v1416 = vpack.c.b16 %v1400, %v1398
        %1433 = vmatprep.subr.bf16.mxu0 %v1402
        %1434 = vmatpush1.bf16.msra.mxu0 %v1401
        %1435 = vmatprep.subr.bf16.mxu0 %v1404
        %1436 = vmatpush1.bf16.msra.mxu0 %v1403
        %1437 = vmatprep.subr.bf16.mxu0 %v1406
        %1438 = vmatpush1.bf16.msra.mxu0 %v1405
        %1439 = vmatprep.subr.bf16.mxu0 %v1408
        %1440 = vmatpush1.bf16.msra.mxu0 %v1407
        %1441 = vmatprep.subr.bf16.mxu0 %v1410
        %1442 = vmatpush1.bf16.msra.mxu0 %v1409
        %1443 = vmatprep.subr.bf16.mxu0 %v1412
        %1444 = vmatpush1.bf16.msra.mxu0 %v1411
        %1445 = vmatprep.subr.bf16.mxu0 %v1414
        %1446 = vmatpush1.bf16.msra.mxu0 %v1413
        %1447 = vmatprep.subr.bf16.mxu0 %v1416
        %1448 = vmatpush1.bf16.msra.mxu0 %v1415
        %1449 = vmatprep.subr.bf16.mxu0 0
        %1450 = vmatpush1.bf16.msra.mxu0 0
        %1451 = vmatprep.subr.bf16.mxu0 0
        %1452 = vmatpush1.bf16.msra.mxu0 0
        %1453 = vmatprep.subr.bf16.mxu0 0
        %1454 = vmatpush1.bf16.msra.mxu0 0
        %1455 = vmatprep.subr.bf16.mxu0 0
        %1456 = vmatpush1.bf16.msra.mxu0 0
        %1457 = vmatprep.subr.bf16.mxu0 0
        %1458 = vmatpush1.bf16.msra.mxu0 0
        %1459 = vmatprep.subr.bf16.mxu0 0
        %1460 = vmatpush1.bf16.msra.mxu0 0
        %1461 = vmatprep.subr.bf16.mxu0 0
        %1462 = vmatpush1.bf16.msra.mxu0 0
        %1463 = vmatprep.subr.bf16.mxu0 0
        %1464 = vmatpush1.bf16.msra.mxu0 0
        %1465 = vmatprep.mubr.bf16.mxu0 0
        %1466 = vmatmul.mubr.bf16.gmra.mrb[0].mxu0 %v1328
        %v1467 = vpop.f32.mrb[0].mxu0
        %v1468 = vadd.f32 0.0, %v1467
        %v1469 = vpop.f32.mrb[0].mxu0
        %v1470 = vadd.f32 0.0, %v1469
        %v1471 = vpop.f32.mrb[0].mxu0
        %v1472 = vadd.f32 0.0, %v1471
        %v1473 = vpop.f32.mrb[0].mxu0
        %v1474 = vadd.f32 0.0, %v1473
        %1475 = vmatprep.mubr.bf16.mxu0 0
        %1476 = vmatmul.mubr.bf16.gmra.mrb[0].mxu0 %v1329
        %v1477 = vpop.f32.mrb[0].mxu0
        %v1478 = vadd.f32 0.0, %v1477
        %v1479 = vpop.f32.mrb[0].mxu0
        %v1480 = vadd.f32 0.0, %v1479
        %v1481 = vpop.f32.mrb[0].mxu0
        %v1482 = vadd.f32 0.0, %v1481
        %v1483 = vpop.f32.mrb[0].mxu0
        %v1484 = vadd.f32 0.0, %v1483
        %1485 = vmatprep.mubr.bf16.mxu0 0
        %1486 = vmatmul.mubr.bf16.gmra.mrb[0].mxu0 %v1330
        %v1487 = vpop.f32.mrb[0].mxu0
        %v1488 = vadd.f32 0.0, %v1487
        %v1489 = vpop.f32.mrb[0].mxu0
        %v1490 = vadd.f32 0.0, %v1489
        %v1491 = vpop.f32.mrb[0].mxu0
        %v1492 = vadd.f32 0.0, %v1491
        %v1493 = vpop.f32.mrb[0].mxu0
        %v1494 = vadd.f32 0.0, %v1493
        %1495 = vmatprep.mubr.bf16.mxu0 0
        %1496 = vmatmul.mubr.bf16.gmra.mrb[0].mxu0 %v1331
        %v1497 = vpop.f32.mrb[0].mxu0
        %v1498 = vadd.f32 0.0, %v1497
        %v1499 = vpop.f32.mrb[0].mxu0
        %v1500 = vadd.f32 0.0, %v1499
        %v1501 = vpop.f32.mrb[0].mxu0
        %v1502 = vadd.f32 0.0, %v1501
        %v1503 = vpop.f32.mrb[0].mxu0
        %v1504 = vadd.f32 0.0, %v1503
        %1505 = vmatprep.mubr.bf16.mxu0 0
        %1506 = vmatmul.mubr.bf16.gmra.mrb[0].mxu0 %v1332
        %v1507 = vpop.f32.mrb[0].mxu0
        %v1508 = vadd.f32 0.0, %v1507
        %v1509 = vpop.f32.mrb[0].mxu0
        %v1510 = vadd.f32 0.0, %v1509
        %v1511 = vpop.f32.mrb[0].mxu0
        %v1512 = vadd.f32 0.0, %v1511
        %v1513 = vpop.f32.mrb[0].mxu0
        %v1514 = vadd.f32 0.0, %v1513
        %1515 = vmatprep.mubr.bf16.mxu0 0
        %1516 = vmatmul.mubr.bf16.gmra.mrb[0].mxu0 %v1333
        %v1517 = vpop.f32.mrb[0].mxu0
        %v1518 = vadd.f32 0.0, %v1517
        %v1519 = vpop.f32.mrb[0].mxu0
        %v1520 = vadd.f32 0.0, %v1519
        %v1521 = vpop.f32.mrb[0].mxu0
        %v1522 = vadd.f32 0.0, %v1521
        %v1523 = vpop.f32.mrb[0].mxu0
        %v1524 = vadd.f32 0.0, %v1523
        %1525 = vmatprep.mubr.bf16.mxu0 0
        %1526 = vmatmul.mubr.bf16.gmra.mrb[0].mxu0 %v1334
        %v1527 = vpop.f32.mrb[0].mxu0
        %v1528 = vadd.f32 0.0, %v1527
        %v1529 = vpop.f32.mrb[0].mxu0
        %v1530 = vadd.f32 0.0, %v1529
        %v1531 = vpop.f32.mrb[0].mxu0
        %v1532 = vadd.f32 0.0, %v1531
        %v1533 = vpop.f32.mrb[0].mxu0
        %v1534 = vadd.f32 0.0, %v1533
        %1535 = vmatprep.mubr.bf16.mxu0 0
        %1536 = vmatmul.mubr.bf16.gmra.mrb[0].mxu0 %v1335
        %v1537 = vpop.f32.mrb[0].mxu0
        %v1538 = vadd.f32 0.0, %v1537
        %v1539 = vpop.f32.mrb[0].mxu0
        %v1540 = vadd.f32 0.0, %v1539
        %v1541 = vpop.f32.mrb[0].mxu0
        %v1542 = vadd.f32 0.0, %v1541
        %v1543 = vpop.f32.mrb[0].mxu0
        %v1544 = vadd.f32 0.0, %v1543
        %1545 = vmatprep.mubr.bf16.mxu0 0
        %1546 = vmatmul.mubr.bf16.gmra.mrb[0].mxu0 %v1336
        %v1547 = vpop.f32.mrb[0].mxu0
        %v1548 = vadd.f32 0.0, %v1547
        %v1549 = vpop.f32.mrb[0].mxu0
        %v1550 = vadd.f32 0.0, %v1549
        %v1551 = vpop.f32.mrb[0].mxu0
        %v1552 = vadd.f32 0.0, %v1551
        %v1553 = vpop.f32.mrb[0].mxu0
        %v1554 = vadd.f32 0.0, %v1553
        %1555 = vdwg.mxu0
        %v1556 = vpack.c.bf16 %v1472, %v1468
        %v1557 = vpack.c.bf16 %v1482, %v1478
        %v1558 = vpack.c.bf16 %v1492, %v1488
        %v1559 = vpack.c.bf16 %v1502, %v1498
        %v1560 = vpack.c.bf16 %v1512, %v1508
        %v1561 = vpack.c.bf16 %v1522, %v1518
        %v1562 = vpack.c.bf16 %v1532, %v1528
        %v1563 = vpack.c.bf16 %v1542, %v1538
        %v1564 = vpack.c.bf16 %v1552, %v1548
        %s1565 = scalar_lea.vmem [#allocation3], 72
        %1566 = vst [vmem:[%s1565] sm:$0xff] %v1556
        %1567 = vst [vmem:[%s1565 + $0x8] sm:$0xff] %v1557
        %1568 = vst [vmem:[%s1565 + $0x10] sm:$0xff] %v1558
        %1569 = vst [vmem:[%s1565 + $0x18] sm:$0xff] %v1559
        %1570 = vst [vmem:[%s1565 + $0x20] sm:$0xff] %v1560
        %1571 = vst [vmem:[%s1565 + $0x28] sm:$0xff] %v1561
        %1572 = vst [vmem:[%s1565 + $0x30] sm:$0xff] %v1562
        %1573 = vst [vmem:[%s1565 + $0x38] sm:$0xff] %v1563
        %1574 = vst [vmem:[%s1565 + $0x40] sm:$0xff] %v1564
        %v1575 = vpack.c.bf16 %v1474, %v1470
        %v1576 = vpack.c.bf16 %v1484, %v1480
        %v1577 = vpack.c.bf16 %v1494, %v1490
        %v1578 = vpack.c.bf16 %v1504, %v1500
        %v1579 = vpack.c.bf16 %v1514, %v1510
        %v1580 = vpack.c.bf16 %v1524, %v1520
        %v1581 = vpack.c.bf16 %v1534, %v1530
        %v1582 = vpack.c.bf16 %v1544, %v1540
        %v1583 = vpack.c.bf16 %v1554, %v1550
        %s1584 = scalar_lea.vmem [#allocation4], 72
        %1585 = vst [vmem:[%s1584] sm:$0xff] %v1575
        %1586 = vst [vmem:[%s1584 + $0x8] sm:$0xff] %v1576
        %1587 = vst [vmem:[%s1584 + $0x10] sm:$0xff] %v1577
        %1588 = vst [vmem:[%s1584 + $0x18] sm:$0xff] %v1578
        %1589 = vst [vmem:[%s1584 + $0x20] sm:$0xff] %v1579
        %1590 = vst [vmem:[%s1584 + $0x28] sm:$0xff] %v1580
        %1591 = vst [vmem:[%s1584 + $0x30] sm:$0xff] %v1581
        %1592 = vst [vmem:[%s1584 + $0x38] sm:$0xff] %v1582
        %1593 = vst [vmem:[%s1584 + $0x40] sm:$0xff] %v1583
      $region80: #{_ref_only_noised_unet_impl.1} parent=75 // pred_fallthru
        _
      %s1594 = smul.u32 %s30, 48
      %s1595 = scalar_lea.vmem [#allocation2], %s1594
      %v1596 = vld [vmem:[%s1595] sm:$0xff]
      %v1597 = vld [vmem:[%s1595 + $0x8] sm:$0xff]
      %v1598 = vld [vmem:[%s1595 + $0x10] sm:$0xff]
      %v1599 = vld [vmem:[%s1595 + $0x18] sm:$0xff]
      %v1600 = vld [vmem:[%s1595 + $0x20] sm:$0xff]
      %v1601 = vld [vmem:[%s1595 + $0x28] sm:$0xff]
      %v1602 = vpack.c.bf16 %v1597, %v1596
      %v1603 = vpack.c.bf16 %v1599, %v1598
      %v1604 = vpack.c.bf16 %v1601, %v1600
      %v1605 = vld [vmem:[%s7] sm:$0xf]
      %v1606 = vld [vmem:[%s7 + $0x4] sm:$0xf]
      %v1607 = vld [vmem:[%s7 + $0x8] sm:$0xf]
      %v1608 = vld [vmem:[%s7 + $0xc] sm:$0xf]
      %v1609 = vld [vmem:[%s7 + $0x10] sm:$0xf]
      %v1610 = vld [vmem:[%s7 + $0x14] sm:$0xf]
      %v1611 = vld [vmem:[%s7 + $0x18] sm:$0xf]
      %v1612 = vld [vmem:[%s7 + $0x1c] sm:$0xf]
      %v1613 = vld [vmem:[%s7 + $0x20] sm:$0xf]
      %v1614 = vld [vmem:[%s7 + $0x24] sm:$0xf]
      %v1615 = vld [vmem:[%s7 + $0x28] sm:$0xf]
      %v1616 = vld [vmem:[%s7 + $0x2c] sm:$0xf]
      %v1617 = vld [vmem:[%s7 + $0x30] sm:$0xf]
      %v1618 = vld [vmem:[%s7 + $0x34] sm:$0xf]
      %v1619 = vld [vmem:[%s7 + $0x38] sm:$0xf]
      %v1620 = vld [vmem:[%s7 + $0x3c] sm:$0xf]
      %v1637 = vunpack.c.l.b16 %v1605
      %v1638 = vunpack.c.l.b16 %v1606
      %v1639 = vunpack.c.l.b16 %v1607
      %v1640 = vunpack.c.l.b16 %v1608
      %v1641 = vunpack.c.l.b16 %v1609
      %v1642 = vunpack.c.l.b16 %v1610
      %v1643 = vunpack.c.l.b16 %v1611
      %v1644 = vunpack.c.l.b16 %v1612
      %v1645 = vunpack.c.l.b16 %v1613
      %v1646 = vunpack.c.l.b16 %v1614
      %v1647 = vunpack.c.l.b16 %v1615
      %v1648 = vunpack.c.l.b16 %v1616
      %v1649 = vunpack.c.l.b16 %v1617
      %v1650 = vunpack.c.l.b16 %v1618
      %v1651 = vunpack.c.l.b16 %v1619
      %v1652 = vunpack.c.l.b16 %v1620
      %v1653 = vpack.c.b16 %v1638, %v1637
      %v1654 = vpack.c.b16 %v1640, %v1639
      %v1655 = vpack.c.b16 %v1642, %v1641
      %v1656 = vpack.c.b16 %v1644, %v1643
      %v1657 = vpack.c.b16 %v1646, %v1645
      %v1658 = vpack.c.b16 %v1648, %v1647
      %v1659 = vpack.c.b16 %v1650, %v1649
      %v1660 = vpack.c.b16 %v1652, %v1651
      %1669 = vmatprep.subr.bf16.mxu0 0
      %1670 = vmatpush1.bf16.msra.mxu0 %v1653
      %1671 = vmatprep.subr.bf16.mxu0 0
      %1672 = vmatpush1.bf16.msra.mxu0 %v1654
      %1673 = vmatprep.subr.bf16.mxu0 0
      %1674 = vmatpush1.bf16.msra.mxu0 %v1655
      %1675 = vmatprep.subr.bf16.mxu0 0
      %1676 = vmatpush1.bf16.msra.mxu0 %v1656
      %1677 = vmatprep.subr.bf16.mxu0 0
      %1678 = vmatpush1.bf16.msra.mxu0 %v1657
      %1679 = vmatprep.subr.bf16.mxu0 0
      %1680 = vmatpush1.bf16.msra.mxu0 %v1658
      %1681 = vmatprep.subr.bf16.mxu0 0
      %1682 = vmatpush1.bf16.msra.mxu0 %v1659
      %1683 = vmatprep.subr.bf16.mxu0 0
      %1684 = vmatpush1.bf16.msra.mxu0 %v1660
      %1685 = vmatprep.subr.bf16.mxu0 0
      %1686 = vmatpush1.bf16.msra.mxu0 0
      %1687 = vmatprep.subr.bf16.mxu0 0
      %1688 = vmatpush1.bf16.msra.mxu0 0
      %1689 = vmatprep.subr.bf16.mxu0 0
      %1690 = vmatpush1.bf16.msra.mxu0 0
      %1691 = vmatprep.subr.bf16.mxu0 0
      %1692 = vmatpush1.bf16.msra.mxu0 0
      %1693 = vmatprep.subr.bf16.mxu0 0
      %1694 = vmatpush1.bf16.msra.mxu0 0
      %1695 = vmatprep.subr.bf16.mxu0 0
      %1696 = vmatpush1.bf16.msra.mxu0 0
      %1697 = vmatprep.subr.bf16.mxu0 0
      %1698 = vmatpush1.bf16.msra.mxu0 0
      %1699 = vmatprep.subr.bf16.mxu0 0
      %1700 = vmatpush1.bf16.msra.mxu0 0
      %1701 = vmatprep.mubr.bf16.mxu0 0
      %1702 = vmatmul.mubr.bf16.gmra.mrb[0].mxu0 %v1602
      %v1703 = vpop.f32.mrb[0].mxu0
      %v1704 = vadd.f32 0.0, %v1703
      %v1705 = vpop.f32.mrb[0].mxu0
      %v1706 = vpop.f32.mrb[0].mxu0
      %v1707 = vadd.f32 0.0, %v1706
      %v1708 = vpop.f32.mrb[0].mxu0
      %1709 = vmatprep.mubr.bf16.mxu0 0
      %1710 = vmatmul.mubr.bf16.gmra.mrb[0].mxu0 %v1603
      %v1711 = vpop.f32.mrb[0].mxu0
      %v1712 = vadd.f32 0.0, %v1711
      %v1713 = vpop.f32.mrb[0].mxu0
      %v1714 = vpop.f32.mrb[0].mxu0
      %v1715 = vadd.f32 0.0, %v1714
      %v1716 = vpop.f32.mrb[0].mxu0
      %1717 = vmatprep.mubr.bf16.mxu0 0
      %1718 = vmatmul.mubr.bf16.gmra.mrb[0].mxu0 %v1604
      %v1719 = vpop.f32.mrb[0].mxu0
      %v1720 = vadd.f32 0.0, %v1719
      %v1721 = vpop.f32.mrb[0].mxu0
      %v1722 = vpop.f32.mrb[0].mxu0
      %v1723 = vadd.f32 0.0, %v1722
      %v1724 = vpop.f32.mrb[0].mxu0
      %1725 = vdwg.mxu0
      %v1726 = vpack.c.bf16 %v1707, %v1704
      %v1727 = vpack.c.bf16 %v1715, %v1712
      %v1728 = vpack.c.bf16 %v1723, %v1720
      %v1729 = vld [vmem:[#allocation3] sm:$0xff]
      %v1730 = vld [vmem:[#allocation3 + $0x8] sm:$0xff]
      %v1731 = vld [vmem:[#allocation3 + $0x10] sm:$0xff]
      %v1732 = vld [vmem:[#allocation3 + $0x18] sm:$0xff]
      %v1733 = vld [vmem:[#allocation3 + $0x20] sm:$0xff]
      %v1734 = vld [vmem:[#allocation3 + $0x28] sm:$0xff]
      %v1735 = vld [vmem:[#allocation3 + $0x30] sm:$0xff]
      %v1736 = vld [vmem:[#allocation3 + $0x38] sm:$0xff]
      %v1737 = vld [vmem:[#allocation3 + $0x40] sm:$0xff]
      %v1738 = vld [vmem:[#allocation4] sm:$0xff]
      %v1739 = vld [vmem:[#allocation4 + $0x8] sm:$0xff]
      %v1740 = vld [vmem:[#allocation4 + $0x10] sm:$0xff]
      %v1741 = vld [vmem:[#allocation4 + $0x18] sm:$0xff]
      %v1742 = vld [vmem:[#allocation4 + $0x20] sm:$0xff]
      %v1743 = vld [vmem:[#allocation4 + $0x28] sm:$0xff]
      %v1744 = vld [vmem:[#allocation4 + $0x30] sm:$0xff]
      %v1745 = vld [vmem:[#allocation4 + $0x38] sm:$0xff]
      %v1746 = vld [vmem:[#allocation4 + $0x40] sm:$0xff]
      %1747 = vmatprep.subr.bf16.mxu0 0
      %1748 = vmatpush1.bf16.xpose.msra.mxu0 %v1729
      %1749 = vmatprep.subr.bf16.mxu0 0
      %1750 = vmatpush1.bf16.xpose.msra.mxu0 %v1730
      %1751 = vmatprep.subr.bf16.mxu0 0
      %1752 = vmatpush1.bf16.xpose.msra.mxu0 %v1731
      %1753 = vmatprep.subr.bf16.mxu0 0
      %1754 = vmatpush1.bf16.xpose.msra.mxu0 %v1732
      %1755 = vmatprep.subr.bf16.mxu0 0
      %1756 = vmatpush1.bf16.xpose.msra.mxu0 %v1733
      %1757 = vmatprep.subr.bf16.mxu0 0
      %1758 = vmatpush1.bf16.xpose.msra.mxu0 %v1734
      %1759 = vmatprep.subr.bf16.mxu0 0
      %1760 = vmatpush1.bf16.xpose.msra.mxu0 %v1735
      %1761 = vmatprep.subr.bf16.mxu0 0
      %1762 = vmatpush1.bf16.xpose.msra.mxu0 %v1736
      %1763 = vmatprep.subr.bf16.mxu0 0
      %1764 = vmatpush1.bf16.xpose.msra.mxu0 %v1737
      %1765 = vmatprep.subr.bf16.mxu0 0
      %1766 = vmatpush1.bf16.xpose.msra.mxu0 0
      %1767 = vmatprep.subr.bf16.mxu0 0
      %1768 = vmatpush1.bf16.xpose.msra.mxu0 0
      %1769 = vmatprep.subr.bf16.mxu0 0
      %1770 = vmatpush1.bf16.xpose.msra.mxu0 0
      %1771 = vmatprep.subr.bf16.mxu0 0
      %1772 = vmatpush1.bf16.xpose.msra.mxu0 0
      %1773 = vmatprep.subr.bf16.mxu0 0
      %1774 = vmatpush1.bf16.xpose.msra.mxu0 0
      %1775 = vmatprep.subr.bf16.mxu0 0
      %1776 = vmatpush1.bf16.xpose.msra.mxu0 0
      %1777 = vmatprep.subr.bf16.mxu0 0
      %1778 = vmatpush1.bf16.xpose.msra.mxu0 0
      %1779 = vmatprep.mubr.bf16.mxu0 0
      %1780 = vmatmul.mubr.bf16.gmra.mrb[0].mxu0 %v1726
      %v1781 = vpop.f32.mrb[0].mxu0
      %v1782 = vadd.f32 0.0, %v1781
      %v1783 = vpop.f32.mrb[0].mxu0
      %v1784 = vadd.f32 0.0, %v1783
      %v1785 = vpop.f32.mrb[0].mxu0
      %v1786 = vadd.f32 0.0, %v1785
      %v1787 = vpop.f32.mrb[0].mxu0
      %v1788 = vadd.f32 0.0, %v1787
      %1789 = vmatprep.mubr.bf16.mxu0 0
      %1790 = vmatmul.mubr.bf16.gmra.mrb[0].mxu0 %v1727
      %v1791 = vpop.f32.mrb[0].mxu0
      %v1792 = vadd.f32 0.0, %v1791
      %v1793 = vpop.f32.mrb[0].mxu0
      %v1794 = vadd.f32 0.0, %v1793
      %v1795 = vpop.f32.mrb[0].mxu0
      %v1796 = vadd.f32 0.0, %v1795
      %v1797 = vpop.f32.mrb[0].mxu0
      %v1798 = vadd.f32 0.0, %v1797
      %1799 = vmatprep.mubr.bf16.mxu0 0
      %1800 = vmatmul.mubr.bf16.gmra.mrb[0].mxu0 %v1728
      %v1801 = vpop.f32.mrb[0].mxu0
      %v1802 = vadd.f32 0.0, %v1801
      %v1803 = vpop.f32.mrb[0].mxu0
      %v1804 = vadd.f32 0.0, %v1803
      %v1805 = vpop.f32.mrb[0].mxu0
      %v1806 = vadd.f32 0.0, %v1805
      %v1807 = vpop.f32.mrb[0].mxu0
      %v1808 = vadd.f32 0.0, %v1807
      %1809 = vdwg.mxu0
      %vm1810 = vcmask 130048
      %v1811 = vsel %vm1810, %v1784, -inf
      %v1812 = vmax.f32 %v1782, %v1811
      %1813 = vmax.xlane.f32.xlu0 %v1812
      %v1814 = vpop.xlane.xlu0 %1813
      %v1815 = vsel %vm1810, %v1788, -inf
      %v1816 = vmax.f32 %v1786, %v1815
      %1817 = vmax.xlane.f32.xlu0 %v1816
      %v1818 = vpop.xlane.xlu0 %1817
      %v1819 = vsel %vm1810, %v1794, -inf
      %v1820 = vmax.f32 %v1792, %v1819
      %1821 = vmax.xlane.f32.xlu0 %v1820
      %v1822 = vpop.xlane.xlu0 %1821
      %v1823 = vsel %vm1810, %v1798, -inf
      %v1824 = vmax.f32 %v1796, %v1823
      %1825 = vmax.xlane.f32.xlu0 %v1824
      %v1826 = vpop.xlane.xlu0 %1825
      %v1827 = vsel %vm1810, %v1804, -inf
      %v1828 = vmax.f32 %v1802, %v1827
      %1829 = vmax.xlane.f32.xlu0 %v1828
      %v1830 = vpop.xlane.xlu0 %1829
      %v1831 = vsel %vm1810, %v1808, -inf
      %v1832 = vmax.f32 %v1806, %v1831
      %1833 = vmax.xlane.f32.xlu0 %v1832
      %v1834 = vpop.xlane.xlu0 %1833
      %v1835 = vsub.f32 -inf, %v1814
      %v1836 = vsub.f32 -inf, %v1818
      %v1837 = vsub.f32 -inf, %v1822
      %v1838 = vsub.f32 -inf, %v1826
      %v1839 = vsub.f32 -inf, %v1830
      %v1840 = vsub.f32 -inf, %v1834
      %v1841 = vmul.f32 %v1835, 1.442695
      %v1842 = vpow.pop %v1841
      %v1843 = vmul.f32 %v1836, 1.442695
      %v1844 = vpow.pop %v1843
      %v1845 = vmul.f32 %v1837, 1.442695
      %v1846 = vpow.pop %v1845
      %v1847 = vmul.f32 %v1838, 1.442695
      %v1848 = vpow.pop %v1847
      %v1849 = vmul.f32 %v1839, 1.442695
      %v1850 = vpow.pop %v1849
      %v1851 = vmul.f32 %v1840, 1.442695
      %v1852 = vpow.pop %v1851
      %v1853 = vsub.f32 %v1782, %v1814
      %v1854 = vsub.f32 %v1784, %v1814
      %v1855 = vsub.f32 %v1786, %v1818
      %v1856 = vsub.f32 %v1788, %v1818
      %v1857 = vsub.f32 %v1792, %v1822
      %v1858 = vsub.f32 %v1794, %v1822
      %v1859 = vsub.f32 %v1796, %v1826
      %v1860 = vsub.f32 %v1798, %v1826
      %v1861 = vsub.f32 %v1802, %v1830
      %v1862 = vsub.f32 %v1804, %v1830
      %v1863 = vsub.f32 %v1806, %v1834
      %v1864 = vsub.f32 %v1808, %v1834
      %v1865 = vmul.f32 %v1853, 1.442695
      %v1866 = vpow.pop %v1865
      %v1867 = vmul.f32 %v1854, 1.442695
      %v1868 = vpow.pop %v1867
      %v1869 = vmul.f32 %v1855, 1.442695
      %v1870 = vpow.pop %v1869
      %v1871 = vmul.f32 %v1856, 1.442695
      %v1872 = vpow.pop %v1871
      %v1873 = vmul.f32 %v1857, 1.442695
      %v1874 = vpow.pop %v1873
      %v1875 = vmul.f32 %v1858, 1.442695
      %v1876 = vpow.pop %v1875
      %v1877 = vmul.f32 %v1859, 1.442695
      %v1878 = vpow.pop %v1877
      %v1879 = vmul.f32 %v1860, 1.442695
      %v1880 = vpow.pop %v1879
      %v1881 = vmul.f32 %v1861, 1.442695
      %v1882 = vpow.pop %v1881
      %v1883 = vmul.f32 %v1862, 1.442695
      %v1884 = vpow.pop %v1883
      %v1885 = vmul.f32 %v1863, 1.442695
      %v1886 = vpow.pop %v1885
      %v1887 = vmul.f32 %v1864, 1.442695
      %v1888 = vpow.pop %v1887
      %v1889 = vmul.f32 %v1842, 0.0
      %v1890 = vmul.f32 %v1844, 0.0
      %v1891 = vmul.f32 %v1846, 0.0
      %v1892 = vmul.f32 %v1848, 0.0
      %v1893 = vmul.f32 %v1850, 0.0
      %v1894 = vmul.f32 %v1852, 0.0
      %v1895 = vsel %vm1810, %v1868, 0.0
      %v1896 = vadd.f32 %v1866, %v1895
      %1897 = vadd.xlane.f32.xlu0 %v1896
      %v1898 = vpop.xlane.xlu0 %1897
      %v1899 = vsel %vm1810, %v1872, 0.0
      %v1900 = vadd.f32 %v1870, %v1899
      %1901 = vadd.xlane.f32.xlu0 %v1900
      %v1902 = vpop.xlane.xlu0 %1901
      %v1903 = vsel %vm1810, %v1876, 0.0
      %v1904 = vadd.f32 %v1874, %v1903
      %1905 = vadd.xlane.f32.xlu0 %v1904
      %v1906 = vpop.xlane.xlu0 %1905
      %v1907 = vsel %vm1810, %v1880, 0.0
      %v1908 = vadd.f32 %v1878, %v1907
      %1909 = vadd.xlane.f32.xlu0 %v1908
      %v1910 = vpop.xlane.xlu0 %1909
      %v1911 = vsel %vm1810, %v1884, 0.0
      %v1912 = vadd.f32 %v1882, %v1911
      %1913 = vadd.xlane.f32.xlu0 %v1912
      %v1914 = vpop.xlane.xlu0 %1913
      %v1915 = vsel %vm1810, %v1888, 0.0
      %v1916 = vadd.f32 %v1886, %v1915
      %1917 = vadd.xlane.f32.xlu0 %v1916
      %v1918 = vpop.xlane.xlu0 %1917
      %v1919 = vadd.f32 %v1889, %v1898
      %v1920 = vadd.f32 %v1890, %v1902
      %v1921 = vadd.f32 %v1891, %v1906
      %v1922 = vadd.f32 %v1892, %v1910
      %v1923 = vadd.f32 %v1893, %v1914
      %v1924 = vadd.f32 %v1894, %v1918
      %v1925 = vpack.c.bf16 %v1870, %v1866
      %v1926 = vpack.c.bf16 %v1872, %v1868
      %v1927 = vpack.c.bf16 %v1878, %v1874
      %v1928 = vpack.c.bf16 %v1880, %v1876
      %v1929 = vpack.c.bf16 %v1886, %v1882
      %v1930 = vpack.c.bf16 %v1888, %v1884
      %v1932 = vsel %vm1810, %v1926, 0
      %v1935 = vsel %vm1810, %v1928, 0
      %v1938 = vsel %vm1810, %v1930, 0
      %1940 = vmatprep.subr.bf16.mxu0 0
      %1941 = vmatpush1.bf16.msra.mxu0 %v1738
      %1942 = vmatprep.subr.bf16.mxu0 0
      %1943 = vmatpush1.bf16.msra.mxu0 %v1739
      %1944 = vmatprep.subr.bf16.mxu0 0
      %1945 = vmatpush1.bf16.msra.mxu0 %v1740
      %1946 = vmatprep.subr.bf16.mxu0 0
      %1947 = vmatpush1.bf16.msra.mxu0 %v1741
      %1948 = vmatprep.subr.bf16.mxu0 0
      %1949 = vmatpush1.bf16.msra.mxu0 %v1742
      %1950 = vmatprep.subr.bf16.mxu0 0
      %1951 = vmatpush1.bf16.msra.mxu0 %v1743
      %1952 = vmatprep.subr.bf16.mxu0 0
      %1953 = vmatpush1.bf16.msra.mxu0 %v1744
      %1954 = vmatprep.subr.bf16.mxu0 0
      %1955 = vmatpush1.bf16.msra.mxu0 %v1745
      %1956 = vmatprep.subr.bf16.mxu0 0
      %1957 = vmatpush1.bf16.msra.mxu0 %v1746
      %1958 = vmatprep.subr.bf16.mxu0 0
      %1959 = vmatpush1.bf16.msra.mxu0 0
      %1960 = vmatprep.subr.bf16.mxu0 0
      %1961 = vmatpush1.bf16.msra.mxu0 0
      %1962 = vmatprep.subr.bf16.mxu0 0
      %1963 = vmatpush1.bf16.msra.mxu0 0
      %1964 = vmatprep.subr.bf16.mxu0 0
      %1965 = vmatpush1.bf16.msra.mxu0 0
      %1966 = vmatprep.subr.bf16.mxu0 0
      %1967 = vmatpush1.bf16.msra.mxu0 0
      %1968 = vmatprep.subr.bf16.mxu0 0
      %1969 = vmatpush1.bf16.msra.mxu0 0
      %1970 = vmatprep.subr.bf16.mxu0 0
      %1971 = vmatpush1.bf16.msra.mxu0 0
      %1972 = vmatprep.mubr.bf16.mxu0 %v1932
      %1973 = vmatmul.mubr.bf16.gmra.mrb[0].mxu0 %v1925
      %v1974 = vpop.f32.mrb[0].mxu0
      %v1975 = vadd.f32 0.0, %v1974
      %v1976 = vpop.f32.mrb[0].mxu0
      %v1977 = vpop.f32.mrb[0].mxu0
      %v1978 = vadd.f32 0.0, %v1977
      %v1979 = vpop.f32.mrb[0].mxu0
      %1980 = vmatprep.mubr.bf16.mxu0 %v1935
      %1981 = vmatmul.mubr.bf16.gmra.mrb[0].mxu0 %v1927
      %v1982 = vpop.f32.mrb[0].mxu0
      %v1983 = vadd.f32 0.0, %v1982
      %v1984 = vpop.f32.mrb[0].mxu0
      %v1985 = vpop.f32.mrb[0].mxu0
      %v1986 = vadd.f32 0.0, %v1985
      %v1987 = vpop.f32.mrb[0].mxu0
      %1988 = vmatprep.mubr.bf16.mxu0 %v1938
      %1989 = vmatmul.mubr.bf16.gmra.mrb[0].mxu0 %v1929
      %v1990 = vpop.f32.mrb[0].mxu0
      %v1991 = vadd.f32 0.0, %v1990
      %v1992 = vpop.f32.mrb[0].mxu0
      %v1993 = vpop.f32.mrb[0].mxu0
      %v1994 = vadd.f32 0.0, %v1993
      %v1995 = vpop.f32.mrb[0].mxu0
      %1996 = vdwg.mxu0
      %v1997 = vadd.f32 %v1889, %v1975
      %v1998 = vadd.f32 %v1890, %v1978
      %v1999 = vadd.f32 %v1891, %v1983
      %v2000 = vadd.f32 %v1892, %v1986
      %v2001 = vadd.f32 %v1893, %v1991
      %v2002 = vadd.f32 %v1894, %v1994
      %s2003 = scalar_lea.vmem [#allocation3], 72
      %v2004 = vld [vmem:[%s2003] sm:$0xff]
      %v2005 = vld [vmem:[%s2003 + $0x8] sm:$0xff]
      %v2006 = vld [vmem:[%s2003 + $0x10] sm:$0xff]
      %v2007 = vld [vmem:[%s2003 + $0x18] sm:$0xff]
      %v2008 = vld [vmem:[%s2003 + $0x20] sm:$0xff]
      %v2009 = vld [vmem:[%s2003 + $0x28] sm:$0xff]
      %v2010 = vld [vmem:[%s2003 + $0x30] sm:$0xff]
      %v2011 = vld [vmem:[%s2003 + $0x38] sm:$0xff]
      %v2012 = vld [vmem:[%s2003 + $0x40] sm:$0xff]
      %s2013 = scalar_lea.vmem [#allocation4], 72
      %v2014 = vld [vmem:[%s2013] sm:$0xff]
      %v2015 = vld [vmem:[%s2013 + $0x8] sm:$0xff]
      %v2016 = vld [vmem:[%s2013 + $0x10] sm:$0xff]
      %v2017 = vld [vmem:[%s2013 + $0x18] sm:$0xff]
      %v2018 = vld [vmem:[%s2013 + $0x20] sm:$0xff]
      %v2019 = vld [vmem:[%s2013 + $0x28] sm:$0xff]
      %v2020 = vld [vmem:[%s2013 + $0x30] sm:$0xff]
      %v2021 = vld [vmem:[%s2013 + $0x38] sm:$0xff]
      %v2022 = vld [vmem:[%s2013 + $0x40] sm:$0xff]
      %2023 = vmatprep.subr.bf16.mxu0 0
      %2024 = vmatpush1.bf16.xpose.msra.mxu0 %v2004
      %2025 = vmatprep.subr.bf16.mxu0 0
      %2026 = vmatpush1.bf16.xpose.msra.mxu0 %v2005
      %2027 = vmatprep.subr.bf16.mxu0 0
      %2028 = vmatpush1.bf16.xpose.msra.mxu0 %v2006
      %2029 = vmatprep.subr.bf16.mxu0 0
      %2030 = vmatpush1.bf16.xpose.msra.mxu0 %v2007
      %2031 = vmatprep.subr.bf16.mxu0 0
      %2032 = vmatpush1.bf16.xpose.msra.mxu0 %v2008
      %2033 = vmatprep.subr.bf16.mxu0 0
      %2034 = vmatpush1.bf16.xpose.msra.mxu0 %v2009
      %2035 = vmatprep.subr.bf16.mxu0 0
      %2036 = vmatpush1.bf16.xpose.msra.mxu0 %v2010
      %2037 = vmatprep.subr.bf16.mxu0 0
      %2038 = vmatpush1.bf16.xpose.msra.mxu0 %v2011
      %2039 = vmatprep.subr.bf16.mxu0 0
      %2040 = vmatpush1.bf16.xpose.msra.mxu0 %v2012
      %2041 = vmatprep.subr.bf16.mxu0 0
      %2042 = vmatpush1.bf16.xpose.msra.mxu0 0
      %2043 = vmatprep.subr.bf16.mxu0 0
      %2044 = vmatpush1.bf16.xpose.msra.mxu0 0
      %2045 = vmatprep.subr.bf16.mxu0 0
      %2046 = vmatpush1.bf16.xpose.msra.mxu0 0
      %2047 = vmatprep.subr.bf16.mxu0 0
      %2048 = vmatpush1.bf16.xpose.msra.mxu0 0
      %2049 = vmatprep.subr.bf16.mxu0 0
      %2050 = vmatpush1.bf16.xpose.msra.mxu0 0
      %2051 = vmatprep.subr.bf16.mxu0 0
      %2052 = vmatpush1.bf16.xpose.msra.mxu0 0
      %2053 = vmatprep.subr.bf16.mxu0 0
      %2054 = vmatpush1.bf16.xpose.msra.mxu0 0
      %2055 = vmatprep.mubr.bf16.mxu0 0
      %2056 = vmatmul.mubr.bf16.gmra.mrb[0].mxu0 %v1726
      %v2057 = vpop.f32.mrb[0].mxu0
      %v2058 = vadd.f32 0.0, %v2057
      %v2059 = vpop.f32.mrb[0].mxu0
      %v2060 = vadd.f32 0.0, %v2059
      %v2061 = vpop.f32.mrb[0].mxu0
      %v2062 = vadd.f32 0.0, %v2061
      %v2063 = vpop.f32.mrb[0].mxu0
      %v2064 = vadd.f32 0.0, %v2063
      %2065 = vmatprep.mubr.bf16.mxu0 0
      %2066 = vmatmul.mubr.bf16.gmra.mrb[0].mxu0 %v1727
      %v2067 = vpop.f32.mrb[0].mxu0
      %v2068 = vadd.f32 0.0, %v2067
      %v2069 = vpop.f32.mrb[0].mxu0
      %v2070 = vadd.f32 0.0, %v2069
      %v2071 = vpop.f32.mrb[0].mxu0
      %v2072 = vadd.f32 0.0, %v2071
      %v2073 = vpop.f32.mrb[0].mxu0
      %v2074 = vadd.f32 0.0, %v2073
      %2075 = vmatprep.mubr.bf16.mxu0 0
      %2076 = vmatmul.mubr.bf16.gmra.mrb[0].mxu0 %v1728
      %v2077 = vpop.f32.mrb[0].mxu0
      %v2078 = vadd.f32 0.0, %v2077
      %v2079 = vpop.f32.mrb[0].mxu0
      %v2080 = vadd.f32 0.0, %v2079
      %v2081 = vpop.f32.mrb[0].mxu0
      %v2082 = vadd.f32 0.0, %v2081
      %v2083 = vpop.f32.mrb[0].mxu0
      %v2084 = vadd.f32 0.0, %v2083
      %2085 = vdwg.mxu0
      %v2086 = vsel %vm1810, %v2060, -inf
      %v2087 = vmax.f32 %v2058, %v2086
      %2088 = vmax.xlane.f32.xlu0 %v2087
      %v2089 = vpop.xlane.xlu0 %2088
      %v2090 = vsel %vm1810, %v2064, -inf
      %v2091 = vmax.f32 %v2062, %v2090
      %2092 = vmax.xlane.f32.xlu0 %v2091
      %v2093 = vpop.xlane.xlu0 %2092
      %v2094 = vsel %vm1810, %v2070, -inf
      %v2095 = vmax.f32 %v2068, %v2094
      %2096 = vmax.xlane.f32.xlu0 %v2095
      %v2097 = vpop.xlane.xlu0 %2096
      %v2098 = vsel %vm1810, %v2074, -inf
      %v2099 = vmax.f32 %v2072, %v2098
      %2100 = vmax.xlane.f32.xlu0 %v2099
      %v2101 = vpop.xlane.xlu0 %2100
      %v2102 = vsel %vm1810, %v2080, -inf
      %v2103 = vmax.f32 %v2078, %v2102
      %2104 = vmax.xlane.f32.xlu0 %v2103
      %v2105 = vpop.xlane.xlu0 %2104
      %v2106 = vsel %vm1810, %v2084, -inf
      %v2107 = vmax.f32 %v2082, %v2106
      %2108 = vmax.xlane.f32.xlu0 %v2107
      %v2109 = vpop.xlane.xlu0 %2108
      %v2110 = vmax.f32 %v1814, %v2089
      %v2111 = vmax.f32 %v1818, %v2093
      %v2112 = vmax.f32 %v1822, %v2097
      %v2113 = vmax.f32 %v1826, %v2101
      %v2114 = vmax.f32 %v1830, %v2105
      %v2115 = vmax.f32 %v1834, %v2109
      %v2116 = vsub.f32 %v1814, %v2110
      %v2117 = vsub.f32 %v1818, %v2111
      %v2118 = vsub.f32 %v1822, %v2112
      %v2119 = vsub.f32 %v1826, %v2113
      %v2120 = vsub.f32 %v1830, %v2114
      %v2121 = vsub.f32 %v1834, %v2115
      %v2122 = vmul.f32 %v2116, 1.442695
      %v2123 = vpow.pop %v2122
      %v2124 = vmul.f32 %v2117, 1.442695
      %v2125 = vpow.pop %v2124
      %v2126 = vmul.f32 %v2118, 1.442695
      %v2127 = vpow.pop %v2126
      %v2128 = vmul.f32 %v2119, 1.442695
      %v2129 = vpow.pop %v2128
      %v2130 = vmul.f32 %v2120, 1.442695
      %v2131 = vpow.pop %v2130
      %v2132 = vmul.f32 %v2121, 1.442695
      %v2133 = vpow.pop %v2132
      %v2134 = vsub.f32 %v2058, %v2110
      %v2135 = vsub.f32 %v2060, %v2110
      %v2136 = vsub.f32 %v2062, %v2111
      %v2137 = vsub.f32 %v2064, %v2111
      %v2138 = vsub.f32 %v2068, %v2112
      %v2139 = vsub.f32 %v2070, %v2112
      %v2140 = vsub.f32 %v2072, %v2113
      %v2141 = vsub.f32 %v2074, %v2113
      %v2142 = vsub.f32 %v2078, %v2114
      %v2143 = vsub.f32 %v2080, %v2114
      %v2144 = vsub.f32 %v2082, %v2115
      %v2145 = vsub.f32 %v2084, %v2115
      %v2146 = vmul.f32 %v2134, 1.442695
      %v2147 = vpow.pop %v2146
      %v2148 = vmul.f32 %v2135, 1.442695
      %v2149 = vpow.pop %v2148
      %v2150 = vmul.f32 %v2136, 1.442695
      %v2151 = vpow.pop %v2150
      %v2152 = vmul.f32 %v2137, 1.442695
      %v2153 = vpow.pop %v2152
      %v2154 = vmul.f32 %v2138, 1.442695
      %v2155 = vpow.pop %v2154
      %v2156 = vmul.f32 %v2139, 1.442695
      %v2157 = vpow.pop %v2156
      %v2158 = vmul.f32 %v2140, 1.442695
      %v2159 = vpow.pop %v2158
      %v2160 = vmul.f32 %v2141, 1.442695
      %v2161 = vpow.pop %v2160
      %v2162 = vmul.f32 %v2142, 1.442695
      %v2163 = vpow.pop %v2162
      %v2164 = vmul.f32 %v2143, 1.442695
      %v2165 = vpow.pop %v2164
      %v2166 = vmul.f32 %v2144, 1.442695
      %v2167 = vpow.pop %v2166
      %v2168 = vmul.f32 %v2145, 1.442695
      %v2169 = vpow.pop %v2168
      %v2170 = vmul.f32 %v2123, %v1919
      %v2171 = vmul.f32 %v2125, %v1920
      %v2172 = vmul.f32 %v2127, %v1921
      %v2173 = vmul.f32 %v2129, %v1922
      %v2174 = vmul.f32 %v2131, %v1923
      %v2175 = vmul.f32 %v2133, %v1924
      %v2176 = vsel %vm1810, %v2149, 0.0
      %v2177 = vadd.f32 %v2147, %v2176
      %2178 = vadd.xlane.f32.xlu0 %v2177
      %v2179 = vpop.xlane.xlu0 %2178
      %v2180 = vsel %vm1810, %v2153, 0.0
      %v2181 = vadd.f32 %v2151, %v2180
      %2182 = vadd.xlane.f32.xlu0 %v2181
      %v2183 = vpop.xlane.xlu0 %2182
      %v2184 = vsel %vm1810, %v2157, 0.0
      %v2185 = vadd.f32 %v2155, %v2184
      %2186 = vadd.xlane.f32.xlu0 %v2185
      %v2187 = vpop.xlane.xlu0 %2186
      %v2188 = vsel %vm1810, %v2161, 0.0
      %v2189 = vadd.f32 %v2159, %v2188
      %2190 = vadd.xlane.f32.xlu0 %v2189
      %v2191 = vpop.xlane.xlu0 %2190
      %v2192 = vsel %vm1810, %v2165, 0.0
      %v2193 = vadd.f32 %v2163, %v2192
      %2194 = vadd.xlane.f32.xlu0 %v2193
      %v2195 = vpop.xlane.xlu0 %2194
      %v2196 = vsel %vm1810, %v2169, 0.0
      %v2197 = vadd.f32 %v2167, %v2196
      %2198 = vadd.xlane.f32.xlu0 %v2197
      %v2199 = vpop.xlane.xlu0 %2198
      %v2200 = vadd.f32 %v2170, %v2179
      %v2201 = vadd.f32 %v2171, %v2183
      %v2202 = vadd.f32 %v2172, %v2187
      %v2203 = vadd.f32 %v2173, %v2191
      %v2204 = vadd.f32 %v2174, %v2195
      %v2205 = vadd.f32 %v2175, %v2199
      %v2206 = vmul.f32 %v2123, %v1997
      %v2207 = vmul.f32 %v2125, %v1998
      %v2208 = vmul.f32 %v2127, %v1999
      %v2209 = vmul.f32 %v2129, %v2000
      %v2210 = vmul.f32 %v2131, %v2001
      %v2211 = vmul.f32 %v2133, %v2002
      %v2212 = vpack.c.bf16 %v2151, %v2147
      %v2213 = vpack.c.bf16 %v2153, %v2149
      %v2214 = vpack.c.bf16 %v2159, %v2155
      %v2215 = vpack.c.bf16 %v2161, %v2157
      %v2216 = vpack.c.bf16 %v2167, %v2163
      %v2217 = vpack.c.bf16 %v2169, %v2165
      %v2219 = vsel %vm1810, %v2213, 0
      %v2222 = vsel %vm1810, %v2215, 0
      %v2225 = vsel %vm1810, %v2217, 0
      %2227 = vmatprep.subr.bf16.mxu0 0
      %2228 = vmatpush1.bf16.msra.mxu0 %v2014
      %2229 = vmatprep.subr.bf16.mxu0 0
      %2230 = vmatpush1.bf16.msra.mxu0 %v2015
      %2231 = vmatprep.subr.bf16.mxu0 0
      %2232 = vmatpush1.bf16.msra.mxu0 %v2016
      %2233 = vmatprep.subr.bf16.mxu0 0
      %2234 = vmatpush1.bf16.msra.mxu0 %v2017
      %2235 = vmatprep.subr.bf16.mxu0 0
      %2236 = vmatpush1.bf16.msra.mxu0 %v2018
      %2237 = vmatprep.subr.bf16.mxu0 0
      %2238 = vmatpush1.bf16.msra.mxu0 %v2019
      %2239 = vmatprep.subr.bf16.mxu0 0
      %2240 = vmatpush1.bf16.msra.mxu0 %v2020
      %2241 = vmatprep.subr.bf16.mxu0 0
      %2242 = vmatpush1.bf16.msra.mxu0 %v2021
      %2243 = vmatprep.subr.bf16.mxu0 0
      %2244 = vmatpush1.bf16.msra.mxu0 %v2022
      %2245 = vmatprep.subr.bf16.mxu0 0
      %2246 = vmatpush1.bf16.msra.mxu0 0
      %2247 = vmatprep.subr.bf16.mxu0 0
      %2248 = vmatpush1.bf16.msra.mxu0 0
      %2249 = vmatprep.subr.bf16.mxu0 0
      %2250 = vmatpush1.bf16.msra.mxu0 0
      %2251 = vmatprep.subr.bf16.mxu0 0
      %2252 = vmatpush1.bf16.msra.mxu0 0
      %2253 = vmatprep.subr.bf16.mxu0 0
      %2254 = vmatpush1.bf16.msra.mxu0 0
      %2255 = vmatprep.subr.bf16.mxu0 0
      %2256 = vmatpush1.bf16.msra.mxu0 0
      %2257 = vmatprep.subr.bf16.mxu0 0
      %2258 = vmatpush1.bf16.msra.mxu0 0
      %2259 = vmatprep.mubr.bf16.mxu0 %v2219
      %2260 = vmatmul.mubr.bf16.gmra.mrb[0].mxu0 %v2212
      %v2261 = vpop.f32.mrb[0].mxu0
      %v2262 = vadd.f32 0.0, %v2261
      %v2263 = vpop.f32.mrb[0].mxu0
      %v2264 = vpop.f32.mrb[0].mxu0
      %v2265 = vadd.f32 0.0, %v2264
      %v2266 = vpop.f32.mrb[0].mxu0
      %2267 = vmatprep.mubr.bf16.mxu0 %v2222
      %2268 = vmatmul.mubr.bf16.gmra.mrb[0].mxu0 %v2214
      %v2269 = vpop.f32.mrb[0].mxu0
      %v2270 = vadd.f32 0.0, %v2269
      %v2271 = vpop.f32.mrb[0].mxu0
      %v2272 = vpop.f32.mrb[0].mxu0
      %v2273 = vadd.f32 0.0, %v2272
      %v2274 = vpop.f32.mrb[0].mxu0
      %2275 = vmatprep.mubr.bf16.mxu0 %v2225
      %2276 = vmatmul.mubr.bf16.gmra.mrb[0].mxu0 %v2216
      %v2277 = vpop.f32.mrb[0].mxu0
      %v2278 = vadd.f32 0.0, %v2277
      %v2279 = vpop.f32.mrb[0].mxu0
      %v2280 = vpop.f32.mrb[0].mxu0
      %v2281 = vadd.f32 0.0, %v2280
      %v2282 = vpop.f32.mrb[0].mxu0
      %2283 = vdwg.mxu0
      %v2284 = vadd.f32 %v2206, %v2262
      %v2285 = vadd.f32 %v2207, %v2265
      %v2286 = vadd.f32 %v2208, %v2270
      %v2287 = vadd.f32 %v2209, %v2273
      %v2288 = vadd.f32 %v2210, %v2278
      %v2289 = vadd.f32 %v2211, %v2281
      %v2290 = vrcp.pop %v2200
      %v2291 = vrcp.pop %v2201
      %v2292 = vrcp.pop %v2202
      %v2293 = vrcp.pop %v2203
      %v2294 = vrcp.pop %v2204
      %v2295 = vrcp.pop %v2205
      %v2296 = vmul.f32 %v2284, %v2290
      %v2297 = vmul.f32 %v2285, %v2291
      %v2298 = vmul.f32 %v2286, %v2292
      %v2299 = vmul.f32 %v2287, %v2293
      %v2300 = vmul.f32 %v2288, %v2294
      %v2301 = vmul.f32 %v2289, %v2295
      %v2302 = vpack.c.bf16 %v2297, %v2296
      %v2303 = vpack.c.bf16 %v2299, %v2298
      %v2304 = vpack.c.bf16 %v2301, %v2300
      %v2305 = vld [vmem:[%s9] sm:$0xf]
      %v2306 = vld [vmem:[%s9 + $0x4] sm:$0xf]
      %v2307 = vld [vmem:[%s9 + $0x8] sm:$0xf]
      %v2308 = vld [vmem:[%s9 + $0xc] sm:$0xf]
      %v2309 = vld [vmem:[%s9 + $0x10] sm:$0xf]
      %v2310 = vld [vmem:[%s9 + $0x14] sm:$0xf]
      %v2311 = vld [vmem:[%s9 + $0x18] sm:$0xf]
      %v2312 = vld [vmem:[%s9 + $0x1c] sm:$0xf]
      %v2313 = vld [vmem:[%s9 + $0x20] sm:$0xf]
      %v2314 = vld [vmem:[%s9 + $0x24] sm:$0xf]
      %v2315 = vld [vmem:[%s9 + $0x28] sm:$0xf]
      %v2316 = vld [vmem:[%s9 + $0x2c] sm:$0xf]
      %v2317 = vld [vmem:[%s9 + $0x30] sm:$0xf]
      %v2318 = vld [vmem:[%s9 + $0x34] sm:$0xf]
      %v2319 = vld [vmem:[%s9 + $0x38] sm:$0xf]
      %v2320 = vld [vmem:[%s9 + $0x3c] sm:$0xf]
      %v2337 = vunpack.c.l.b16 %v2305
      %v2338 = vunpack.c.l.b16 %v2306
      %v2339 = vunpack.c.l.b16 %v2307
      %v2340 = vunpack.c.l.b16 %v2308
      %v2341 = vunpack.c.l.b16 %v2309
      %v2342 = vunpack.c.l.b16 %v2310
      %v2343 = vunpack.c.l.b16 %v2311
      %v2344 = vunpack.c.l.b16 %v2312
      %v2345 = vunpack.c.l.b16 %v2313
      %v2346 = vunpack.c.l.b16 %v2314
      %v2347 = vunpack.c.l.b16 %v2315
      %v2348 = vunpack.c.l.b16 %v2316
      %v2349 = vunpack.c.l.b16 %v2317
      %v2350 = vunpack.c.l.b16 %v2318
      %v2351 = vunpack.c.l.b16 %v2319
      %v2352 = vunpack.c.l.b16 %v2320
      %v2353 = vpack.c.b16 %v2338, %v2337
      %v2354 = vpack.c.b16 %v2340, %v2339
      %v2355 = vpack.c.b16 %v2342, %v2341
      %v2356 = vpack.c.b16 %v2344, %v2343
      %v2357 = vpack.c.b16 %v2346, %v2345
      %v2358 = vpack.c.b16 %v2348, %v2347
      %v2359 = vpack.c.b16 %v2350, %v2349
      %v2360 = vpack.c.b16 %v2352, %v2351
      %2369 = vmatprep.subr.bf16.mxu0 0
      %2370 = vmatpush1.bf16.msra.mxu0 %v2353
      %2371 = vmatprep.subr.bf16.mxu0 0
      %2372 = vmatpush1.bf16.msra.mxu0 %v2354
      %2373 = vmatprep.subr.bf16.mxu0 0
      %2374 = vmatpush1.bf16.msra.mxu0 %v2355
      %2375 = vmatprep.subr.bf16.mxu0 0
      %2376 = vmatpush1.bf16.msra.mxu0 %v2356
      %2377 = vmatprep.subr.bf16.mxu0 0
      %2378 = vmatpush1.bf16.msra.mxu0 %v2357
      %2379 = vmatprep.subr.bf16.mxu0 0
      %2380 = vmatpush1.bf16.msra.mxu0 %v2358
      %2381 = vmatprep.subr.bf16.mxu0 0
      %2382 = vmatpush1.bf16.msra.mxu0 %v2359
      %2383 = vmatprep.subr.bf16.mxu0 0
      %2384 = vmatpush1.bf16.msra.mxu0 %v2360
      %2385 = vmatprep.subr.bf16.mxu0 0
      %2386 = vmatpush1.bf16.msra.mxu0 0
      %2387 = vmatprep.subr.bf16.mxu0 0
      %2388 = vmatpush1.bf16.msra.mxu0 0
      %2389 = vmatprep.subr.bf16.mxu0 0
      %2390 = vmatpush1.bf16.msra.mxu0 0
      %2391 = vmatprep.subr.bf16.mxu0 0
      %2392 = vmatpush1.bf16.msra.mxu0 0
      %2393 = vmatprep.subr.bf16.mxu0 0
      %2394 = vmatpush1.bf16.msra.mxu0 0
      %2395 = vmatprep.subr.bf16.mxu0 0
      %2396 = vmatpush1.bf16.msra.mxu0 0
      %2397 = vmatprep.subr.bf16.mxu0 0
      %2398 = vmatpush1.bf16.msra.mxu0 0
      %2399 = vmatprep.subr.bf16.mxu0 0
      %2400 = vmatpush1.bf16.msra.mxu0 0
      %2401 = vmatprep.mubr.bf16.mxu0 0
      %2402 = vmatmul.mubr.bf16.gmra.mrb[0].mxu0 %v2302
      %v2403 = vpop.f32.mrb[0].mxu0
      %v2404 = vadd.f32 0.0, %v2403
      %v2405 = vpop.f32.mrb[0].mxu0
      %v2406 = vpop.f32.mrb[0].mxu0
      %v2407 = vadd.f32 0.0, %v2406
      %v2408 = vpop.f32.mrb[0].mxu0
      %2409 = vmatprep.mubr.bf16.mxu0 0
      %2410 = vmatmul.mubr.bf16.gmra.mrb[0].mxu0 %v2303
      %v2411 = vpop.f32.mrb[0].mxu0
      %v2412 = vadd.f32 0.0, %v2411
      %v2413 = vpop.f32.mrb[0].mxu0
      %v2414 = vpop.f32.mrb[0].mxu0
      %v2415 = vadd.f32 0.0, %v2414
      %v2416 = vpop.f32.mrb[0].mxu0
      %2417 = vmatprep.mubr.bf16.mxu0 0
      %2418 = vmatmul.mubr.bf16.gmra.mrb[0].mxu0 %v2304
      %v2419 = vpop.f32.mrb[0].mxu0
      %v2420 = vadd.f32 0.0, %v2419
      %v2421 = vpop.f32.mrb[0].mxu0
      %v2422 = vpop.f32.mrb[0].mxu0
      %v2423 = vadd.f32 0.0, %v2422
      %v2424 = vpop.f32.mrb[0].mxu0
      %2425 = vdwg.mxu0
      %v2426 = vadd.f32 %v1596, %v2404
      %v2427 = vadd.f32 %v1597, %v2407
      %v2428 = vadd.f32 %v1598, %v2412
      %v2429 = vadd.f32 %v1599, %v2415
      %v2430 = vadd.f32 %v1600, %v2420
      %v2431 = vadd.f32 %v1601, %v2423
      %v2432 = vpack.c.bf16 %v2427, %v2426
      %v2433 = vpack.c.bf16 %v2429, %v2428
      %v2434 = vpack.c.bf16 %v2431, %v2430
      %v2435 = vld [vmem:[%s10] sm:$0xf]
      %v2436 = vld [vmem:[%s10 + $0x4] sm:$0xf]
      %v2437 = vld [vmem:[%s10 + $0x8] sm:$0xf]
      %v2438 = vld [vmem:[%s10 + $0xc] sm:$0xf]
      %v2439 = vld [vmem:[%s10 + $0x10] sm:$0xf]
      %v2440 = vld [vmem:[%s10 + $0x14] sm:$0xf]
      %v2441 = vld [vmem:[%s10 + $0x18] sm:$0xf]
      %v2442 = vld [vmem:[%s10 + $0x1c] sm:$0xf]
      %v2443 = vld [vmem:[%s10 + $0x20] sm:$0xf]
      %v2444 = vld [vmem:[%s10 + $0x24] sm:$0xf]
      %v2445 = vld [vmem:[%s10 + $0x28] sm:$0xf]
      %v2446 = vld [vmem:[%s10 + $0x2c] sm:$0xf]
      %v2447 = vld [vmem:[%s10 + $0x30] sm:$0xf]
      %v2448 = vld [vmem:[%s10 + $0x34] sm:$0xf]
      %v2449 = vld [vmem:[%s10 + $0x38] sm:$0xf]
      %v2450 = vld [vmem:[%s10 + $0x3c] sm:$0xf]
      %v2467 = vunpack.c.l.b16 %v2435
      %v2468 = vunpack.c.l.b16 %v2436
      %v2469 = vunpack.c.l.b16 %v2437
      %v2470 = vunpack.c.l.b16 %v2438
      %v2471 = vunpack.c.l.b16 %v2439
      %v2472 = vunpack.c.l.b16 %v2440
      %v2473 = vunpack.c.l.b16 %v2441
      %v2474 = vunpack.c.l.b16 %v2442
      %v2475 = vunpack.c.l.b16 %v2443
      %v2476 = vunpack.c.l.b16 %v2444
      %v2477 = vunpack.c.l.b16 %v2445
      %v2478 = vunpack.c.l.b16 %v2446
      %v2479 = vunpack.c.l.b16 %v2447
      %v2480 = vunpack.c.l.b16 %v2448
      %v2481 = vunpack.c.l.b16 %v2449
      %v2482 = vunpack.c.l.b16 %v2450
      %v2483 = vpack.c.b16 %v2468, %v2467
      %v2484 = vpack.c.b16 %v2470, %v2469
      %v2485 = vpack.c.b16 %v2472, %v2471
      %v2486 = vpack.c.b16 %v2474, %v2473
      %v2487 = vpack.c.b16 %v2476, %v2475
      %v2488 = vpack.c.b16 %v2478, %v2477
      %v2489 = vpack.c.b16 %v2480, %v2479
      %v2490 = vpack.c.b16 %v2482, %v2481
      %2499 = vmatprep.subr.bf16.mxu0 0
      %2500 = vmatpush1.bf16.msra.mxu0 %v2483
      %2501 = vmatprep.subr.bf16.mxu0 0
      %2502 = vmatpush1.bf16.msra.mxu0 %v2484
      %2503 = vmatprep.subr.bf16.mxu0 0
      %2504 = vmatpush1.bf16.msra.mxu0 %v2485
      %2505 = vmatprep.subr.bf16.mxu0 0
      %2506 = vmatpush1.bf16.msra.mxu0 %v2486
      %2507 = vmatprep.subr.bf16.mxu0 0
      %2508 = vmatpush1.bf16.msra.mxu0 %v2487
      %2509 = vmatprep.subr.bf16.mxu0 0
      %2510 = vmatpush1.bf16.msra.mxu0 %v2488
      %2511 = vmatprep.subr.bf16.mxu0 0
      %2512 = vmatpush1.bf16.msra.mxu0 %v2489
      %2513 = vmatprep.subr.bf16.mxu0 0
      %2514 = vmatpush1.bf16.msra.mxu0 %v2490
      %2515 = vmatprep.subr.bf16.mxu0 0
      %2516 = vmatpush1.bf16.msra.mxu0 0
      %2517 = vmatprep.subr.bf16.mxu0 0
      %2518 = vmatpush1.bf16.msra.mxu0 0
      %2519 = vmatprep.subr.bf16.mxu0 0
      %2520 = vmatpush1.bf16.msra.mxu0 0
      %2521 = vmatprep.subr.bf16.mxu0 0
      %2522 = vmatpush1.bf16.msra.mxu0 0
      %2523 = vmatprep.subr.bf16.mxu0 0
      %2524 = vmatpush1.bf16.msra.mxu0 0
      %2525 = vmatprep.subr.bf16.mxu0 0
      %2526 = vmatpush1.bf16.msra.mxu0 0
      %2527 = vmatprep.subr.bf16.mxu0 0
      %2528 = vmatpush1.bf16.msra.mxu0 0
      %2529 = vmatprep.subr.bf16.mxu0 0
      %2530 = vmatpush1.bf16.msra.mxu0 0
      %2531 = vmatprep.mubr.bf16.mxu0 0
      %2532 = vmatmul.mubr.bf16.gmra.mrb[0].mxu0 %v2432
      %v2533 = vpop.f32.mrb[0].mxu0
      %v2534 = vadd.f32 0.0, %v2533
      %v2535 = vpop.f32.mrb[0].mxu0
      %v2536 = vpop.f32.mrb[0].mxu0
      %v2537 = vadd.f32 0.0, %v2536
      %v2538 = vpop.f32.mrb[0].mxu0
      %2539 = vmatprep.mubr.bf16.mxu0 0
      %2540 = vmatmul.mubr.bf16.gmra.mrb[0].mxu0 %v2433
      %v2541 = vpop.f32.mrb[0].mxu0
      %v2542 = vadd.f32 0.0, %v2541
      %v2543 = vpop.f32.mrb[0].mxu0
      %v2544 = vpop.f32.mrb[0].mxu0
      %v2545 = vadd.f32 0.0, %v2544
      %v2546 = vpop.f32.mrb[0].mxu0
      %2547 = vmatprep.mubr.bf16.mxu0 0
      %2548 = vmatmul.mubr.bf16.gmra.mrb[0].mxu0 %v2434
      %v2549 = vpop.f32.mrb[0].mxu0
      %v2550 = vadd.f32 0.0, %v2549
      %v2551 = vpop.f32.mrb[0].mxu0
      %v2552 = vpop.f32.mrb[0].mxu0
      %v2553 = vadd.f32 0.0, %v2552
      %v2554 = vpop.f32.mrb[0].mxu0
      %2555 = vdwg.mxu0
      %v2556 = vpack.c.bf16 %v2537, %v2534
      %v2557 = vpack.c.bf16 %v2545, %v2542
      %v2558 = vpack.c.bf16 %v2553, %v2550
      %v2559 = vld [vmem:[%s530] sm:$0xf]
      %2560 = vmatprep.subr.bf16.mxu0 0
      %2561 = vmatpush1.bf16.xpose.msra.mxu0 %v2559
      %2562 = vmatprep.subr.bf16.mxu0 0
      %2563 = vmatpush1.bf16.xpose.msra.mxu0 0
      %2564 = vmatprep.subr.bf16.mxu0 0
      %2565 = vmatpush1.bf16.xpose.msra.mxu0 0
      %2566 = vmatprep.subr.bf16.mxu0 0
      %2567 = vmatpush1.bf16.xpose.msra.mxu0 0
      %2568 = vmatprep.subr.bf16.mxu0 0
      %2569 = vmatpush1.bf16.xpose.msra.mxu0 0
      %2570 = vmatprep.subr.bf16.mxu0 0
      %2571 = vmatpush1.bf16.xpose.msra.mxu0 0
      %2572 = vmatprep.subr.bf16.mxu0 0
      %2573 = vmatpush1.bf16.xpose.msra.mxu0 0
      %2574 = vmatprep.subr.bf16.mxu0 0
      %2575 = vmatpush1.bf16.xpose.msra.mxu0 0
      %2576 = vmatprep.subr.bf16.mxu0 0
      %2577 = vmatpush1.bf16.xpose.msra.mxu0 0
      %2578 = vmatprep.subr.bf16.mxu0 0
      %2579 = vmatpush1.bf16.xpose.msra.mxu0 0
      %2580 = vmatprep.subr.bf16.mxu0 0
      %2581 = vmatpush1.bf16.xpose.msra.mxu0 0
      %2582 = vmatprep.subr.bf16.mxu0 0
      %2583 = vmatpush1.bf16.xpose.msra.mxu0 0
      %2584 = vmatprep.subr.bf16.mxu0 0
      %2585 = vmatpush1.bf16.xpose.msra.mxu0 0
      %2586 = vmatprep.subr.bf16.mxu0 0
      %2587 = vmatpush1.bf16.xpose.msra.mxu0 0
      %2588 = vmatprep.subr.bf16.mxu0 0
      %2589 = vmatpush1.bf16.xpose.msra.mxu0 0
      %2590 = vmatprep.subr.bf16.mxu0 0
      %2591 = vmatpush1.bf16.xpose.msra.mxu0 0
      %2592 = vmatprep.mubr.bf16.mxu0 0
      %2593 = vmatmul.mubr.bf16.gmra.mrb[0].mxu0 %v2556
      %v2594 = vpop.f32.mrb[0].mxu0
      %v2595 = vadd.f32 0.0, %v2594
      %v2596 = vpop.f32.mrb[0].mxu0
      %v2597 = vpop.f32.mrb[0].mxu0
      %v2598 = vadd.f32 0.0, %v2597
      %v2599 = vpop.f32.mrb[0].mxu0
      %2600 = vmatprep.mubr.bf16.mxu0 0
      %2601 = vmatmul.mubr.bf16.gmra.mrb[0].mxu0 %v2557
      %v2602 = vpop.f32.mrb[0].mxu0
      %v2603 = vadd.f32 0.0, %v2602
      %v2604 = vpop.f32.mrb[0].mxu0
      %v2605 = vpop.f32.mrb[0].mxu0
      %v2606 = vadd.f32 0.0, %v2605
      %v2607 = vpop.f32.mrb[0].mxu0
      %2608 = vmatprep.mubr.bf16.mxu0 0
      %2609 = vmatmul.mubr.bf16.gmra.mrb[0].mxu0 %v2558
      %v2610 = vpop.f32.mrb[0].mxu0
      %v2611 = vadd.f32 0.0, %v2610
      %v2612 = vpop.f32.mrb[0].mxu0
      %v2613 = vpop.f32.mrb[0].mxu0
      %v2614 = vadd.f32 0.0, %v2613
      %v2615 = vpop.f32.mrb[0].mxu0
      %2616 = vdwg.mxu0
      %vm2617 = vcmask 64512
      %v2618 = vsel %vm2617, %v2595, -inf
      %2619 = vmax.xlane.f32.xlu0 %v2618
      %v2620 = vpop.xlane.xlu0 %2619
      %v2621 = vsel %vm2617, %v2598, -inf
      %2622 = vmax.xlane.f32.xlu0 %v2621
      %v2623 = vpop.xlane.xlu0 %2622
      %v2624 = vsel %vm2617, %v2603, -inf
      %2625 = vmax.xlane.f32.xlu0 %v2624
      %v2626 = vpop.xlane.xlu0 %2625
      %v2627 = vsel %vm2617, %v2606, -inf
      %2628 = vmax.xlane.f32.xlu0 %v2627
      %v2629 = vpop.xlane.xlu0 %2628
      %v2630 = vsel %vm2617, %v2611, -inf
      %2631 = vmax.xlane.f32.xlu0 %v2630
      %v2632 = vpop.xlane.xlu0 %2631
      %v2633 = vsel %vm2617, %v2614, -inf
      %2634 = vmax.xlane.f32.xlu0 %v2633
      %v2635 = vpop.xlane.xlu0 %2634
      %v2636 = vsub.f32 %v2595, %v2620
      %v2637 = vsub.f32 %v2598, %v2623
      %v2638 = vsub.f32 %v2603, %v2626
      %v2639 = vsub.f32 %v2606, %v2629
      %v2640 = vsub.f32 %v2611, %v2632
      %v2641 = vsub.f32 %v2614, %v2635
      %v2642 = vmul.f32 %v2636, 1.442695
      %v2643 = vpow.pop %v2642
      %v2644 = vmul.f32 %v2637, 1.442695
      %v2645 = vpow.pop %v2644
      %v2646 = vmul.f32 %v2638, 1.442695
      %v2647 = vpow.pop %v2646
      %v2648 = vmul.f32 %v2639, 1.442695
      %v2649 = vpow.pop %v2648
      %v2650 = vmul.f32 %v2640, 1.442695
      %v2651 = vpow.pop %v2650
      %v2652 = vmul.f32 %v2641, 1.442695
      %v2653 = vpow.pop %v2652
      %v2654 = vpack.c.bf16 %v2645, %v2643
      %v2655 = vpack.c.bf16 %v2649, %v2647
      %v2656 = vpack.c.bf16 %v2653, %v2651
      %v2657 = vld [vmem:[%s534] sm:$0xf]
      %v2659 = vsel %vm2617, %v2654, 0
      %v2662 = vsel %vm2617, %v2655, 0
      %v2665 = vsel %vm2617, %v2656, 0
      %vm2667 = vcmask 1043456
      %v2669 = vsel %vm2667, %v2657, 0
      %2671 = vmatprep.subr.bf16.mxu0 0
      %2672 = vmatpush1.bf16.msra.mxu0 %v2669
      %2673 = vmatprep.subr.bf16.mxu0 0
      %2674 = vmatpush1.bf16.msra.mxu0 0
      %2675 = vmatprep.subr.bf16.mxu0 0
      %2676 = vmatpush1.bf16.msra.mxu0 0
      %2677 = vmatprep.subr.bf16.mxu0 0
      %2678 = vmatpush1.bf16.msra.mxu0 0
      %2679 = vmatprep.subr.bf16.mxu0 0
      %2680 = vmatpush1.bf16.msra.mxu0 0
      %2681 = vmatprep.subr.bf16.mxu0 0
      %2682 = vmatpush1.bf16.msra.mxu0 0
      %2683 = vmatprep.subr.bf16.mxu0 0
      %2684 = vmatpush1.bf16.msra.mxu0 0
      %2685 = vmatprep.subr.bf16.mxu0 0
      %2686 = vmatpush1.bf16.msra.mxu0 0
      %2687 = vmatprep.subr.bf16.mxu0 0
      %2688 = vmatpush1.bf16.msra.mxu0 0
      %2689 = vmatprep.subr.bf16.mxu0 0
      %2690 = vmatpush1.bf16.msra.mxu0 0
      %2691 = vmatprep.subr.bf16.mxu0 0
      %2692 = vmatpush1.bf16.msra.mxu0 0
      %2693 = vmatprep.subr.bf16.mxu0 0
      %2694 = vmatpush1.bf16.msra.mxu0 0
      %2695 = vmatprep.subr.bf16.mxu0 0
      %2696 = vmatpush1.bf16.msra.mxu0 0
      %2697 = vmatprep.subr.bf16.mxu0 0
      %2698 = vmatpush1.bf16.msra.mxu0 0
      %2699 = vmatprep.subr.bf16.mxu0 0
      %2700 = vmatpush1.bf16.msra.mxu0 0
      %2701 = vmatprep.subr.bf16.mxu0 0
      %2702 = vmatpush1.bf16.msra.mxu0 0
      %2703 = vmatprep.mubr.bf16.mxu0 0
      %2704 = vmatmul.mubr.bf16.gmra.mrb[0].mxu0 %v2659
      %v2705 = vpop.f32.mrb[0].mxu0
      %v2706 = vadd.f32 0.0, %v2705
      %v2707 = vpop.f32.mrb[0].mxu0
      %v2708 = vpop.f32.mrb[0].mxu0
      %v2709 = vadd.f32 0.0, %v2708
      %v2710 = vpop.f32.mrb[0].mxu0
      %2711 = vmatprep.mubr.bf16.mxu0 0
      %2712 = vmatmul.mubr.bf16.gmra.mrb[0].mxu0 %v2662
      %v2713 = vpop.f32.mrb[0].mxu0
      %v2714 = vadd.f32 0.0, %v2713
      %v2715 = vpop.f32.mrb[0].mxu0
      %v2716 = vpop.f32.mrb[0].mxu0
      %v2717 = vadd.f32 0.0, %v2716
      %v2718 = vpop.f32.mrb[0].mxu0
      %2719 = vmatprep.mubr.bf16.mxu0 0
      %2720 = vmatmul.mubr.bf16.gmra.mrb[0].mxu0 %v2665
      %v2721 = vpop.f32.mrb[0].mxu0
      %v2722 = vadd.f32 0.0, %v2721
      %v2723 = vpop.f32.mrb[0].mxu0
      %v2724 = vpop.f32.mrb[0].mxu0
      %v2725 = vadd.f32 0.0, %v2724
      %v2726 = vpop.f32.mrb[0].mxu0
      %2727 = vdwg.mxu0
      %v2728 = vsel %vm2617, %v2643, 0.0
      %2729 = vadd.xlane.f32.xlu0 %v2728
      %v2730 = vpop.xlane.xlu0 %2729
      %v2731 = vsel %vm2617, %v2645, 0.0
      %2732 = vadd.xlane.f32.xlu0 %v2731
      %v2733 = vpop.xlane.xlu0 %2732
      %v2734 = vsel %vm2617, %v2647, 0.0
      %2735 = vadd.xlane.f32.xlu0 %v2734
      %v2736 = vpop.xlane.xlu0 %2735
      %v2737 = vsel %vm2617, %v2649, 0.0
      %2738 = vadd.xlane.f32.xlu0 %v2737
      %v2739 = vpop.xlane.xlu0 %2738
      %v2740 = vsel %vm2617, %v2651, 0.0
      %2741 = vadd.xlane.f32.xlu0 %v2740
      %v2742 = vpop.xlane.xlu0 %2741
      %v2743 = vsel %vm2617, %v2653, 0.0
      %2744 = vadd.xlane.f32.xlu0 %v2743
      %v2745 = vpop.xlane.xlu0 %2744
      %v2746 = vrcp.pop %v2730
      %v2747 = vrcp.pop %v2733
      %v2748 = vrcp.pop %v2736
      %v2749 = vrcp.pop %v2739
      %v2750 = vrcp.pop %v2742
      %v2751 = vrcp.pop %v2745
      %v2752 = vmul.f32 %v2706, %v2746
      %v2753 = vmul.f32 %v2709, %v2747
      %v2754 = vmul.f32 %v2714, %v2748
      %v2755 = vmul.f32 %v2717, %v2749
      %v2756 = vmul.f32 %v2722, %v2750
      %v2757 = vmul.f32 %v2725, %v2751
      %v2758 = vpack.c.bf16 %v2753, %v2752
      %v2759 = vpack.c.bf16 %v2755, %v2754
      %v2760 = vpack.c.bf16 %v2757, %v2756
      %v2761 = vld [vmem:[%s11] sm:$0xf]
      %v2762 = vld [vmem:[%s11 + $0x4] sm:$0xf]
      %v2763 = vld [vmem:[%s11 + $0x8] sm:$0xf]
      %v2764 = vld [vmem:[%s11 + $0xc] sm:$0xf]
      %v2765 = vld [vmem:[%s11 + $0x10] sm:$0xf]
      %v2766 = vld [vmem:[%s11 + $0x14] sm:$0xf]
      %v2767 = vld [vmem:[%s11 + $0x18] sm:$0xf]
      %v2768 = vld [vmem:[%s11 + $0x1c] sm:$0xf]
      %v2769 = vld [vmem:[%s11 + $0x20] sm:$0xf]
      %v2770 = vld [vmem:[%s11 + $0x24] sm:$0xf]
      %v2771 = vld [vmem:[%s11 + $0x28] sm:$0xf]
      %v2772 = vld [vmem:[%s11 + $0x2c] sm:$0xf]
      %v2773 = vld [vmem:[%s11 + $0x30] sm:$0xf]
      %v2774 = vld [vmem:[%s11 + $0x34] sm:$0xf]
      %v2775 = vld [vmem:[%s11 + $0x38] sm:$0xf]
      %v2776 = vld [vmem:[%s11 + $0x3c] sm:$0xf]
      %v2793 = vunpack.c.l.b16 %v2761
      %v2794 = vunpack.c.l.b16 %v2762
      %v2795 = vunpack.c.l.b16 %v2763
      %v2796 = vunpack.c.l.b16 %v2764
      %v2797 = vunpack.c.l.b16 %v2765
      %v2798 = vunpack.c.l.b16 %v2766
      %v2799 = vunpack.c.l.b16 %v2767
      %v2800 = vunpack.c.l.b16 %v2768
      %v2801 = vunpack.c.l.b16 %v2769
      %v2802 = vunpack.c.l.b16 %v2770
      %v2803 = vunpack.c.l.b16 %v2771
      %v2804 = vunpack.c.l.b16 %v2772
      %v2805 = vunpack.c.l.b16 %v2773
      %v2806 = vunpack.c.l.b16 %v2774
      %v2807 = vunpack.c.l.b16 %v2775
      %v2808 = vunpack.c.l.b16 %v2776
      %v2809 = vpack.c.b16 %v2794, %v2793
      %v2810 = vpack.c.b16 %v2796, %v2795
      %v2811 = vpack.c.b16 %v2798, %v2797
      %v2812 = vpack.c.b16 %v2800, %v2799
      %v2813 = vpack.c.b16 %v2802, %v2801
      %v2814 = vpack.c.b16 %v2804, %v2803
      %v2815 = vpack.c.b16 %v2806, %v2805
      %v2816 = vpack.c.b16 %v2808, %v2807
      %2825 = vmatprep.subr.bf16.mxu0 0
      %2826 = vmatpush1.bf16.msra.mxu0 %v2809
      %2827 = vmatprep.subr.bf16.mxu0 0
      %2828 = vmatpush1.bf16.msra.mxu0 %v2810
      %2829 = vmatprep.subr.bf16.mxu0 0
      %2830 = vmatpush1.bf16.msra.mxu0 %v2811
      %2831 = vmatprep.subr.bf16.mxu0 0
      %2832 = vmatpush1.bf16.msra.mxu0 %v2812
      %2833 = vmatprep.subr.bf16.mxu0 0
      %2834 = vmatpush1.bf16.msra.mxu0 %v2813
      %2835 = vmatprep.subr.bf16.mxu0 0
      %2836 = vmatpush1.bf16.msra.mxu0 %v2814
      %2837 = vmatprep.subr.bf16.mxu0 0
      %2838 = vmatpush1.bf16.msra.mxu0 %v2815
      %2839 = vmatprep.subr.bf16.mxu0 0
      %2840 = vmatpush1.bf16.msra.mxu0 %v2816
      %2841 = vmatprep.subr.bf16.mxu0 0
      %2842 = vmatpush1.bf16.msra.mxu0 0
      %2843 = vmatprep.subr.bf16.mxu0 0
      %2844 = vmatpush1.bf16.msra.mxu0 0
      %2845 = vmatprep.subr.bf16.mxu0 0
      %2846 = vmatpush1.bf16.msra.mxu0 0
      %2847 = vmatprep.subr.bf16.mxu0 0
      %2848 = vmatpush1.bf16.msra.mxu0 0
      %2849 = vmatprep.subr.bf16.mxu0 0
      %2850 = vmatpush1.bf16.msra.mxu0 0
      %2851 = vmatprep.subr.bf16.mxu0 0
      %2852 = vmatpush1.bf16.msra.mxu0 0
      %2853 = vmatprep.subr.bf16.mxu0 0
      %2854 = vmatpush1.bf16.msra.mxu0 0
      %2855 = vmatprep.subr.bf16.mxu0 0
      %2856 = vmatpush1.bf16.msra.mxu0 0
      %2857 = vmatprep.mubr.bf16.mxu0 0
      %2858 = vmatmul.mubr.bf16.gmra.mrb[0].mxu0 %v2758
      %v2859 = vpop.f32.mrb[0].mxu0
      %v2860 = vadd.f32 0.0, %v2859
      %v2861 = vpop.f32.mrb[0].mxu0
      %v2862 = vpop.f32.mrb[0].mxu0
      %v2863 = vadd.f32 0.0, %v2862
      %v2864 = vpop.f32.mrb[0].mxu0
      %2865 = vmatprep.mubr.bf16.mxu0 0
      %2866 = vmatmul.mubr.bf16.gmra.mrb[0].mxu0 %v2759
      %v2867 = vpop.f32.mrb[0].mxu0
      %v2868 = vadd.f32 0.0, %v2867
      %v2869 = vpop.f32.mrb[0].mxu0
      %v2870 = vpop.f32.mrb[0].mxu0
      %v2871 = vadd.f32 0.0, %v2870
      %v2872 = vpop.f32.mrb[0].mxu0
      %2873 = vmatprep.mubr.bf16.mxu0 0
      %2874 = vmatmul.mubr.bf16.gmra.mrb[0].mxu0 %v2760
      %v2875 = vpop.f32.mrb[0].mxu0
      %v2876 = vadd.f32 0.0, %v2875
      %v2877 = vpop.f32.mrb[0].mxu0
      %v2878 = vpop.f32.mrb[0].mxu0
      %v2879 = vadd.f32 0.0, %v2878
      %v2880 = vpop.f32.mrb[0].mxu0
      %2881 = vdwg.mxu0
      %v2882 = vadd.f32 %v2426, %v2860
      %v2883 = vadd.f32 %v2427, %v2863
      %v2884 = vadd.f32 %v2428, %v2868
      %v2885 = vadd.f32 %v2429, %v2871
      %v2886 = vadd.f32 %v2430, %v2876
      %v2887 = vadd.f32 %v2431, %v2879
      %v2888 = vpack.c.bf16 %v2883, %v2882
      %v2889 = vpack.c.bf16 %v2885, %v2884
      %v2890 = vpack.c.bf16 %v2887, %v2886
      %v2891 = vld [vmem:[%s12] sm:$0xf]
      %v2892 = vld [vmem:[%s12 + $0x4] sm:$0xf]
      %v2893 = vld [vmem:[%s12 + $0x8] sm:$0xf]
      %v2894 = vld [vmem:[%s12 + $0xc] sm:$0xf]
      %v2895 = vld [vmem:[%s12 + $0x10] sm:$0xf]
      %v2896 = vld [vmem:[%s12 + $0x14] sm:$0xf]
      %v2897 = vld [vmem:[%s12 + $0x18] sm:$0xf]
      %v2898 = vld [vmem:[%s12 + $0x1c] sm:$0xf]
      %v2899 = vld [vmem:[%s12 + $0x20] sm:$0xf]
      %v2900 = vld [vmem:[%s12 + $0x24] sm:$0xf]
      %v2901 = vld [vmem:[%s12 + $0x28] sm:$0xf]
      %v2902 = vld [vmem:[%s12 + $0x2c] sm:$0xf]
      %v2903 = vld [vmem:[%s12 + $0x30] sm:$0xf]
      %v2904 = vld [vmem:[%s12 + $0x34] sm:$0xf]
      %v2905 = vld [vmem:[%s12 + $0x38] sm:$0xf]
      %v2906 = vld [vmem:[%s12 + $0x3c] sm:$0xf]
      %v2907 = vld [vmem:[%s13] sm:$0x1]
      %v2909 = vlaneseq
      %v2910 = vshrl.u32 %v2909, 7
      %v2911 = vsub.s32 0, %v2910
      %v2912 = vrot.slane %v2907, %v2911
      %v2930 = vunpack.c.l.b16 %v2891
      %v2931 = vunpack.c.l.b16 %v2892
      %v2932 = vunpack.c.l.b16 %v2893
      %v2933 = vunpack.c.l.b16 %v2894
      %v2934 = vunpack.c.l.b16 %v2895
      %v2935 = vunpack.c.l.b16 %v2896
      %v2936 = vunpack.c.l.b16 %v2897
      %v2937 = vunpack.c.l.b16 %v2898
      %v2938 = vunpack.c.l.b16 %v2899
      %v2939 = vunpack.c.l.b16 %v2900
      %v2940 = vunpack.c.l.b16 %v2901
      %v2941 = vunpack.c.l.b16 %v2902
      %v2942 = vunpack.c.l.b16 %v2903
      %v2943 = vunpack.c.l.b16 %v2904
      %v2944 = vunpack.c.l.b16 %v2905
      %v2945 = vunpack.c.l.b16 %v2906
      %v2946 = vpack.c.b16 %v2931, %v2930
      %v2947 = vpack.c.b16 %v2933, %v2932
      %v2948 = vpack.c.b16 %v2935, %v2934
      %v2949 = vpack.c.b16 %v2937, %v2936
      %v2950 = vpack.c.b16 %v2939, %v2938
      %v2951 = vpack.c.b16 %v2941, %v2940
      %v2952 = vpack.c.b16 %v2943, %v2942
      %v2953 = vpack.c.b16 %v2945, %v2944
      %2962 = vmatprep.subr.bf16.mxu0 0
      %2963 = vmatpush1.bf16.msra.mxu0 %v2946
      %2964 = vmatprep.subr.bf16.mxu0 0
      %2965 = vmatpush1.bf16.msra.mxu0 %v2947
      %2966 = vmatprep.subr.bf16.mxu0 0
      %2967 = vmatpush1.bf16.msra.mxu0 %v2948
      %2968 = vmatprep.subr.bf16.mxu0 0
      %2969 = vmatpush1.bf16.msra.mxu0 %v2949
      %2970 = vmatprep.subr.bf16.mxu0 0
      %2971 = vmatpush1.bf16.msra.mxu0 %v2950
      %2972 = vmatprep.subr.bf16.mxu0 0
      %2973 = vmatpush1.bf16.msra.mxu0 %v2951
      %2974 = vmatprep.subr.bf16.mxu0 0
      %2975 = vmatpush1.bf16.msra.mxu0 %v2952
      %2976 = vmatprep.subr.bf16.mxu0 0
      %2977 = vmatpush1.bf16.msra.mxu0 %v2953
      %2978 = vmatprep.subr.bf16.mxu0 0
      %2979 = vmatpush1.bf16.msra.mxu0 0
      %2980 = vmatprep.subr.bf16.mxu0 0
      %2981 = vmatpush1.bf16.msra.mxu0 0
      %2982 = vmatprep.subr.bf16.mxu0 0
      %2983 = vmatpush1.bf16.msra.mxu0 0
      %2984 = vmatprep.subr.bf16.mxu0 0
      %2985 = vmatpush1.bf16.msra.mxu0 0
      %2986 = vmatprep.subr.bf16.mxu0 0
      %2987 = vmatpush1.bf16.msra.mxu0 0
      %2988 = vmatprep.subr.bf16.mxu0 0
      %2989 = vmatpush1.bf16.msra.mxu0 0
      %2990 = vmatprep.subr.bf16.mxu0 0
      %2991 = vmatpush1.bf16.msra.mxu0 0
      %2992 = vmatprep.subr.bf16.mxu0 0
      %2993 = vmatpush1.bf16.msra.mxu0 0
      %2994 = vmatprep.mubr.bf16.mxu0 0
      %2995 = vmatmul.mubr.bf16.gmra.mrb[0].mxu0 %v2888
      %v2996 = vpop.f32.mrb[0].mxu0
      %v2997 = vadd.f32 %v2912, %v2996
      %v2998 = vpop.f32.mrb[0].mxu0
      %v2999 = vpop.f32.mrb[0].mxu0
      %v3000 = vadd.f32 %v2912, %v2999
      %v3001 = vpop.f32.mrb[0].mxu0
      %3002 = vmatprep.mubr.bf16.mxu0 0
      %3003 = vmatmul.mubr.bf16.gmra.mrb[0].mxu0 %v2889
      %v3004 = vpop.f32.mrb[0].mxu0
      %v3005 = vadd.f32 %v2912, %v3004
      %v3006 = vpop.f32.mrb[0].mxu0
      %v3007 = vpop.f32.mrb[0].mxu0
      %v3008 = vadd.f32 %v2912, %v3007
      %v3009 = vpop.f32.mrb[0].mxu0
      %3010 = vmatprep.mubr.bf16.mxu0 0
      %3011 = vmatmul.mubr.bf16.gmra.mrb[0].mxu0 %v2890
      %v3012 = vpop.f32.mrb[0].mxu0
      %v3013 = vadd.f32 %v2912, %v3012
      %v3014 = vpop.f32.mrb[0].mxu0
      %v3015 = vpop.f32.mrb[0].mxu0
      %v3016 = vadd.f32 %v2912, %v3015
      %v3017 = vpop.f32.mrb[0].mxu0
      %3018 = vdwg.mxu0
      %v3019 = vpack.c.bf16 %v3000, %v2997
      %v3020 = vpack.c.bf16 %v3008, %v3005
      %v3021 = vpack.c.bf16 %v3016, %v3013
      %v3025 = vunpack.c.l.b16 %v3019
      %v3026 = vunpack.c.h.b16 %v3019
      %v3027 = vunpack.c.l.b16 %v3020
      %v3028 = vunpack.c.h.b16 %v3020
      %v3029 = vunpack.c.l.b16 %v3021
      %v3030 = vunpack.c.h.b16 %v3021
      %v3031 = vpack.c.b16 %v3025, %v3025
      %v3032 = vpack.c.b16 %v3026, %v3026
      %v3033 = vpack.c.b16 %v3027, %v3027
      %v3034 = vpack.c.b16 %v3028, %v3028
      %v3035 = vpack.c.b16 %v3029, %v3029
      %v3036 = vpack.c.b16 %v3030, %v3030
      %3043 = vst [vmem:[%s543] sm:$0xf] %v3031
      %3044 = vst [vmem:[%s543 + $0x4] sm:$0xf] %v3032
      %3045 = vst [vmem:[%s543 + $0x8] sm:$0xf] %v3033
      %3046 = vst [vmem:[%s543 + $0xc] sm:$0xf] %v3034
      %3047 = vst [vmem:[%s543 + $0x10] sm:$0xf] %v3035
      %3048 = vst [vmem:[%s543 + $0x14] sm:$0xf] %v3036
      %s3049 = smul.u32 6, %s30
      %p3050 = scmp.lt.s32.totalorder %s29, 1
      %s3051 = scalar_select %p3050, %s29, 1
      %p3052 = scmp.lt.s32.totalorder %s3049, 17
      %s3053 = scalar_select %p3052, %s3049, 17
      %s3054 = smul.addr %s3051, 18
      %s3055 = sadd.s32 %s3053, %s3054
      %s3056 = smul.addr %s3055, 4
      %s3057 = scalar_lea.vmem %s14, %s3056
      // Predicated region
      $region81: #{_ref_only_noised_unet_impl.1} parent=75 // pred_check
        %p3058 = pneg %p371
      $region82: #{_ref_only_noised_unet_impl.1} parent=75 // pred_check_branch
        %3060 = sbr.rel (%p3058) target = $region84
      $region83: #{_ref_only_noised_unet_impl.1} parent=75 // pred_region
        %s3061 = smul.u32 6, %s30
      $region84: #{_ref_only_noised_unet_impl.1} parent=75 // pred_fallthru
        _
    $region76: #{_ref_only_noised_unet_impl.1} parent=5 // pred_fallthru
      _
    %p3062 = scmp.le.s32.totalorder 2, %s20
    // Predicated region
    $region85: #{_ref_only_noised_unet_impl.1} parent=5 // pred_check
      %p3063 = pneg %p3062
    $region86: #{_ref_only_noised_unet_impl.1} parent=5 // pred_check_branch
      %3065 = sbr.rel (%p3063) target = $region88
    $region87: #{_ref_only_noised_unet_impl.1} parent=5 // pred_region
      %s3066 = ssub.s32 %s20, 2
      // Predicated region
      $region89: #{_ref_only_noised_unet_impl.1} parent=87 // pred_check
        %p3067 = pneg %p377
      $region90: #{_ref_only_noised_unet_impl.1} parent=87 // pred_check_branch
        %3069 = sbr.rel (%p3067) target = $region92
      $region91: #{_ref_only_noised_unet_impl.1} parent=87 // pred_region
        %s3070 = smul.u32 6, %s32
        %p3071 = scmp.lt.s32.totalorder %s31, 1
        %s3072 = scalar_select %p3071, %s31, 1
        %p3073 = scmp.lt.s32.totalorder %s3070, 17
        %s3074 = scalar_select %p3073, %s3070, 17
        %s3075 = smul.addr %s3072, 18
        %s3076 = sadd.s32 %s3074, %s3075
        %s3077 = smul.addr %s3076, 4
        %s3078 = scalar_lea.vmem %s14, %s3077
      $region92: #{_ref_only_noised_unet_impl.1} parent=87 // pred_fallthru
        _
    $region88: #{_ref_only_noised_unet_impl.1} parent=5 // pred_fallthru
      _
  $region6: #{_ref_only_noised_unet_impl.1} parent=0 // loop_footer
    %s24 = sadd.s32 1, %s20
  $region7: #{_ref_only_noised_unet_impl.1} parent=0 // loop_footer_branch
    %19 = sbr.rel target = $region3
  $region8: #{_ref_only_noised_unet_impl.1} parent=0 // loop_exit
    _

</llo_original>
